<compile_context>
chip_gen: v7x
topology: tpu7x:2x2x1
jax: 0.10.0
libtpu: 0.0.40
codegen_flags: <defaults>
</compile_context>

<pallas_src>
import math

import jax
import jax.numpy as jnp
from jax import lax
from jax.experimental import pallas as pl
from jax.experimental.pallas import tpu as pltpu

# ---- static problem sizes (small, consistent with the module) ----
B, S, D = 2, 16, 32          # batch, seq_len, dim
H = 4                        # num_heads
DH = D // H                  # head dim
K = 31                       # conv_kernel_size
PAD = K // 2                 # 'same' padding
EPS = 1e-5                   # LayerNorm / BatchNorm eps (PyTorch defaults)
BS = B * S
SCALE = 1.0 / math.sqrt(DH)

# ---- packed parameter layout --------------------------------------------------------
# vecs: (N_VROWS, VCOLS) f32 -- every small per-channel vector occupies one row,
# left-aligned in the first `width` lanes; depthwise taps occupy K consecutive rows.
VCOLS = 4 * D                # 128 lanes (widest vector: FFN hidden bias)
VROW_LN1_G, VROW_LN1_B = 0, 1
VROW_INB = 2                 # width 3*D
VROW_OUTB = 3
VROW_LN2_G, VROW_LN2_B = 4, 5
VROW_C1B = 6                 # width 2*D
VROW_DWB = 7
VROW_BN_G, VROW_BN_B = 8, 9
VROW_C3B = 10
VROW_LN3_G, VROW_LN3_B = 11, 12
VROW_F1B = 13                # width 4*D
VROW_F2B = 14
VROW_DWW = 15                # rows [15, 15+K): depthwise conv taps, width D
N_VROWS = VROW_DWW + K       # 46

# wcat: (D, WCOLS) f32 -- all weights with Din == D, pre-transposed to (Din, Dout)
# and packed along the lane axis; each block starts at a 128-lane-aligned column.
WCOL_F1, WCOL_IN, WCOL_OUT, WCOL_C1, WCOL_C3 = 0, 128, 256, 384, 512
WCOLS = 640


# ---------------- in-kernel math helpers ----------------
def _sigmoid(v):
    return 1.0 / (1.0 + jnp.exp(-v))


def _layernorm(v, g, b):
    mu = jnp.mean(v, axis=-1, keepdims=True)
    c = v - mu
    var = jnp.mean(c * c, axis=-1, keepdims=True)
    return c * lax.rsqrt(var + EPS) * g + b


def _mm(a, w):
    return jnp.dot(a, w, preferred_element_type=jnp.float32)


# ---------------- Pallas kernel ----------------
def conformer_kernel(x_ref, vec_ref, wcat_ref, f2w_ref, o_ref):

    def vrow(row, width=D):                      # (1, width) vector from the packed buffer
        return vec_ref[row:row + 1, 0:width]

    x = x_ref[...].astype(jnp.float32).reshape(BS, D)

    # ---------------- multi-head self-attention branch ----------------
    ln1 = _layernorm(x, vrow(VROW_LN1_G), vrow(VROW_LN1_B))
    qkv = _mm(ln1, wcat_ref[:, WCOL_IN:WCOL_IN + 3 * D]) + vrow(VROW_INB, 3 * D)
    q = qkv[:, 0:D] * SCALE                      # PyTorch scales q by head_dim^-0.5
    k = qkv[:, D:2 * D]
    v = qkv[:, 2 * D:3 * D]

    def split_heads(t):                          # (BS, D) -> (H*B, S, DH), g = h*B + b
        t3 = t.reshape(B, S, D)
        return jnp.concatenate(
            [t3[:, :, h * DH:(h + 1) * DH] for h in range(H)], axis=0)

    qh, kh, vh = split_heads(q), split_heads(k), split_heads(v)
    s = jnp.einsum('gqd,gkd->gqk', qh, kh, preferred_element_type=jnp.float32)
    s = s - jnp.max(s, axis=-1, keepdims=True)
    p = jnp.exp(s)
    p = p * pl.reciprocal(jnp.sum(p, axis=-1, keepdims=True), approx=True)
    ctx = jnp.einsum('gqk,gkd->gqd', p, vh, preferred_element_type=jnp.float32)
    ctx = jnp.concatenate([ctx[h * B:(h + 1) * B] for h in range(H)], axis=-1)   # (B, S, D)
    attn = _mm(ctx.reshape(BS, D), wcat_ref[:, WCOL_OUT:WCOL_OUT + D]) + vrow(VROW_OUTB)
    x = x + attn

    # ---------------- convolution branch ----------------
    ln2 = _layernorm(x, vrow(VROW_LN2_G), vrow(VROW_LN2_B))
    h1 = _mm(ln2, wcat_ref[:, WCOL_C1:WCOL_C1 + 2 * D]) + vrow(VROW_C1B, 2 * D)
    glu = h1[:, 0:D] * _sigmoid(h1[:, D:2 * D])                                  # (BS, D)

    # depthwise conv (groups = D): K static shifts along the flattened sequence axis
    # with per-tap edge masks -- no padded scratch buffer, no store/reload round trip.
    dw_w = vec_ref[VROW_DWW:VROW_DWW + K, 0:D]                                   # (K, D)
    seq = lax.broadcasted_iota(jnp.int32, (B, S, 1), 1).reshape(BS, 1)           # seq pos per row
    acc = jnp.zeros((BS, D), jnp.float32)
    for t in range(K):
        delta = t - PAD
        if delta == 0:
            shifted = glu
        else:
            shifted = jnp.roll(glu, -delta, axis=0)        # static shift -> slice + concat
            valid = (seq >= -delta) & (seq < S - delta)    # zero outside this row's sequence
            shifted = jnp.where(valid, shifted, 0.0)
        acc = acc + shifted * dw_w[t:t + 1, :]
    acc = acc + vrow(VROW_DWB)

    # BatchNorm1d, train-mode forward: batch statistics over (batch, seq).
    # TODO(synk): running-statistics update (stateful training side effect) is not modeled.
    mu = jnp.mean(acc, axis=0, keepdims=True)
    var = jnp.mean((acc - mu) ** 2, axis=0, keepdims=True)
    bn = (acc - mu) * lax.rsqrt(var + EPS) * vrow(VROW_BN_G) + vrow(VROW_BN_B)
    act = bn * _sigmoid(bn)                                                       # SiLU
    x = x + _mm(act, wcat_ref[:, WCOL_C3:WCOL_C3 + D]) + vrow(VROW_C3B)

    # ---------------- feed-forward branch ----------------
    ln3 = _layernorm(x, vrow(VROW_LN3_G), vrow(VROW_LN3_B))
    f1 = _mm(ln3, wcat_ref[:, WCOL_F1:WCOL_F1 + 4 * D]) + vrow(VROW_F1B, 4 * D)   # (BS, 4D)
    f1 = f1 * _sigmoid(f1)                                                        # SiLU
    x = x + _mm(f1, f2w_ref[...]) + vrow(VROW_F2B)

    o_ref[...] = x.reshape(B, S, D).astype(o_ref.dtype)


def conformer_block(x, packed):
    vecs, wcat, f2_wt = packed
    vmem = pl.BlockSpec(memory_space=pltpu.MemorySpace.VMEM)
    return pl.pallas_call(
        conformer_kernel,
        out_shape=jax.ShapeDtypeStruct((B, S, D), x.dtype),
        in_specs=[vmem, vmem, vmem, vmem],
        out_specs=vmem,
    )(x, vecs, wcat, f2_wt)


# ---------------- deterministic parameter init (PyTorch-convention shapes) ----------------
def init_params(key):
    ks = jax.random.split(key, 16)

    def w(k, shape, scale=0.08):
        return jax.random.normal(k, shape, jnp.float32) * scale

    ones = lambda shape: jnp.ones(shape, jnp.float32)
    zeros = lambda shape: jnp.zeros(shape, jnp.float32)

    return [
        ones((1, D)), zeros((1, D)),                          # LayerNorm1 gamma/beta
        w(ks[0], (3 * D, D)), w(ks[1], (1, 3 * D), 0.02),     # MHA in_proj weight/bias
        w(ks[2], (D, D)), w(ks[3], (1, D), 0.02),             # MHA out_proj weight/bias
        ones((1, D)), zeros((1, D)),                          # LayerNorm2 gamma/beta
        w(ks[4], (2 * D, D)), w(ks[5], (1, 2 * D), 0.02),     # Conv1d(D, 2D, k=1) weight/bias
        w(ks[6], (K, D), 0.15), w(ks[7], (1, D), 0.02),       # depthwise Conv1d weight (K,D)/bias
        ones((1, D)), zeros((1, D)),                          # BatchNorm1d gamma/beta
        w(ks[8], (D, D)), w(ks[9], (1, D), 0.02),             # Conv1d(D, D, k=1) weight/bias
        ones((1, D)), zeros((1, D)),                          # LayerNorm3 gamma/beta
        w(ks[10], (4 * D, D)), w(ks[11], (1, 4 * D), 0.02),   # FFN Linear(D, 4D) weight/bias
        w(ks[12], (D, 4 * D)), w(ks[13], (1, D), 0.02),       # FFN Linear(4D, D) weight/bias
    ]


# ---------------- host-side packing: 22 tensors -> 3 buffers ----------------
def pack_params(params):
    (ln1_g, ln1_b, in_w, in_b, out_w, out_b,
     ln2_g, ln2_b, c1_w, c1_b, dw_w, dw_b, bn_g, bn_b, c3_w, c3_b,
     ln3_g, ln3_b, f1_w, f1_b, f2_w, f2_b) = [jnp.asarray(p, jnp.float32) for p in params]

    vecs = jnp.zeros((N_VROWS, VCOLS), jnp.float32)

    def put(vec, row, val):
        flat = val.reshape(-1)
        return vec.at[row, 0:flat.shape[0]].set(flat)

    for row, val in ((VROW_LN1_G, ln1_g), (VROW_LN1_B, ln1_b), (VROW_INB, in_b),
                     (VROW_OUTB, out_b), (VROW_LN2_G, ln2_g), (VROW_LN2_B, ln2_b),
                     (VROW_C1B, c1_b), (VROW_DWB, dw_b), (VROW_BN_G, bn_g),
                     (VROW_BN_B, bn_b), (VROW_C3B, c3_b), (VROW_LN3_G, ln3_g),
                     (VROW_LN3_B, ln3_b), (VROW_F1B, f1_b), (VROW_F2B, f2_b)):
        vecs = put(vecs, row, val)
    vecs = vecs.at[VROW_DWW:VROW_DWW + K, 0:D].set(dw_w)

    wcat = jnp.zeros((D, WCOLS), jnp.float32)
    wcat = wcat.at[:, WCOL_F1:WCOL_F1 + 4 * D].set(f1_w.T)
    wcat = wcat.at[:, WCOL_IN:WCOL_IN + 3 * D].set(in_w.T)
    wcat = wcat.at[:, WCOL_OUT:WCOL_OUT + D].set(out_w.T)
    wcat = wcat.at[:, WCOL_C1:WCOL_C1 + 2 * D].set(c1_w.T)
    wcat = wcat.at[:, WCOL_C3:WCOL_C3 + D].set(c3_w.T)

    return vecs, wcat, f2_w.T


# ---------------- pure-JAX reference (standard primitives, unpacked params) ----------------
def reference_forward(x, params):
    (ln1_g, ln1_b, in_w, in_b, out_w, out_b,
     ln2_g, ln2_b, c1_w, c1_b, dw_w, dw_b, bn_g, bn_b, c3_w, c3_b,
     ln3_g, ln3_b, f1_w, f1_b, f2_w, f2_b) = [jnp.asarray(p, jnp.float32) for p in params]

    def ln(v, g, b):
        mu = jnp.mean(v, axis=-1, keepdims=True)
        var = jnp.mean((v - mu) ** 2, axis=-1, keepdims=True)
        return (v - mu) / jnp.sqrt(var + EPS) * g.reshape(1, 1, -1) + b.reshape(1, 1, -1)

    def lin(v, w_, b_):          # w_ in PyTorch (Dout, Din) convention
        return jnp.einsum('bsd,ed->bse', v, w_) + b_.reshape(1, 1, -1)

    x = x.astype(jnp.float32)

    # self-attention
    y = ln(x, ln1_g, ln1_b)
    qkv = lin(y, in_w, in_b)
    q = qkv[..., 0:D].reshape(B, S, H, DH) * (1.0 / math.sqrt(DH))
    k = qkv[..., D:2 * D].reshape(B, S, H, DH)
    v = qkv[..., 2 * D:3 * D].reshape(B, S, H, DH)
    sc = jnp.einsum('bqhd,bkhd->bhqk', q, k)
    pr = jax.nn.softmax(sc, axis=-1)
    ctx = jnp.einsum('bhqk,bkhd->bqhd', pr, v).reshape(B, S, D)
    x = x + lin(ctx, out_w, out_b)

    # conv module
    y = ln(x, ln2_g, ln2_b)
    h1 = lin(y, c1_w, c1_b)
    gl = h1[..., 0:D] * jax.nn.sigmoid(h1[..., D:2 * D])
    gp = jnp.pad(gl, ((0, 0), (PAD, PAD), (0, 0)))
    conv = sum(gp[:, t:t + S, :] * dw_w[t].reshape(1, 1, -1) for t in range(K))
    conv = conv + dw_b.reshape(1, 1, -1)
    mu = jnp.mean(conv, axis=(0, 1), keepdims=True)
    var = jnp.mean((conv - mu) ** 2, axis=(0, 1), keepdims=True)
    bn = (conv - mu) / jnp.sqrt(var + EPS) * bn_g.reshape(1, 1, -1) + bn_b.reshape(1, 1, -1)
    act = bn * jax.nn.sigmoid(bn)
    x = x + lin(act, c3_w, c3_b)

    # feed-forward
    y = ln(x, ln3_g, ln3_b)
    f1 = lin(y, f1_w, f1_b)
    f1 = f1 * jax.nn.sigmoid(f1)
    x = x + lin(f1, f2_w, f2_b)
    return x


if __name__ == "__main__":
    key = jax.random.PRNGKey(0)
    k_x, k_p = jax.random.split(key)
    x = jax.random.normal(k_x, (B, S, D), jnp.float32)
    params = init_params(k_p)
    packed = pack_params(params)

    out = conformer_block(x, packed)
    out = jax.block_until_ready(out)

    ref = reference_forward(x, params)
    err = float(jnp.max(jnp.abs(out - ref)))
    assert out.shape == (B, S, D) and out.dtype == jnp.float32
    # tolerance accounts for the approx (EUP) reciprocal in the kernel's softmax
    assert err < 2e-2, f"max abs err {err}"

    print("KERNEL_OK")
</pallas_src>

<mosaic_0001>
module attributes {stable_mosaic.version = 11 : i64} {
  func.func @conformer_kernel(%arg0: memref<2x16x32xf32, #tpu.memory_space<vmem>>, %arg1: memref<46x128xf32, #tpu.memory_space<vmem>>, %arg2: memref<32x640xf32, #tpu.memory_space<vmem>>, %arg3: memref<128x32xf32, #tpu.memory_space<vmem>>, %arg4: memref<2x16x32xf32, #tpu.memory_space<vmem>>) attributes {dimension_semantics = [], scalar_prefetch = 0 : i64, scratch_operands = 0 : i64, tpu.core_type = #tpu.core_type<tc>} {
    %c0 = arith.constant 0 : index
    %c0_0 = arith.constant 0 : index
    %c0_1 = arith.constant 0 : index
    %0 = vector.load %arg0[%c0, %c0_0, %c0_1] : memref<2x16x32xf32, #tpu.memory_space<vmem>>, vector<2x16x32xf32>
    %1 = vector.shape_cast %0 : vector<2x16x32xf32> to vector<32x32xf32>
    %c0_2 = arith.constant 0 : index
    %c0_3 = arith.constant 0 : index
    %2 = vector.load %arg1[%c0_2, %c0_3] : memref<46x128xf32, #tpu.memory_space<vmem>>, vector<1x32xf32>
    %c1 = arith.constant 1 : index
    %c0_4 = arith.constant 0 : index
    %3 = vector.load %arg1[%c1, %c0_4] : memref<46x128xf32, #tpu.memory_space<vmem>>, vector<1x32xf32>
    %cst = arith.constant dense<0.000000e+00> : vector<32xf32>
    %4 = vector.multi_reduction <add>, %1, %cst [1] : vector<32x32xf32> to vector<32xf32>
    %5 = vector.shape_cast %4 : vector<32xf32> to vector<32x1xf32>
    %cst_5 = arith.constant 3.200000e+01 : f32
    %6 = vector.broadcast %cst_5 : f32 to vector<32x1xf32>
    %7 = arith.divf %5, %6 : vector<32x1xf32>
    %8 = vector.broadcast %7 : vector<32x1xf32> to vector<32x32xf32>
    %9 = arith.subf %1, %8 : vector<32x32xf32>
    %10 = arith.mulf %9, %9 : vector<32x32xf32>
    %cst_6 = arith.constant dense<0.000000e+00> : vector<32xf32>
    %11 = vector.multi_reduction <add>, %10, %cst_6 [1] : vector<32x32xf32> to vector<32xf32>
    %12 = vector.shape_cast %11 : vector<32xf32> to vector<32x1xf32>
    %cst_7 = arith.constant 3.200000e+01 : f32
    %13 = vector.broadcast %cst_7 : f32 to vector<32x1xf32>
    %14 = arith.divf %12, %13 : vector<32x1xf32>
    %cst_8 = arith.constant 9.99999974E-6 : f32
    %15 = vector.broadcast %cst_8 : f32 to vector<32x1xf32>
    %16 = arith.addf %14, %15 : vector<32x1xf32>
    %17 = math.rsqrt %16 : vector<32x1xf32>
    %18 = vector.broadcast %17 : vector<32x1xf32> to vector<32x32xf32>
    %19 = arith.mulf %9, %18 : vector<32x32xf32>
    %20 = vector.broadcast %2 : vector<1x32xf32> to vector<32x32xf32>
    %21 = arith.mulf %19, %20 : vector<32x32xf32>
    %22 = vector.broadcast %3 : vector<1x32xf32> to vector<32x32xf32>
    %23 = arith.addf %21, %22 : vector<32x32xf32>
    %c0_9 = arith.constant 0 : index
    %c128 = arith.constant 128 : index
    %24 = vector.load %arg2[%c0_9, %c128] : memref<32x640xf32, #tpu.memory_space<vmem>>, vector<32x96xf32>
    %cst_10 = arith.constant dense<0.000000e+00> : vector<32x96xf32>
    %25 = tpu.matmul %23, %24, %cst_10 {dimension_numbers = #tpu.dot_dimension_numbers<[1], [0], [0], [1], [0, 0, 1, 1], [], []>} : vector<32x32xf32>, vector<32x96xf32>, vector<32x96xf32> -> vector<32x96xf32>
    %c2 = arith.constant 2 : index
    %c0_11 = arith.constant 0 : index
    %26 = vector.load %arg1[%c2, %c0_11] : memref<46x128xf32, #tpu.memory_space<vmem>>, vector<1x96xf32>
    %27 = vector.broadcast %26 : vector<1x96xf32> to vector<32x96xf32>
    %28 = arith.addf %25, %27 : vector<32x96xf32>
    %29 = vector.extract_strided_slice %28 {offsets = [0, 0], sizes = [32, 32], strides = [1, 1]} : vector<32x96xf32> to vector<32x32xf32>
    %cst_12 = arith.constant 0.353553385 : f32
    %30 = vector.broadcast %cst_12 : f32 to vector<32x32xf32>
    %31 = arith.mulf %29, %30 : vector<32x32xf32>
    %32 = vector.extract_strided_slice %28 {offsets = [0, 32], sizes = [32, 32], strides = [1, 1]} : vector<32x96xf32> to vector<32x32xf32>
    %33 = vector.extract_strided_slice %28 {offsets = [0, 64], sizes = [32, 32], strides = [1, 1]} : vector<32x96xf32> to vector<32x32xf32>
    %34 = vector.shape_cast %31 : vector<32x32xf32> to vector<2x16x32xf32>
    %35 = vector.extract_strided_slice %34 {offsets = [0, 0, 0], sizes = [2, 16, 8], strides = [1, 1, 1]} : vector<2x16x32xf32> to vector<2x16x8xf32>
    %36 = vector.extract_strided_slice %34 {offsets = [0, 0, 8], sizes = [2, 16, 8], strides = [1, 1, 1]} : vector<2x16x32xf32> to vector<2x16x8xf32>
    %37 = vector.extract_strided_slice %34 {offsets = [0, 0, 16], sizes = [2, 16, 8], strides = [1, 1, 1]} : vector<2x16x32xf32> to vector<2x16x8xf32>
    %38 = vector.extract_strided_slice %34 {offsets = [0, 0, 24], sizes = [2, 16, 8], strides = [1, 1, 1]} : vector<2x16x32xf32> to vector<2x16x8xf32>
    %39 = tpu.concatenate %35, %36, %37, %38 in 0 : vector<2x16x8xf32>, vector<2x16x8xf32>, vector<2x16x8xf32>, vector<2x16x8xf32> -> vector<8x16x8xf32>
    %40 = vector.shape_cast %32 : vector<32x32xf32> to vector<2x16x32xf32>
    %41 = vector.extract_strided_slice %40 {offsets = [0, 0, 0], sizes = [2, 16, 8], strides = [1, 1, 1]} : vector<2x16x32xf32> to vector<2x16x8xf32>
    %42 = vector.extract_strided_slice %40 {offsets = [0, 0, 8], sizes = [2, 16, 8], strides = [1, 1, 1]} : vector<2x16x32xf32> to vector<2x16x8xf32>
    %43 = vector.extract_strided_slice %40 {offsets = [0, 0, 16], sizes = [2, 16, 8], strides = [1, 1, 1]} : vector<2x16x32xf32> to vector<2x16x8xf32>
    %44 = vector.extract_strided_slice %40 {offsets = [0, 0, 24], sizes = [2, 16, 8], strides = [1, 1, 1]} : vector<2x16x32xf32> to vector<2x16x8xf32>
    %45 = tpu.concatenate %41, %42, %43, %44 in 0 : vector<2x16x8xf32>, vector<2x16x8xf32>, vector<2x16x8xf32>, vector<2x16x8xf32> -> vector<8x16x8xf32>
    %46 = vector.shape_cast %33 : vector<32x32xf32> to vector<2x16x32xf32>
    %47 = vector.extract_strided_slice %46 {offsets = [0, 0, 0], sizes = [2, 16, 8], strides = [1, 1, 1]} : vector<2x16x32xf32> to vector<2x16x8xf32>
    %48 = vector.extract_strided_slice %46 {offsets = [0, 0, 8], sizes = [2, 16, 8], strides = [1, 1, 1]} : vector<2x16x32xf32> to vector<2x16x8xf32>
    %49 = vector.extract_strided_slice %46 {offsets = [0, 0, 16], sizes = [2, 16, 8], strides = [1, 1, 1]} : vector<2x16x32xf32> to vector<2x16x8xf32>
    %50 = vector.extract_strided_slice %46 {offsets = [0, 0, 24], sizes = [2, 16, 8], strides = [1, 1, 1]} : vector<2x16x32xf32> to vector<2x16x8xf32>
    %51 = tpu.concatenate %47, %48, %49, %50 in 0 : vector<2x16x8xf32>, vector<2x16x8xf32>, vector<2x16x8xf32>, vector<2x16x8xf32> -> vector<8x16x8xf32>
    "tpu.trace_start"() <{level = 10 : i32, message = "gqd,gkd->gqk"}> : () -> ()
    %cst_13 = arith.constant dense<0.000000e+00> : vector<8x16x16xf32>
    %52 = tpu.matmul %39, %45, %cst_13 {dimension_numbers = #tpu.dot_dimension_numbers<[2], [2], [1], [1], [0, 0, 0, 1, 1, 1], [0], [0]>} : vector<8x16x8xf32>, vector<8x16x8xf32>, vector<8x16x16xf32> -> vector<8x16x16xf32>
    "tpu.trace_stop"() : () -> ()
    %cst_14 = arith.constant dense<0xFF800000> : vector<8x16xf32>
    %53 = vector.multi_reduction <maximumf>, %52, %cst_14 [2] : vector<8x16x16xf32> to vector<8x16xf32>
    %54 = vector.shape_cast %53 : vector<8x16xf32> to vector<8x16x1xf32>
    %55 = vector.broadcast %54 : vector<8x16x1xf32> to vector<8x16x16xf32>
    %56 = arith.subf %52, %55 : vector<8x16x16xf32>
    %57 = math.exp %56 : vector<8x16x16xf32>
    %cst_15 = arith.constant dense<0.000000e+00> : vector<8x16xf32>
    %58 = vector.multi_reduction <add>, %57, %cst_15 [2] : vector<8x16x16xf32> to vector<8x16xf32>
    %59 = vector.shape_cast %58 : vector<8x16xf32> to vector<8x16x1xf32>
    %60 = tpu.reciprocal %59 {approx = true} : vector<8x16x1xf32> -> vector<8x16x1xf32>
    %61 = vector.broadcast %60 : vector<8x16x1xf32> to vector<8x16x16xf32>
    %62 = arith.mulf %57, %61 : vector<8x16x16xf32>
    "tpu.trace_start"() <{level = 10 : i32, message = "gqk,gkd->gqd"}> : () -> ()
    %cst_16 = arith.constant dense<0.000000e+00> : vector<8x16x8xf32>
    %63 = tpu.matmul %62, %51, %cst_16 {dimension_numbers = #tpu.dot_dimension_numbers<[2], [1], [1], [2], [0, 0, 0, 1, 1, 2], [0], [0]>} : vector<8x16x16xf32>, vector<8x16x8xf32>, vector<8x16x8xf32> -> vector<8x16x8xf32>
    "tpu.trace_stop"() : () -> ()
    %64 = vector.extract_strided_slice %63 {offsets = [0, 0, 0], sizes = [2, 16, 8], strides = [1, 1, 1]} : vector<8x16x8xf32> to vector<2x16x8xf32>
    %65 = vector.extract_strided_slice %63 {offsets = [2, 0, 0], sizes = [2, 16, 8], strides = [1, 1, 1]} : vector<8x16x8xf32> to vector<2x16x8xf32>
    %66 = vector.extract_strided_slice %63 {offsets = [4, 0, 0], sizes = [2, 16, 8], strides = [1, 1, 1]} : vector<8x16x8xf32> to vector<2x16x8xf32>
    %67 = vector.extract_strided_slice %63 {offsets = [6, 0, 0], sizes = [2, 16, 8], strides = [1, 1, 1]} : vector<8x16x8xf32> to vector<2x16x8xf32>
    %68 = tpu.concatenate %64, %65, %66, %67 in 2 : vector<2x16x8xf32>, vector<2x16x8xf32>, vector<2x16x8xf32>, vector<2x16x8xf32> -> vector<2x16x32xf32>
    %69 = vector.shape_cast %68 : vector<2x16x32xf32> to vector<32x32xf32>
    %c0_17 = arith.constant 0 : index
    %c256 = arith.constant 256 : index
    %70 = vector.load %arg2[%c0_17, %c256] : memref<32x640xf32, #tpu.memory_space<vmem>>, vector<32x32xf32>
    %cst_18 = arith.constant dense<0.000000e+00> : vector<32x32xf32>
    %71 = tpu.matmul %69, %70, %cst_18 {dimension_numbers = #tpu.dot_dimension_numbers<[1], [0], [0], [1], [0, 0, 1, 1], [], []>} : vector<32x32xf32>, vector<32x32xf32>, vector<32x32xf32> -> vector<32x32xf32>
    %c3 = arith.constant 3 : index
    %c0_19 = arith.constant 0 : index
    %72 = vector.load %arg1[%c3, %c0_19] : memref<46x128xf32, #tpu.memory_space<vmem>>, vector<1x32xf32>
    %73 = vector.broadcast %72 : vector<1x32xf32> to vector<32x32xf32>
    %74 = arith.addf %71, %73 : vector<32x32xf32>
    %75 = arith.addf %1, %74 : vector<32x32xf32>
    %c4 = arith.constant 4 : index
    %c0_20 = arith.constant 0 : index
    %76 = vector.load %arg1[%c4, %c0_20] : memref<46x128xf32, #tpu.memory_space<vmem>>, vector<1x32xf32>
    %c5 = arith.constant 5 : index
    %c0_21 = arith.constant 0 : index
    %77 = vector.load %arg1[%c5, %c0_21] : memref<46x128xf32, #tpu.memory_space<vmem>>, vector<1x32xf32>
    %cst_22 = arith.constant dense<0.000000e+00> : vector<32xf32>
    %78 = vector.multi_reduction <add>, %75, %cst_22 [1] : vector<32x32xf32> to vector<32xf32>
    %79 = vector.shape_cast %78 : vector<32xf32> to vector<32x1xf32>
    %cst_23 = arith.constant 3.200000e+01 : f32
    %80 = vector.broadcast %cst_23 : f32 to vector<32x1xf32>
    %81 = arith.divf %79, %80 : vector<32x1xf32>
    %82 = vector.broadcast %81 : vector<32x1xf32> to vector<32x32xf32>
    %83 = arith.subf %75, %82 : vector<32x32xf32>
    %84 = arith.mulf %83, %83 : vector<32x32xf32>
    %cst_24 = arith.constant dense<0.000000e+00> : vector<32xf32>
    %85 = vector.multi_reduction <add>, %84, %cst_24 [1] : vector<32x32xf32> to vector<32xf32>
    %86 = vector.shape_cast %85 : vector<32xf32> to vector<32x1xf32>
    %cst_25 = arith.constant 3.200000e+01 : f32
    %87 = vector.broadcast %cst_25 : f32 to vector<32x1xf32>
    %88 = arith.divf %86, %87 : vector<32x1xf32>
    %cst_26 = arith.constant 9.99999974E-6 : f32
    %89 = vector.broadcast %cst_26 : f32 to vector<32x1xf32>
    %90 = arith.addf %88, %89 : vector<32x1xf32>
    %91 = math.rsqrt %90 : vector<32x1xf32>
    %92 = vector.broadcast %91 : vector<32x1xf32> to vector<32x32xf32>
    %93 = arith.mulf %83, %92 : vector<32x32xf32>
    %94 = vector.broadcast %76 : vector<1x32xf32> to vector<32x32xf32>
    %95 = arith.mulf %93, %94 : vector<32x32xf32>
    %96 = vector.broadcast %77 : vector<1x32xf32> to vector<32x32xf32>
    %97 = arith.addf %95, %96 : vector<32x32xf32>
    %c0_27 = arith.constant 0 : index
    %c384 = arith.constant 384 : index
    %98 = vector.load %arg2[%c0_27, %c384] : memref<32x640xf32, #tpu.memory_space<vmem>>, vector<32x64xf32>
    %cst_28 = arith.constant dense<0.000000e+00> : vector<32x64xf32>
    %99 = tpu.matmul %97, %98, %cst_28 {dimension_numbers = #tpu.dot_dimension_numbers<[1], [0], [0], [1], [0, 0, 1, 1], [], []>} : vector<32x32xf32>, vector<32x64xf32>, vector<32x64xf32> -> vector<32x64xf32>
    %c6 = arith.constant 6 : index
    %c0_29 = arith.constant 0 : index
    %100 = vector.load %arg1[%c6, %c0_29] : memref<46x128xf32, #tpu.memory_space<vmem>>, vector<1x64xf32>
    %101 = vector.broadcast %100 : vector<1x64xf32> to vector<32x64xf32>
    %102 = arith.addf %99, %101 : vector<32x64xf32>
    %103 = vector.extract_strided_slice %102 {offsets = [0, 0], sizes = [32, 32], strides = [1, 1]} : vector<32x64xf32> to vector<32x32xf32>
    %104 = vector.extract_strided_slice %102 {offsets = [0, 32], sizes = [32, 32], strides = [1, 1]} : vector<32x64xf32> to vector<32x32xf32>
    %cst_30 = arith.constant 0.000000e+00 : f32
    %105 = vector.broadcast %cst_30 : f32 to vector<32x32xf32>
    %106 = arith.subf %105, %104 : vector<32x32xf32>
    %107 = math.exp %106 : vector<32x32xf32>
    %cst_31 = arith.constant 1.000000e+00 : f32
    %108 = vector.broadcast %cst_31 : f32 to vector<32x32xf32>
    %109 = arith.addf %108, %107 : vector<32x32xf32>
    %cst_32 = arith.constant 1.000000e+00 : f32
    %110 = vector.broadcast %cst_32 : f32 to vector<32x32xf32>
    %111 = arith.divf %110, %109 : vector<32x32xf32>
    %112 = arith.mulf %103, %111 : vector<32x32xf32>
    %c15 = arith.constant 15 : index
    %c0_33 = arith.constant 0 : index
    %113 = vector.load %arg1[%c15, %c0_33] : memref<46x128xf32, #tpu.memory_space<vmem>>, vector<31x32xf32>
    %114 = tpu.iota {dimensions = array<i32: 1>} : vector<2x16x1xi32>
    %115 = vector.shape_cast %114 : vector<2x16x1xi32> to vector<32x1xi32>
    %cst_34 = arith.constant 0.000000e+00 : f32
    %116 = vector.broadcast %cst_34 : f32 to vector<32x32xf32>
    %117 = vector.extract_strided_slice %112 {offsets = [17, 0], sizes = [15, 32], strides = [1, 1]} : vector<32x32xf32> to vector<15x32xf32>
    %118 = vector.extract_strided_slice %112 {offsets = [0, 0], sizes = [17, 32], strides = [1, 1]} : vector<32x32xf32> to vector<17x32xf32>
    %119 = tpu.concatenate %117, %118 in 0 : vector<15x32xf32>, vector<17x32xf32> -> vector<32x32xf32>
    %c15_i32 = arith.constant 15 : i32
    %120 = vector.broadcast %c15_i32 : i32 to vector<32x1xi32>
    %121 = arith.cmpi sge, %115, %120 : vector<32x1xi32>
    %c31_i32 = arith.constant 31 : i32
    %122 = vector.broadcast %c31_i32 : i32 to vector<32x1xi32>
    %123 = arith.cmpi slt, %115, %122 : vector<32x1xi32>
    %124 = arith.andi %121, %123 : vector<32x1xi1>
    %cst_35 = arith.constant 0.000000e+00 : f32
    %125 = vector.shape_cast %124 : vector<32x1xi1> to vector<32x1xi1>
    %126 = vector.broadcast %125 : vector<32x1xi1> to vector<32x32xi1>
    %127 = vector.broadcast %cst_35 : f32 to vector<32x32xf32>
    %128 = arith.select %126, %119, %127 : vector<32x32xi1>, vector<32x32xf32>
    %129 = vector.extract_strided_slice %113 {offsets = [0, 0], sizes = [1, 32], strides = [1, 1]} : vector<31x32xf32> to vector<1x32xf32>
    %130 = vector.broadcast %129 : vector<1x32xf32> to vector<32x32xf32>
    %131 = arith.mulf %128, %130 : vector<32x32xf32>
    %132 = arith.addf %116, %131 : vector<32x32xf32>
    %133 = vector.extract_strided_slice %112 {offsets = [18, 0], sizes = [14, 32], strides = [1, 1]} : vector<32x32xf32> to vector<14x32xf32>
    %134 = vector.extract_strided_slice %112 {offsets = [0, 0], sizes = [18, 32], strides = [1, 1]} : vector<32x32xf32> to vector<18x32xf32>
    %135 = tpu.concatenate %133, %134 in 0 : vector<14x32xf32>, vector<18x32xf32> -> vector<32x32xf32>
    %c14_i32 = arith.constant 14 : i32
    %136 = vector.broadcast %c14_i32 : i32 to vector<32x1xi32>
    %137 = arith.cmpi sge, %115, %136 : vector<32x1xi32>
    %c30_i32 = arith.constant 30 : i32
    %138 = vector.broadcast %c30_i32 : i32 to vector<32x1xi32>
    %139 = arith.cmpi slt, %115, %138 : vector<32x1xi32>
    %140 = arith.andi %137, %139 : vector<32x1xi1>
    %cst_36 = arith.constant 0.000000e+00 : f32
    %141 = vector.shape_cast %140 : vector<32x1xi1> to vector<32x1xi1>
    %142 = vector.broadcast %141 : vector<32x1xi1> to vector<32x32xi1>
    %143 = vector.broadcast %cst_36 : f32 to vector<32x32xf32>
    %144 = arith.select %142, %135, %143 : vector<32x32xi1>, vector<32x32xf32>
    %145 = vector.extract_strided_slice %113 {offsets = [1, 0], sizes = [1, 32], strides = [1, 1]} : vector<31x32xf32> to vector<1x32xf32>
    %146 = vector.broadcast %145 : vector<1x32xf32> to vector<32x32xf32>
    %147 = arith.mulf %144, %146 : vector<32x32xf32>
    %148 = arith.addf %132, %147 : vector<32x32xf32>
    %149 = vector.extract_strided_slice %112 {offsets = [19, 0], sizes = [13, 32], strides = [1, 1]} : vector<32x32xf32> to vector<13x32xf32>
    %150 = vector.extract_strided_slice %112 {offsets = [0, 0], sizes = [19, 32], strides = [1, 1]} : vector<32x32xf32> to vector<19x32xf32>
    %151 = tpu.concatenate %149, %150 in 0 : vector<13x32xf32>, vector<19x32xf32> -> vector<32x32xf32>
    %c13_i32 = arith.constant 13 : i32
    %152 = vector.broadcast %c13_i32 : i32 to vector<32x1xi32>
    %153 = arith.cmpi sge, %115, %152 : vector<32x1xi32>
    %c29_i32 = arith.constant 29 : i32
    %154 = vector.broadcast %c29_i32 : i32 to vector<32x1xi32>
    %155 = arith.cmpi slt, %115, %154 : vector<32x1xi32>
    %156 = arith.andi %153, %155 : vector<32x1xi1>
    %cst_37 = arith.constant 0.000000e+00 : f32
    %157 = vector.shape_cast %156 : vector<32x1xi1> to vector<32x1xi1>
    %158 = vector.broadcast %157 : vector<32x1xi1> to vector<32x32xi1>
    %159 = vector.broadcast %cst_37 : f32 to vector<32x32xf32>
    %160 = arith.select %158, %151, %159 : vector<32x32xi1>, vector<32x32xf32>
    %161 = vector.extract_strided_slice %113 {offsets = [2, 0], sizes = [1, 32], strides = [1, 1]} : vector<31x32xf32> to vector<1x32xf32>
    %162 = vector.broadcast %161 : vector<1x32xf32> to vector<32x32xf32>
    %163 = arith.mulf %160, %162 : vector<32x32xf32>
    %164 = arith.addf %148, %163 : vector<32x32xf32>
    %165 = vector.extract_strided_slice %112 {offsets = [20, 0], sizes = [12, 32], strides = [1, 1]} : vector<32x32xf32> to vector<12x32xf32>
    %166 = vector.extract_strided_slice %112 {offsets = [0, 0], sizes = [20, 32], strides = [1, 1]} : vector<32x32xf32> to vector<20x32xf32>
    %167 = tpu.concatenate %165, %166 in 0 : vector<12x32xf32>, vector<20x32xf32> -> vector<32x32xf32>
    %c12_i32 = arith.constant 12 : i32
    %168 = vector.broadcast %c12_i32 : i32 to vector<32x1xi32>
    %169 = arith.cmpi sge, %115, %168 : vector<32x1xi32>
    %c28_i32 = arith.constant 28 : i32
    %170 = vector.broadcast %c28_i32 : i32 to vector<32x1xi32>
    %171 = arith.cmpi slt, %115, %170 : vector<32x1xi32>
    %172 = arith.andi %169, %171 : vector<32x1xi1>
    %cst_38 = arith.constant 0.000000e+00 : f32
    %173 = vector.shape_cast %172 : vector<32x1xi1> to vector<32x1xi1>
    %174 = vector.broadcast %173 : vector<32x1xi1> to vector<32x32xi1>
    %175 = vector.broadcast %cst_38 : f32 to vector<32x32xf32>
    %176 = arith.select %174, %167, %175 : vector<32x32xi1>, vector<32x32xf32>
    %177 = vector.extract_strided_slice %113 {offsets = [3, 0], sizes = [1, 32], strides = [1, 1]} : vector<31x32xf32> to vector<1x32xf32>
    %178 = vector.broadcast %177 : vector<1x32xf32> to vector<32x32xf32>
    %179 = arith.mulf %176, %178 : vector<32x32xf32>
    %180 = arith.addf %164, %179 : vector<32x32xf32>
    %181 = vector.extract_strided_slice %112 {offsets = [21, 0], sizes = [11, 32], strides = [1, 1]} : vector<32x32xf32> to vector<11x32xf32>
    %182 = vector.extract_strided_slice %112 {offsets = [0, 0], sizes = [21, 32], strides = [1, 1]} : vector<32x32xf32> to vector<21x32xf32>
    %183 = tpu.concatenate %181, %182 in 0 : vector<11x32xf32>, vector<21x32xf32> -> vector<32x32xf32>
    %c11_i32 = arith.constant 11 : i32
    %184 = vector.broadcast %c11_i32 : i32 to vector<32x1xi32>
    %185 = arith.cmpi sge, %115, %184 : vector<32x1xi32>
    %c27_i32 = arith.constant 27 : i32
    %186 = vector.broadcast %c27_i32 : i32 to vector<32x1xi32>
    %187 = arith.cmpi slt, %115, %186 : vector<32x1xi32>
    %188 = arith.andi %185, %187 : vector<32x1xi1>
    %cst_39 = arith.constant 0.000000e+00 : f32
    %189 = vector.shape_cast %188 : vector<32x1xi1> to vector<32x1xi1>
    %190 = vector.broadcast %189 : vector<32x1xi1> to vector<32x32xi1>
    %191 = vector.broadcast %cst_39 : f32 to vector<32x32xf32>
    %192 = arith.select %190, %183, %191 : vector<32x32xi1>, vector<32x32xf32>
    %193 = vector.extract_strided_slice %113 {offsets = [4, 0], sizes = [1, 32], strides = [1, 1]} : vector<31x32xf32> to vector<1x32xf32>
    %194 = vector.broadcast %193 : vector<1x32xf32> to vector<32x32xf32>
    %195 = arith.mulf %192, %194 : vector<32x32xf32>
    %196 = arith.addf %180, %195 : vector<32x32xf32>
    %197 = vector.extract_strided_slice %112 {offsets = [22, 0], sizes = [10, 32], strides = [1, 1]} : vector<32x32xf32> to vector<10x32xf32>
    %198 = vector.extract_strided_slice %112 {offsets = [0, 0], sizes = [22, 32], strides = [1, 1]} : vector<32x32xf32> to vector<22x32xf32>
    %199 = tpu.concatenate %197, %198 in 0 : vector<10x32xf32>, vector<22x32xf32> -> vector<32x32xf32>
    %c10_i32 = arith.constant 10 : i32
    %200 = vector.broadcast %c10_i32 : i32 to vector<32x1xi32>
    %201 = arith.cmpi sge, %115, %200 : vector<32x1xi32>
    %c26_i32 = arith.constant 26 : i32
    %202 = vector.broadcast %c26_i32 : i32 to vector<32x1xi32>
    %203 = arith.cmpi slt, %115, %202 : vector<32x1xi32>
    %204 = arith.andi %201, %203 : vector<32x1xi1>
    %cst_40 = arith.constant 0.000000e+00 : f32
    %205 = vector.shape_cast %204 : vector<32x1xi1> to vector<32x1xi1>
    %206 = vector.broadcast %205 : vector<32x1xi1> to vector<32x32xi1>
    %207 = vector.broadcast %cst_40 : f32 to vector<32x32xf32>
    %208 = arith.select %206, %199, %207 : vector<32x32xi1>, vector<32x32xf32>
    %209 = vector.extract_strided_slice %113 {offsets = [5, 0], sizes = [1, 32], strides = [1, 1]} : vector<31x32xf32> to vector<1x32xf32>
    %210 = vector.broadcast %209 : vector<1x32xf32> to vector<32x32xf32>
    %211 = arith.mulf %208, %210 : vector<32x32xf32>
    %212 = arith.addf %196, %211 : vector<32x32xf32>
    %213 = vector.extract_strided_slice %112 {offsets = [23, 0], sizes = [9, 32], strides = [1, 1]} : vector<32x32xf32> to vector<9x32xf32>
    %214 = vector.extract_strided_slice %112 {offsets = [0, 0], sizes = [23, 32], strides = [1, 1]} : vector<32x32xf32> to vector<23x32xf32>
    %215 = tpu.concatenate %213, %214 in 0 : vector<9x32xf32>, vector<23x32xf32> -> vector<32x32xf32>
    %c9_i32 = arith.constant 9 : i32
    %216 = vector.broadcast %c9_i32 : i32 to vector<32x1xi32>
    %217 = arith.cmpi sge, %115, %216 : vector<32x1xi32>
    %c25_i32 = arith.constant 25 : i32
    %218 = vector.broadcast %c25_i32 : i32 to vector<32x1xi32>
    %219 = arith.cmpi slt, %115, %218 : vector<32x1xi32>
    %220 = arith.andi %217, %219 : vector<32x1xi1>
    %cst_41 = arith.constant 0.000000e+00 : f32
    %221 = vector.shape_cast %220 : vector<32x1xi1> to vector<32x1xi1>
    %222 = vector.broadcast %221 : vector<32x1xi1> to vector<32x32xi1>
    %223 = vector.broadcast %cst_41 : f32 to vector<32x32xf32>
    %224 = arith.select %222, %215, %223 : vector<32x32xi1>, vector<32x32xf32>
    %225 = vector.extract_strided_slice %113 {offsets = [6, 0], sizes = [1, 32], strides = [1, 1]} : vector<31x32xf32> to vector<1x32xf32>
    %226 = vector.broadcast %225 : vector<1x32xf32> to vector<32x32xf32>
    %227 = arith.mulf %224, %226 : vector<32x32xf32>
    %228 = arith.addf %212, %227 : vector<32x32xf32>
    %229 = vector.extract_strided_slice %112 {offsets = [24, 0], sizes = [8, 32], strides = [1, 1]} : vector<32x32xf32> to vector<8x32xf32>
    %230 = vector.extract_strided_slice %112 {offsets = [0, 0], sizes = [24, 32], strides = [1, 1]} : vector<32x32xf32> to vector<24x32xf32>
    %231 = tpu.concatenate %229, %230 in 0 : vector<8x32xf32>, vector<24x32xf32> -> vector<32x32xf32>
    %c8_i32 = arith.constant 8 : i32
    %232 = vector.broadcast %c8_i32 : i32 to vector<32x1xi32>
    %233 = arith.cmpi sge, %115, %232 : vector<32x1xi32>
    %c24_i32 = arith.constant 24 : i32
    %234 = vector.broadcast %c24_i32 : i32 to vector<32x1xi32>
    %235 = arith.cmpi slt, %115, %234 : vector<32x1xi32>
    %236 = arith.andi %233, %235 : vector<32x1xi1>
    %cst_42 = arith.constant 0.000000e+00 : f32
    %237 = vector.shape_cast %236 : vector<32x1xi1> to vector<32x1xi1>
    %238 = vector.broadcast %237 : vector<32x1xi1> to vector<32x32xi1>
    %239 = vector.broadcast %cst_42 : f32 to vector<32x32xf32>
    %240 = arith.select %238, %231, %239 : vector<32x32xi1>, vector<32x32xf32>
    %241 = vector.extract_strided_slice %113 {offsets = [7, 0], sizes = [1, 32], strides = [1, 1]} : vector<31x32xf32> to vector<1x32xf32>
    %242 = vector.broadcast %241 : vector<1x32xf32> to vector<32x32xf32>
    %243 = arith.mulf %240, %242 : vector<32x32xf32>
    %244 = arith.addf %228, %243 : vector<32x32xf32>
    %245 = vector.extract_strided_slice %112 {offsets = [25, 0], sizes = [7, 32], strides = [1, 1]} : vector<32x32xf32> to vector<7x32xf32>
    %246 = vector.extract_strided_slice %112 {offsets = [0, 0], sizes = [25, 32], strides = [1, 1]} : vector<32x32xf32> to vector<25x32xf32>
    %247 = tpu.concatenate %245, %246 in 0 : vector<7x32xf32>, vector<25x32xf32> -> vector<32x32xf32>
    %c7_i32 = arith.constant 7 : i32
    %248 = vector.broadcast %c7_i32 : i32 to vector<32x1xi32>
    %249 = arith.cmpi sge, %115, %248 : vector<32x1xi32>
    %c23_i32 = arith.constant 23 : i32
    %250 = vector.broadcast %c23_i32 : i32 to vector<32x1xi32>
    %251 = arith.cmpi slt, %115, %250 : vector<32x1xi32>
    %252 = arith.andi %249, %251 : vector<32x1xi1>
    %cst_43 = arith.constant 0.000000e+00 : f32
    %253 = vector.shape_cast %252 : vector<32x1xi1> to vector<32x1xi1>
    %254 = vector.broadcast %253 : vector<32x1xi1> to vector<32x32xi1>
    %255 = vector.broadcast %cst_43 : f32 to vector<32x32xf32>
    %256 = arith.select %254, %247, %255 : vector<32x32xi1>, vector<32x32xf32>
    %257 = vector.extract_strided_slice %113 {offsets = [8, 0], sizes = [1, 32], strides = [1, 1]} : vector<31x32xf32> to vector<1x32xf32>
    %258 = vector.broadcast %257 : vector<1x32xf32> to vector<32x32xf32>
    %259 = arith.mulf %256, %258 : vector<32x32xf32>
    %260 = arith.addf %244, %259 : vector<32x32xf32>
    %261 = vector.extract_strided_slice %112 {offsets = [26, 0], sizes = [6, 32], strides = [1, 1]} : vector<32x32xf32> to vector<6x32xf32>
    %262 = vector.extract_strided_slice %112 {offsets = [0, 0], sizes = [26, 32], strides = [1, 1]} : vector<32x32xf32> to vector<26x32xf32>
    %263 = tpu.concatenate %261, %262 in 0 : vector<6x32xf32>, vector<26x32xf32> -> vector<32x32xf32>
    %c6_i32 = arith.constant 6 : i32
    %264 = vector.broadcast %c6_i32 : i32 to vector<32x1xi32>
    %265 = arith.cmpi sge, %115, %264 : vector<32x1xi32>
    %c22_i32 = arith.constant 22 : i32
    %266 = vector.broadcast %c22_i32 : i32 to vector<32x1xi32>
    %267 = arith.cmpi slt, %115, %266 : vector<32x1xi32>
    %268 = arith.andi %265, %267 : vector<32x1xi1>
    %cst_44 = arith.constant 0.000000e+00 : f32
    %269 = vector.shape_cast %268 : vector<32x1xi1> to vector<32x1xi1>
    %270 = vector.broadcast %269 : vector<32x1xi1> to vector<32x32xi1>
    %271 = vector.broadcast %cst_44 : f32 to vector<32x32xf32>
    %272 = arith.select %270, %263, %271 : vector<32x32xi1>, vector<32x32xf32>
    %273 = vector.extract_strided_slice %113 {offsets = [9, 0], sizes = [1, 32], strides = [1, 1]} : vector<31x32xf32> to vector<1x32xf32>
    %274 = vector.broadcast %273 : vector<1x32xf32> to vector<32x32xf32>
    %275 = arith.mulf %272, %274 : vector<32x32xf32>
    %276 = arith.addf %260, %275 : vector<32x32xf32>
    %277 = vector.extract_strided_slice %112 {offsets = [27, 0], sizes = [5, 32], strides = [1, 1]} : vector<32x32xf32> to vector<5x32xf32>
    %278 = vector.extract_strided_slice %112 {offsets = [0, 0], sizes = [27, 32], strides = [1, 1]} : vector<32x32xf32> to vector<27x32xf32>
    %279 = tpu.concatenate %277, %278 in 0 : vector<5x32xf32>, vector<27x32xf32> -> vector<32x32xf32>
    %c5_i32 = arith.constant 5 : i32
    %280 = vector.broadcast %c5_i32 : i32 to vector<32x1xi32>
    %281 = arith.cmpi sge, %115, %280 : vector<32x1xi32>
    %c21_i32 = arith.constant 21 : i32
    %282 = vector.broadcast %c21_i32 : i32 to vector<32x1xi32>
    %283 = arith.cmpi slt, %115, %282 : vector<32x1xi32>
    %284 = arith.andi %281, %283 : vector<32x1xi1>
    %cst_45 = arith.constant 0.000000e+00 : f32
    %285 = vector.shape_cast %284 : vector<32x1xi1> to vector<32x1xi1>
    %286 = vector.broadcast %285 : vector<32x1xi1> to vector<32x32xi1>
    %287 = vector.broadcast %cst_45 : f32 to vector<32x32xf32>
    %288 = arith.select %286, %279, %287 : vector<32x32xi1>, vector<32x32xf32>
    %289 = vector.extract_strided_slice %113 {offsets = [10, 0], sizes = [1, 32], strides = [1, 1]} : vector<31x32xf32> to vector<1x32xf32>
    %290 = vector.broadcast %289 : vector<1x32xf32> to vector<32x32xf32>
    %291 = arith.mulf %288, %290 : vector<32x32xf32>
    %292 = arith.addf %276, %291 : vector<32x32xf32>
    %293 = vector.extract_strided_slice %112 {offsets = [28, 0], sizes = [4, 32], strides = [1, 1]} : vector<32x32xf32> to vector<4x32xf32>
    %294 = vector.extract_strided_slice %112 {offsets = [0, 0], sizes = [28, 32], strides = [1, 1]} : vector<32x32xf32> to vector<28x32xf32>
    %295 = tpu.concatenate %293, %294 in 0 : vector<4x32xf32>, vector<28x32xf32> -> vector<32x32xf32>
    %c4_i32 = arith.constant 4 : i32
    %296 = vector.broadcast %c4_i32 : i32 to vector<32x1xi32>
    %297 = arith.cmpi sge, %115, %296 : vector<32x1xi32>
    %c20_i32 = arith.constant 20 : i32
    %298 = vector.broadcast %c20_i32 : i32 to vector<32x1xi32>
    %299 = arith.cmpi slt, %115, %298 : vector<32x1xi32>
    %300 = arith.andi %297, %299 : vector<32x1xi1>
    %cst_46 = arith.constant 0.000000e+00 : f32
    %301 = vector.shape_cast %300 : vector<32x1xi1> to vector<32x1xi1>
    %302 = vector.broadcast %301 : vector<32x1xi1> to vector<32x32xi1>
    %303 = vector.broadcast %cst_46 : f32 to vector<32x32xf32>
    %304 = arith.select %302, %295, %303 : vector<32x32xi1>, vector<32x32xf32>
    %305 = vector.extract_strided_slice %113 {offsets = [11, 0], sizes = [1, 32], strides = [1, 1]} : vector<31x32xf32> to vector<1x32xf32>
    %306 = vector.broadcast %305 : vector<1x32xf32> to vector<32x32xf32>
    %307 = arith.mulf %304, %306 : vector<32x32xf32>
    %308 = arith.addf %292, %307 : vector<32x32xf32>
    %309 = vector.extract_strided_slice %112 {offsets = [29, 0], sizes = [3, 32], strides = [1, 1]} : vector<32x32xf32> to vector<3x32xf32>
    %310 = vector.extract_strided_slice %112 {offsets = [0, 0], sizes = [29, 32], strides = [1, 1]} : vector<32x32xf32> to vector<29x32xf32>
    %311 = tpu.concatenate %309, %310 in 0 : vector<3x32xf32>, vector<29x32xf32> -> vector<32x32xf32>
    %c3_i32 = arith.constant 3 : i32
    %312 = vector.broadcast %c3_i32 : i32 to vector<32x1xi32>
    %313 = arith.cmpi sge, %115, %312 : vector<32x1xi32>
    %c19_i32 = arith.constant 19 : i32
    %314 = vector.broadcast %c19_i32 : i32 to vector<32x1xi32>
    %315 = arith.cmpi slt, %115, %314 : vector<32x1xi32>
    %316 = arith.andi %313, %315 : vector<32x1xi1>
    %cst_47 = arith.constant 0.000000e+00 : f32
    %317 = vector.shape_cast %316 : vector<32x1xi1> to vector<32x1xi1>
    %318 = vector.broadcast %317 : vector<32x1xi1> to vector<32x32xi1>
    %319 = vector.broadcast %cst_47 : f32 to vector<32x32xf32>
    %320 = arith.select %318, %311, %319 : vector<32x32xi1>, vector<32x32xf32>
    %321 = vector.extract_strided_slice %113 {offsets = [12, 0], sizes = [1, 32], strides = [1, 1]} : vector<31x32xf32> to vector<1x32xf32>
    %322 = vector.broadcast %321 : vector<1x32xf32> to vector<32x32xf32>
    %323 = arith.mulf %320, %322 : vector<32x32xf32>
    %324 = arith.addf %308, %323 : vector<32x32xf32>
    %325 = vector.extract_strided_slice %112 {offsets = [30, 0], sizes = [2, 32], strides = [1, 1]} : vector<32x32xf32> to vector<2x32xf32>
    %326 = vector.extract_strided_slice %112 {offsets = [0, 0], sizes = [30, 32], strides = [1, 1]} : vector<32x32xf32> to vector<30x32xf32>
    %327 = tpu.concatenate %325, %326 in 0 : vector<2x32xf32>, vector<30x32xf32> -> vector<32x32xf32>
    %c2_i32 = arith.constant 2 : i32
    %328 = vector.broadcast %c2_i32 : i32 to vector<32x1xi32>
    %329 = arith.cmpi sge, %115, %328 : vector<32x1xi32>
    %c18_i32 = arith.constant 18 : i32
    %330 = vector.broadcast %c18_i32 : i32 to vector<32x1xi32>
    %331 = arith.cmpi slt, %115, %330 : vector<32x1xi32>
    %332 = arith.andi %329, %331 : vector<32x1xi1>
    %cst_48 = arith.constant 0.000000e+00 : f32
    %333 = vector.shape_cast %332 : vector<32x1xi1> to vector<32x1xi1>
    %334 = vector.broadcast %333 : vector<32x1xi1> to vector<32x32xi1>
    %335 = vector.broadcast %cst_48 : f32 to vector<32x32xf32>
    %336 = arith.select %334, %327, %335 : vector<32x32xi1>, vector<32x32xf32>
    %337 = vector.extract_strided_slice %113 {offsets = [13, 0], sizes = [1, 32], strides = [1, 1]} : vector<31x32xf32> to vector<1x32xf32>
    %338 = vector.broadcast %337 : vector<1x32xf32> to vector<32x32xf32>
    %339 = arith.mulf %336, %338 : vector<32x32xf32>
    %340 = arith.addf %324, %339 : vector<32x32xf32>
    %341 = vector.extract_strided_slice %112 {offsets = [31, 0], sizes = [1, 32], strides = [1, 1]} : vector<32x32xf32> to vector<1x32xf32>
    %342 = vector.extract_strided_slice %112 {offsets = [0, 0], sizes = [31, 32], strides = [1, 1]} : vector<32x32xf32> to vector<31x32xf32>
    %343 = tpu.concatenate %341, %342 in 0 : vector<1x32xf32>, vector<31x32xf32> -> vector<32x32xf32>
    %c1_i32 = arith.constant 1 : i32
    %344 = vector.broadcast %c1_i32 : i32 to vector<32x1xi32>
    %345 = arith.cmpi sge, %115, %344 : vector<32x1xi32>
    %c17_i32 = arith.constant 17 : i32
    %346 = vector.broadcast %c17_i32 : i32 to vector<32x1xi32>
    %347 = arith.cmpi slt, %115, %346 : vector<32x1xi32>
    %348 = arith.andi %345, %347 : vector<32x1xi1>
    %cst_49 = arith.constant 0.000000e+00 : f32
    %349 = vector.shape_cast %348 : vector<32x1xi1> to vector<32x1xi1>
    %350 = vector.broadcast %349 : vector<32x1xi1> to vector<32x32xi1>
    %351 = vector.broadcast %cst_49 : f32 to vector<32x32xf32>
    %352 = arith.select %350, %343, %351 : vector<32x32xi1>, vector<32x32xf32>
    %353 = vector.extract_strided_slice %113 {offsets = [14, 0], sizes = [1, 32], strides = [1, 1]} : vector<31x32xf32> to vector<1x32xf32>
    %354 = vector.broadcast %353 : vector<1x32xf32> to vector<32x32xf32>
    %355 = arith.mulf %352, %354 : vector<32x32xf32>
    %356 = arith.addf %340, %355 : vector<32x32xf32>
    %357 = vector.extract_strided_slice %113 {offsets = [15, 0], sizes = [1, 32], strides = [1, 1]} : vector<31x32xf32> to vector<1x32xf32>
    %358 = vector.broadcast %357 : vector<1x32xf32> to vector<32x32xf32>
    %359 = arith.mulf %112, %358 : vector<32x32xf32>
    %360 = arith.addf %356, %359 : vector<32x32xf32>
    %361 = vector.extract_strided_slice %112 {offsets = [1, 0], sizes = [31, 32], strides = [1, 1]} : vector<32x32xf32> to vector<31x32xf32>
    %362 = vector.extract_strided_slice %112 {offsets = [0, 0], sizes = [1, 32], strides = [1, 1]} : vector<32x32xf32> to vector<1x32xf32>
    %363 = tpu.concatenate %361, %362 in 0 : vector<31x32xf32>, vector<1x32xf32> -> vector<32x32xf32>
    %c-1_i32 = arith.constant -1 : i32
    %364 = vector.broadcast %c-1_i32 : i32 to vector<32x1xi32>
    %365 = arith.cmpi sge, %115, %364 : vector<32x1xi32>
    %c15_i32_50 = arith.constant 15 : i32
    %366 = vector.broadcast %c15_i32_50 : i32 to vector<32x1xi32>
    %367 = arith.cmpi slt, %115, %366 : vector<32x1xi32>
    %368 = arith.andi %365, %367 : vector<32x1xi1>
    %cst_51 = arith.constant 0.000000e+00 : f32
    %369 = vector.shape_cast %368 : vector<32x1xi1> to vector<32x1xi1>
    %370 = vector.broadcast %369 : vector<32x1xi1> to vector<32x32xi1>
    %371 = vector.broadcast %cst_51 : f32 to vector<32x32xf32>
    %372 = arith.select %370, %363, %371 : vector<32x32xi1>, vector<32x32xf32>
    %373 = vector.extract_strided_slice %113 {offsets = [16, 0], sizes = [1, 32], strides = [1, 1]} : vector<31x32xf32> to vector<1x32xf32>
    %374 = vector.broadcast %373 : vector<1x32xf32> to vector<32x32xf32>
    %375 = arith.mulf %372, %374 : vector<32x32xf32>
    %376 = arith.addf %360, %375 : vector<32x32xf32>
    %377 = vector.extract_strided_slice %112 {offsets = [2, 0], sizes = [30, 32], strides = [1, 1]} : vector<32x32xf32> to vector<30x32xf32>
    %378 = vector.extract_strided_slice %112 {offsets = [0, 0], sizes = [2, 32], strides = [1, 1]} : vector<32x32xf32> to vector<2x32xf32>
    %379 = tpu.concatenate %377, %378 in 0 : vector<30x32xf32>, vector<2x32xf32> -> vector<32x32xf32>
    %c-2_i32 = arith.constant -2 : i32
    %380 = vector.broadcast %c-2_i32 : i32 to vector<32x1xi32>
    %381 = arith.cmpi sge, %115, %380 : vector<32x1xi32>
    %c14_i32_52 = arith.constant 14 : i32
    %382 = vector.broadcast %c14_i32_52 : i32 to vector<32x1xi32>
    %383 = arith.cmpi slt, %115, %382 : vector<32x1xi32>
    %384 = arith.andi %381, %383 : vector<32x1xi1>
    %cst_53 = arith.constant 0.000000e+00 : f32
    %385 = vector.shape_cast %384 : vector<32x1xi1> to vector<32x1xi1>
    %386 = vector.broadcast %385 : vector<32x1xi1> to vector<32x32xi1>
    %387 = vector.broadcast %cst_53 : f32 to vector<32x32xf32>
    %388 = arith.select %386, %379, %387 : vector<32x32xi1>, vector<32x32xf32>
    %389 = vector.extract_strided_slice %113 {offsets = [17, 0], sizes = [1, 32], strides = [1, 1]} : vector<31x32xf32> to vector<1x32xf32>
    %390 = vector.broadcast %389 : vector<1x32xf32> to vector<32x32xf32>
    %391 = arith.mulf %388, %390 : vector<32x32xf32>
    %392 = arith.addf %376, %391 : vector<32x32xf32>
    %393 = vector.extract_strided_slice %112 {offsets = [3, 0], sizes = [29, 32], strides = [1, 1]} : vector<32x32xf32> to vector<29x32xf32>
    %394 = vector.extract_strided_slice %112 {offsets = [0, 0], sizes = [3, 32], strides = [1, 1]} : vector<32x32xf32> to vector<3x32xf32>
    %395 = tpu.concatenate %393, %394 in 0 : vector<29x32xf32>, vector<3x32xf32> -> vector<32x32xf32>
    %c-3_i32 = arith.constant -3 : i32
    %396 = vector.broadcast %c-3_i32 : i32 to vector<32x1xi32>
    %397 = arith.cmpi sge, %115, %396 : vector<32x1xi32>
    %c13_i32_54 = arith.constant 13 : i32
    %398 = vector.broadcast %c13_i32_54 : i32 to vector<32x1xi32>
    %399 = arith.cmpi slt, %115, %398 : vector<32x1xi32>
    %400 = arith.andi %397, %399 : vector<32x1xi1>
    %cst_55 = arith.constant 0.000000e+00 : f32
    %401 = vector.shape_cast %400 : vector<32x1xi1> to vector<32x1xi1>
    %402 = vector.broadcast %401 : vector<32x1xi1> to vector<32x32xi1>
    %403 = vector.broadcast %cst_55 : f32 to vector<32x32xf32>
    %404 = arith.select %402, %395, %403 : vector<32x32xi1>, vector<32x32xf32>
    %405 = vector.extract_strided_slice %113 {offsets = [18, 0], sizes = [1, 32], strides = [1, 1]} : vector<31x32xf32> to vector<1x32xf32>
    %406 = vector.broadcast %405 : vector<1x32xf32> to vector<32x32xf32>
    %407 = arith.mulf %404, %406 : vector<32x32xf32>
    %408 = arith.addf %392, %407 : vector<32x32xf32>
    %409 = vector.extract_strided_slice %112 {offsets = [4, 0], sizes = [28, 32], strides = [1, 1]} : vector<32x32xf32> to vector<28x32xf32>
    %410 = vector.extract_strided_slice %112 {offsets = [0, 0], sizes = [4, 32], strides = [1, 1]} : vector<32x32xf32> to vector<4x32xf32>
    %411 = tpu.concatenate %409, %410 in 0 : vector<28x32xf32>, vector<4x32xf32> -> vector<32x32xf32>
    %c-4_i32 = arith.constant -4 : i32
    %412 = vector.broadcast %c-4_i32 : i32 to vector<32x1xi32>
    %413 = arith.cmpi sge, %115, %412 : vector<32x1xi32>
    %c12_i32_56 = arith.constant 12 : i32
    %414 = vector.broadcast %c12_i32_56 : i32 to vector<32x1xi32>
    %415 = arith.cmpi slt, %115, %414 : vector<32x1xi32>
    %416 = arith.andi %413, %415 : vector<32x1xi1>
    %cst_57 = arith.constant 0.000000e+00 : f32
    %417 = vector.shape_cast %416 : vector<32x1xi1> to vector<32x1xi1>
    %418 = vector.broadcast %417 : vector<32x1xi1> to vector<32x32xi1>
    %419 = vector.broadcast %cst_57 : f32 to vector<32x32xf32>
    %420 = arith.select %418, %411, %419 : vector<32x32xi1>, vector<32x32xf32>
    %421 = vector.extract_strided_slice %113 {offsets = [19, 0], sizes = [1, 32], strides = [1, 1]} : vector<31x32xf32> to vector<1x32xf32>
    %422 = vector.broadcast %421 : vector<1x32xf32> to vector<32x32xf32>
    %423 = arith.mulf %420, %422 : vector<32x32xf32>
    %424 = arith.addf %408, %423 : vector<32x32xf32>
    %425 = vector.extract_strided_slice %112 {offsets = [5, 0], sizes = [27, 32], strides = [1, 1]} : vector<32x32xf32> to vector<27x32xf32>
    %426 = vector.extract_strided_slice %112 {offsets = [0, 0], sizes = [5, 32], strides = [1, 1]} : vector<32x32xf32> to vector<5x32xf32>
    %427 = tpu.concatenate %425, %426 in 0 : vector<27x32xf32>, vector<5x32xf32> -> vector<32x32xf32>
    %c-5_i32 = arith.constant -5 : i32
    %428 = vector.broadcast %c-5_i32 : i32 to vector<32x1xi32>
    %429 = arith.cmpi sge, %115, %428 : vector<32x1xi32>
    %c11_i32_58 = arith.constant 11 : i32
    %430 = vector.broadcast %c11_i32_58 : i32 to vector<32x1xi32>
    %431 = arith.cmpi slt, %115, %430 : vector<32x1xi32>
    %432 = arith.andi %429, %431 : vector<32x1xi1>
    %cst_59 = arith.constant 0.000000e+00 : f32
    %433 = vector.shape_cast %432 : vector<32x1xi1> to vector<32x1xi1>
    %434 = vector.broadcast %433 : vector<32x1xi1> to vector<32x32xi1>
    %435 = vector.broadcast %cst_59 : f32 to vector<32x32xf32>
    %436 = arith.select %434, %427, %435 : vector<32x32xi1>, vector<32x32xf32>
    %437 = vector.extract_strided_slice %113 {offsets = [20, 0], sizes = [1, 32], strides = [1, 1]} : vector<31x32xf32> to vector<1x32xf32>
    %438 = vector.broadcast %437 : vector<1x32xf32> to vector<32x32xf32>
    %439 = arith.mulf %436, %438 : vector<32x32xf32>
    %440 = arith.addf %424, %439 : vector<32x32xf32>
    %441 = vector.extract_strided_slice %112 {offsets = [6, 0], sizes = [26, 32], strides = [1, 1]} : vector<32x32xf32> to vector<26x32xf32>
    %442 = vector.extract_strided_slice %112 {offsets = [0, 0], sizes = [6, 32], strides = [1, 1]} : vector<32x32xf32> to vector<6x32xf32>
    %443 = tpu.concatenate %441, %442 in 0 : vector<26x32xf32>, vector<6x32xf32> -> vector<32x32xf32>
    %c-6_i32 = arith.constant -6 : i32
    %444 = vector.broadcast %c-6_i32 : i32 to vector<32x1xi32>
    %445 = arith.cmpi sge, %115, %444 : vector<32x1xi32>
    %c10_i32_60 = arith.constant 10 : i32
    %446 = vector.broadcast %c10_i32_60 : i32 to vector<32x1xi32>
    %447 = arith.cmpi slt, %115, %446 : vector<32x1xi32>
    %448 = arith.andi %445, %447 : vector<32x1xi1>
    %cst_61 = arith.constant 0.000000e+00 : f32
    %449 = vector.shape_cast %448 : vector<32x1xi1> to vector<32x1xi1>
    %450 = vector.broadcast %449 : vector<32x1xi1> to vector<32x32xi1>
    %451 = vector.broadcast %cst_61 : f32 to vector<32x32xf32>
    %452 = arith.select %450, %443, %451 : vector<32x32xi1>, vector<32x32xf32>
    %453 = vector.extract_strided_slice %113 {offsets = [21, 0], sizes = [1, 32], strides = [1, 1]} : vector<31x32xf32> to vector<1x32xf32>
    %454 = vector.broadcast %453 : vector<1x32xf32> to vector<32x32xf32>
    %455 = arith.mulf %452, %454 : vector<32x32xf32>
    %456 = arith.addf %440, %455 : vector<32x32xf32>
    %457 = vector.extract_strided_slice %112 {offsets = [7, 0], sizes = [25, 32], strides = [1, 1]} : vector<32x32xf32> to vector<25x32xf32>
    %458 = vector.extract_strided_slice %112 {offsets = [0, 0], sizes = [7, 32], strides = [1, 1]} : vector<32x32xf32> to vector<7x32xf32>
    %459 = tpu.concatenate %457, %458 in 0 : vector<25x32xf32>, vector<7x32xf32> -> vector<32x32xf32>
    %c-7_i32 = arith.constant -7 : i32
    %460 = vector.broadcast %c-7_i32 : i32 to vector<32x1xi32>
    %461 = arith.cmpi sge, %115, %460 : vector<32x1xi32>
    %c9_i32_62 = arith.constant 9 : i32
    %462 = vector.broadcast %c9_i32_62 : i32 to vector<32x1xi32>
    %463 = arith.cmpi slt, %115, %462 : vector<32x1xi32>
    %464 = arith.andi %461, %463 : vector<32x1xi1>
    %cst_63 = arith.constant 0.000000e+00 : f32
    %465 = vector.shape_cast %464 : vector<32x1xi1> to vector<32x1xi1>
    %466 = vector.broadcast %465 : vector<32x1xi1> to vector<32x32xi1>
    %467 = vector.broadcast %cst_63 : f32 to vector<32x32xf32>
    %468 = arith.select %466, %459, %467 : vector<32x32xi1>, vector<32x32xf32>
    %469 = vector.extract_strided_slice %113 {offsets = [22, 0], sizes = [1, 32], strides = [1, 1]} : vector<31x32xf32> to vector<1x32xf32>
    %470 = vector.broadcast %469 : vector<1x32xf32> to vector<32x32xf32>
    %471 = arith.mulf %468, %470 : vector<32x32xf32>
    %472 = arith.addf %456, %471 : vector<32x32xf32>
    %473 = vector.extract_strided_slice %112 {offsets = [8, 0], sizes = [24, 32], strides = [1, 1]} : vector<32x32xf32> to vector<24x32xf32>
    %474 = vector.extract_strided_slice %112 {offsets = [0, 0], sizes = [8, 32], strides = [1, 1]} : vector<32x32xf32> to vector<8x32xf32>
    %475 = tpu.concatenate %473, %474 in 0 : vector<24x32xf32>, vector<8x32xf32> -> vector<32x32xf32>
    %c-8_i32 = arith.constant -8 : i32
    %476 = vector.broadcast %c-8_i32 : i32 to vector<32x1xi32>
    %477 = arith.cmpi sge, %115, %476 : vector<32x1xi32>
    %c8_i32_64 = arith.constant 8 : i32
    %478 = vector.broadcast %c8_i32_64 : i32 to vector<32x1xi32>
    %479 = arith.cmpi slt, %115, %478 : vector<32x1xi32>
    %480 = arith.andi %477, %479 : vector<32x1xi1>
    %cst_65 = arith.constant 0.000000e+00 : f32
    %481 = vector.shape_cast %480 : vector<32x1xi1> to vector<32x1xi1>
    %482 = vector.broadcast %481 : vector<32x1xi1> to vector<32x32xi1>
    %483 = vector.broadcast %cst_65 : f32 to vector<32x32xf32>
    %484 = arith.select %482, %475, %483 : vector<32x32xi1>, vector<32x32xf32>
    %485 = vector.extract_strided_slice %113 {offsets = [23, 0], sizes = [1, 32], strides = [1, 1]} : vector<31x32xf32> to vector<1x32xf32>
    %486 = vector.broadcast %485 : vector<1x32xf32> to vector<32x32xf32>
    %487 = arith.mulf %484, %486 : vector<32x32xf32>
    %488 = arith.addf %472, %487 : vector<32x32xf32>
    %489 = vector.extract_strided_slice %112 {offsets = [9, 0], sizes = [23, 32], strides = [1, 1]} : vector<32x32xf32> to vector<23x32xf32>
    %490 = vector.extract_strided_slice %112 {offsets = [0, 0], sizes = [9, 32], strides = [1, 1]} : vector<32x32xf32> to vector<9x32xf32>
    %491 = tpu.concatenate %489, %490 in 0 : vector<23x32xf32>, vector<9x32xf32> -> vector<32x32xf32>
    %c-9_i32 = arith.constant -9 : i32
    %492 = vector.broadcast %c-9_i32 : i32 to vector<32x1xi32>
    %493 = arith.cmpi sge, %115, %492 : vector<32x1xi32>
    %c7_i32_66 = arith.constant 7 : i32
    %494 = vector.broadcast %c7_i32_66 : i32 to vector<32x1xi32>
    %495 = arith.cmpi slt, %115, %494 : vector<32x1xi32>
    %496 = arith.andi %493, %495 : vector<32x1xi1>
    %cst_67 = arith.constant 0.000000e+00 : f32
    %497 = vector.shape_cast %496 : vector<32x1xi1> to vector<32x1xi1>
    %498 = vector.broadcast %497 : vector<32x1xi1> to vector<32x32xi1>
    %499 = vector.broadcast %cst_67 : f32 to vector<32x32xf32>
    %500 = arith.select %498, %491, %499 : vector<32x32xi1>, vector<32x32xf32>
    %501 = vector.extract_strided_slice %113 {offsets = [24, 0], sizes = [1, 32], strides = [1, 1]} : vector<31x32xf32> to vector<1x32xf32>
    %502 = vector.broadcast %501 : vector<1x32xf32> to vector<32x32xf32>
    %503 = arith.mulf %500, %502 : vector<32x32xf32>
    %504 = arith.addf %488, %503 : vector<32x32xf32>
    %505 = vector.extract_strided_slice %112 {offsets = [10, 0], sizes = [22, 32], strides = [1, 1]} : vector<32x32xf32> to vector<22x32xf32>
    %506 = vector.extract_strided_slice %112 {offsets = [0, 0], sizes = [10, 32], strides = [1, 1]} : vector<32x32xf32> to vector<10x32xf32>
    %507 = tpu.concatenate %505, %506 in 0 : vector<22x32xf32>, vector<10x32xf32> -> vector<32x32xf32>
    %c-10_i32 = arith.constant -10 : i32
    %508 = vector.broadcast %c-10_i32 : i32 to vector<32x1xi32>
    %509 = arith.cmpi sge, %115, %508 : vector<32x1xi32>
    %c6_i32_68 = arith.constant 6 : i32
    %510 = vector.broadcast %c6_i32_68 : i32 to vector<32x1xi32>
    %511 = arith.cmpi slt, %115, %510 : vector<32x1xi32>
    %512 = arith.andi %509, %511 : vector<32x1xi1>
    %cst_69 = arith.constant 0.000000e+00 : f32
    %513 = vector.shape_cast %512 : vector<32x1xi1> to vector<32x1xi1>
    %514 = vector.broadcast %513 : vector<32x1xi1> to vector<32x32xi1>
    %515 = vector.broadcast %cst_69 : f32 to vector<32x32xf32>
    %516 = arith.select %514, %507, %515 : vector<32x32xi1>, vector<32x32xf32>
    %517 = vector.extract_strided_slice %113 {offsets = [25, 0], sizes = [1, 32], strides = [1, 1]} : vector<31x32xf32> to vector<1x32xf32>
    %518 = vector.broadcast %517 : vector<1x32xf32> to vector<32x32xf32>
    %519 = arith.mulf %516, %518 : vector<32x32xf32>
    %520 = arith.addf %504, %519 : vector<32x32xf32>
    %521 = vector.extract_strided_slice %112 {offsets = [11, 0], sizes = [21, 32], strides = [1, 1]} : vector<32x32xf32> to vector<21x32xf32>
    %522 = vector.extract_strided_slice %112 {offsets = [0, 0], sizes = [11, 32], strides = [1, 1]} : vector<32x32xf32> to vector<11x32xf32>
    %523 = tpu.concatenate %521, %522 in 0 : vector<21x32xf32>, vector<11x32xf32> -> vector<32x32xf32>
    %c-11_i32 = arith.constant -11 : i32
    %524 = vector.broadcast %c-11_i32 : i32 to vector<32x1xi32>
    %525 = arith.cmpi sge, %115, %524 : vector<32x1xi32>
    %c5_i32_70 = arith.constant 5 : i32
    %526 = vector.broadcast %c5_i32_70 : i32 to vector<32x1xi32>
    %527 = arith.cmpi slt, %115, %526 : vector<32x1xi32>
    %528 = arith.andi %525, %527 : vector<32x1xi1>
    %cst_71 = arith.constant 0.000000e+00 : f32
    %529 = vector.shape_cast %528 : vector<32x1xi1> to vector<32x1xi1>
    %530 = vector.broadcast %529 : vector<32x1xi1> to vector<32x32xi1>
    %531 = vector.broadcast %cst_71 : f32 to vector<32x32xf32>
    %532 = arith.select %530, %523, %531 : vector<32x32xi1>, vector<32x32xf32>
    %533 = vector.extract_strided_slice %113 {offsets = [26, 0], sizes = [1, 32], strides = [1, 1]} : vector<31x32xf32> to vector<1x32xf32>
    %534 = vector.broadcast %533 : vector<1x32xf32> to vector<32x32xf32>
    %535 = arith.mulf %532, %534 : vector<32x32xf32>
    %536 = arith.addf %520, %535 : vector<32x32xf32>
    %537 = vector.extract_strided_slice %112 {offsets = [12, 0], sizes = [20, 32], strides = [1, 1]} : vector<32x32xf32> to vector<20x32xf32>
    %538 = vector.extract_strided_slice %112 {offsets = [0, 0], sizes = [12, 32], strides = [1, 1]} : vector<32x32xf32> to vector<12x32xf32>
    %539 = tpu.concatenate %537, %538 in 0 : vector<20x32xf32>, vector<12x32xf32> -> vector<32x32xf32>
    %c-12_i32 = arith.constant -12 : i32
    %540 = vector.broadcast %c-12_i32 : i32 to vector<32x1xi32>
    %541 = arith.cmpi sge, %115, %540 : vector<32x1xi32>
    %c4_i32_72 = arith.constant 4 : i32
    %542 = vector.broadcast %c4_i32_72 : i32 to vector<32x1xi32>
    %543 = arith.cmpi slt, %115, %542 : vector<32x1xi32>
    %544 = arith.andi %541, %543 : vector<32x1xi1>
    %cst_73 = arith.constant 0.000000e+00 : f32
    %545 = vector.shape_cast %544 : vector<32x1xi1> to vector<32x1xi1>
    %546 = vector.broadcast %545 : vector<32x1xi1> to vector<32x32xi1>
    %547 = vector.broadcast %cst_73 : f32 to vector<32x32xf32>
    %548 = arith.select %546, %539, %547 : vector<32x32xi1>, vector<32x32xf32>
    %549 = vector.extract_strided_slice %113 {offsets = [27, 0], sizes = [1, 32], strides = [1, 1]} : vector<31x32xf32> to vector<1x32xf32>
    %550 = vector.broadcast %549 : vector<1x32xf32> to vector<32x32xf32>
    %551 = arith.mulf %548, %550 : vector<32x32xf32>
    %552 = arith.addf %536, %551 : vector<32x32xf32>
    %553 = vector.extract_strided_slice %112 {offsets = [13, 0], sizes = [19, 32], strides = [1, 1]} : vector<32x32xf32> to vector<19x32xf32>
    %554 = vector.extract_strided_slice %112 {offsets = [0, 0], sizes = [13, 32], strides = [1, 1]} : vector<32x32xf32> to vector<13x32xf32>
    %555 = tpu.concatenate %553, %554 in 0 : vector<19x32xf32>, vector<13x32xf32> -> vector<32x32xf32>
    %c-13_i32 = arith.constant -13 : i32
    %556 = vector.broadcast %c-13_i32 : i32 to vector<32x1xi32>
    %557 = arith.cmpi sge, %115, %556 : vector<32x1xi32>
    %c3_i32_74 = arith.constant 3 : i32
    %558 = vector.broadcast %c3_i32_74 : i32 to vector<32x1xi32>
    %559 = arith.cmpi slt, %115, %558 : vector<32x1xi32>
    %560 = arith.andi %557, %559 : vector<32x1xi1>
    %cst_75 = arith.constant 0.000000e+00 : f32
    %561 = vector.shape_cast %560 : vector<32x1xi1> to vector<32x1xi1>
    %562 = vector.broadcast %561 : vector<32x1xi1> to vector<32x32xi1>
    %563 = vector.broadcast %cst_75 : f32 to vector<32x32xf32>
    %564 = arith.select %562, %555, %563 : vector<32x32xi1>, vector<32x32xf32>
    %565 = vector.extract_strided_slice %113 {offsets = [28, 0], sizes = [1, 32], strides = [1, 1]} : vector<31x32xf32> to vector<1x32xf32>
    %566 = vector.broadcast %565 : vector<1x32xf32> to vector<32x32xf32>
    %567 = arith.mulf %564, %566 : vector<32x32xf32>
    %568 = arith.addf %552, %567 : vector<32x32xf32>
    %569 = vector.extract_strided_slice %112 {offsets = [14, 0], sizes = [18, 32], strides = [1, 1]} : vector<32x32xf32> to vector<18x32xf32>
    %570 = vector.extract_strided_slice %112 {offsets = [0, 0], sizes = [14, 32], strides = [1, 1]} : vector<32x32xf32> to vector<14x32xf32>
    %571 = tpu.concatenate %569, %570 in 0 : vector<18x32xf32>, vector<14x32xf32> -> vector<32x32xf32>
    %c-14_i32 = arith.constant -14 : i32
    %572 = vector.broadcast %c-14_i32 : i32 to vector<32x1xi32>
    %573 = arith.cmpi sge, %115, %572 : vector<32x1xi32>
    %c2_i32_76 = arith.constant 2 : i32
    %574 = vector.broadcast %c2_i32_76 : i32 to vector<32x1xi32>
    %575 = arith.cmpi slt, %115, %574 : vector<32x1xi32>
    %576 = arith.andi %573, %575 : vector<32x1xi1>
    %cst_77 = arith.constant 0.000000e+00 : f32
    %577 = vector.shape_cast %576 : vector<32x1xi1> to vector<32x1xi1>
    %578 = vector.broadcast %577 : vector<32x1xi1> to vector<32x32xi1>
    %579 = vector.broadcast %cst_77 : f32 to vector<32x32xf32>
    %580 = arith.select %578, %571, %579 : vector<32x32xi1>, vector<32x32xf32>
    %581 = vector.extract_strided_slice %113 {offsets = [29, 0], sizes = [1, 32], strides = [1, 1]} : vector<31x32xf32> to vector<1x32xf32>
    %582 = vector.broadcast %581 : vector<1x32xf32> to vector<32x32xf32>
    %583 = arith.mulf %580, %582 : vector<32x32xf32>
    %584 = arith.addf %568, %583 : vector<32x32xf32>
    %585 = vector.extract_strided_slice %112 {offsets = [15, 0], sizes = [17, 32], strides = [1, 1]} : vector<32x32xf32> to vector<17x32xf32>
    %586 = vector.extract_strided_slice %112 {offsets = [0, 0], sizes = [15, 32], strides = [1, 1]} : vector<32x32xf32> to vector<15x32xf32>
    %587 = tpu.concatenate %585, %586 in 0 : vector<17x32xf32>, vector<15x32xf32> -> vector<32x32xf32>
    %c-15_i32 = arith.constant -15 : i32
    %588 = vector.broadcast %c-15_i32 : i32 to vector<32x1xi32>
    %589 = arith.cmpi sge, %115, %588 : vector<32x1xi32>
    %c1_i32_78 = arith.constant 1 : i32
    %590 = vector.broadcast %c1_i32_78 : i32 to vector<32x1xi32>
    %591 = arith.cmpi slt, %115, %590 : vector<32x1xi32>
    %592 = arith.andi %589, %591 : vector<32x1xi1>
    %cst_79 = arith.constant 0.000000e+00 : f32
    %593 = vector.shape_cast %592 : vector<32x1xi1> to vector<32x1xi1>
    %594 = vector.broadcast %593 : vector<32x1xi1> to vector<32x32xi1>
    %595 = vector.broadcast %cst_79 : f32 to vector<32x32xf32>
    %596 = arith.select %594, %587, %595 : vector<32x32xi1>, vector<32x32xf32>
    %597 = vector.extract_strided_slice %113 {offsets = [30, 0], sizes = [1, 32], strides = [1, 1]} : vector<31x32xf32> to vector<1x32xf32>
    %598 = vector.broadcast %597 : vector<1x32xf32> to vector<32x32xf32>
    %599 = arith.mulf %596, %598 : vector<32x32xf32>
    %600 = arith.addf %584, %599 : vector<32x32xf32>
    %c7 = arith.constant 7 : index
    %c0_80 = arith.constant 0 : index
    %601 = vector.load %arg1[%c7, %c0_80] : memref<46x128xf32, #tpu.memory_space<vmem>>, vector<1x32xf32>
    %602 = vector.broadcast %601 : vector<1x32xf32> to vector<32x32xf32>
    %603 = arith.addf %600, %602 : vector<32x32xf32>
    %cst_81 = arith.constant dense<0.000000e+00> : vector<32xf32>
    %604 = vector.multi_reduction <add>, %603, %cst_81 [0] : vector<32x32xf32> to vector<32xf32>
    %605 = vector.shape_cast %604 : vector<32xf32> to vector<1x32xf32>
    %cst_82 = arith.constant 3.200000e+01 : f32
    %606 = vector.broadcast %cst_82 : f32 to vector<1x32xf32>
    %607 = arith.divf %605, %606 : vector<1x32xf32>
    %608 = vector.broadcast %607 : vector<1x32xf32> to vector<32x32xf32>
    %609 = arith.subf %603, %608 : vector<32x32xf32>
    %610 = arith.mulf %609, %609 : vector<32x32xf32>
    %cst_83 = arith.constant dense<0.000000e+00> : vector<32xf32>
    %611 = vector.multi_reduction <add>, %610, %cst_83 [0] : vector<32x32xf32> to vector<32xf32>
    %612 = vector.shape_cast %611 : vector<32xf32> to vector<1x32xf32>
    %cst_84 = arith.constant 3.200000e+01 : f32
    %613 = vector.broadcast %cst_84 : f32 to vector<1x32xf32>
    %614 = arith.divf %612, %613 : vector<1x32xf32>
    %615 = vector.broadcast %607 : vector<1x32xf32> to vector<32x32xf32>
    %616 = arith.subf %603, %615 : vector<32x32xf32>
    %cst_85 = arith.constant 9.99999974E-6 : f32
    %617 = vector.broadcast %cst_85 : f32 to vector<1x32xf32>
    %618 = arith.addf %614, %617 : vector<1x32xf32>
    %619 = math.rsqrt %618 : vector<1x32xf32>
    %620 = vector.broadcast %619 : vector<1x32xf32> to vector<32x32xf32>
    %621 = arith.mulf %616, %620 : vector<32x32xf32>
    %c8 = arith.constant 8 : index
    %c0_86 = arith.constant 0 : index
    %622 = vector.load %arg1[%c8, %c0_86] : memref<46x128xf32, #tpu.memory_space<vmem>>, vector<1x32xf32>
    %623 = vector.broadcast %622 : vector<1x32xf32> to vector<32x32xf32>
    %624 = arith.mulf %621, %623 : vector<32x32xf32>
    %c9 = arith.constant 9 : index
    %c0_87 = arith.constant 0 : index
    %625 = vector.load %arg1[%c9, %c0_87] : memref<46x128xf32, #tpu.memory_space<vmem>>, vector<1x32xf32>
    %626 = vector.broadcast %625 : vector<1x32xf32> to vector<32x32xf32>
    %627 = arith.addf %624, %626 : vector<32x32xf32>
    %cst_88 = arith.constant 0.000000e+00 : f32
    %628 = vector.broadcast %cst_88 : f32 to vector<32x32xf32>
    %629 = arith.subf %628, %627 : vector<32x32xf32>
    %630 = math.exp %629 : vector<32x32xf32>
    %cst_89 = arith.constant 1.000000e+00 : f32
    %631 = vector.broadcast %cst_89 : f32 to vector<32x32xf32>
    %632 = arith.addf %631, %630 : vector<32x32xf32>
    %cst_90 = arith.constant 1.000000e+00 : f32
    %633 = vector.broadcast %cst_90 : f32 to vector<32x32xf32>
    %634 = arith.divf %633, %632 : vector<32x32xf32>
    %635 = arith.mulf %627, %634 : vector<32x32xf32>
    %c0_91 = arith.constant 0 : index
    %c512 = arith.constant 512 : index
    %636 = vector.load %arg2[%c0_91, %c512] : memref<32x640xf32, #tpu.memory_space<vmem>>, vector<32x32xf32>
    %cst_92 = arith.constant dense<0.000000e+00> : vector<32x32xf32>
    %637 = tpu.matmul %635, %636, %cst_92 {dimension_numbers = #tpu.dot_dimension_numbers<[1], [0], [0], [1], [0, 0, 1, 1], [], []>} : vector<32x32xf32>, vector<32x32xf32>, vector<32x32xf32> -> vector<32x32xf32>
    %638 = arith.addf %75, %637 : vector<32x32xf32>
    %c10 = arith.constant 10 : index
    %c0_93 = arith.constant 0 : index
    %639 = vector.load %arg1[%c10, %c0_93] : memref<46x128xf32, #tpu.memory_space<vmem>>, vector<1x32xf32>
    %640 = vector.broadcast %639 : vector<1x32xf32> to vector<32x32xf32>
    %641 = arith.addf %638, %640 : vector<32x32xf32>
    %c11 = arith.constant 11 : index
    %c0_94 = arith.constant 0 : index
    %642 = vector.load %arg1[%c11, %c0_94] : memref<46x128xf32, #tpu.memory_space<vmem>>, vector<1x32xf32>
    %c12 = arith.constant 12 : index
    %c0_95 = arith.constant 0 : index
    %643 = vector.load %arg1[%c12, %c0_95] : memref<46x128xf32, #tpu.memory_space<vmem>>, vector<1x32xf32>
    %cst_96 = arith.constant dense<0.000000e+00> : vector<32xf32>
    %644 = vector.multi_reduction <add>, %641, %cst_96 [1] : vector<32x32xf32> to vector<32xf32>
    %645 = vector.shape_cast %644 : vector<32xf32> to vector<32x1xf32>
    %cst_97 = arith.constant 3.200000e+01 : f32
    %646 = vector.broadcast %cst_97 : f32 to vector<32x1xf32>
    %647 = arith.divf %645, %646 : vector<32x1xf32>
    %648 = vector.broadcast %647 : vector<32x1xf32> to vector<32x32xf32>
    %649 = arith.subf %641, %648 : vector<32x32xf32>
    %650 = arith.mulf %649, %649 : vector<32x32xf32>
    %cst_98 = arith.constant dense<0.000000e+00> : vector<32xf32>
    %651 = vector.multi_reduction <add>, %650, %cst_98 [1] : vector<32x32xf32> to vector<32xf32>
    %652 = vector.shape_cast %651 : vector<32xf32> to vector<32x1xf32>
    %cst_99 = arith.constant 3.200000e+01 : f32
    %653 = vector.broadcast %cst_99 : f32 to vector<32x1xf32>
    %654 = arith.divf %652, %653 : vector<32x1xf32>
    %cst_100 = arith.constant 9.99999974E-6 : f32
    %655 = vector.broadcast %cst_100 : f32 to vector<32x1xf32>
    %656 = arith.addf %654, %655 : vector<32x1xf32>
    %657 = math.rsqrt %656 : vector<32x1xf32>
    %658 = vector.broadcast %657 : vector<32x1xf32> to vector<32x32xf32>
    %659 = arith.mulf %649, %658 : vector<32x32xf32>
    %660 = vector.broadcast %642 : vector<1x32xf32> to vector<32x32xf32>
    %661 = arith.mulf %659, %660 : vector<32x32xf32>
    %662 = vector.broadcast %643 : vector<1x32xf32> to vector<32x32xf32>
    %663 = arith.addf %661, %662 : vector<32x32xf32>
    %c0_101 = arith.constant 0 : index
    %c0_102 = arith.constant 0 : index
    %664 = vector.load %arg2[%c0_101, %c0_102] : memref<32x640xf32, #tpu.memory_space<vmem>>, vector<32x128xf32>
    %cst_103 = arith.constant dense<0.000000e+00> : vector<32x128xf32>
    %665 = tpu.matmul %663, %664, %cst_103 {dimension_numbers = #tpu.dot_dimension_numbers<[1], [0], [0], [1], [0, 0, 1, 1], [], []>} : vector<32x32xf32>, vector<32x128xf32>, vector<32x128xf32> -> vector<32x128xf32>
    %c13 = arith.constant 13 : index
    %c0_104 = arith.constant 0 : index
    %666 = vector.load %arg1[%c13, %c0_104] : memref<46x128xf32, #tpu.memory_space<vmem>>, vector<1x128xf32>
    %667 = vector.broadcast %666 : vector<1x128xf32> to vector<32x128xf32>
    %668 = arith.addf %665, %667 : vector<32x128xf32>
    %cst_105 = arith.constant 0.000000e+00 : f32
    %669 = vector.broadcast %cst_105 : f32 to vector<32x128xf32>
    %670 = arith.subf %669, %668 : vector<32x128xf32>
    %671 = math.exp %670 : vector<32x128xf32>
    %cst_106 = arith.constant 1.000000e+00 : f32
    %672 = vector.broadcast %cst_106 : f32 to vector<32x128xf32>
    %673 = arith.addf %672, %671 : vector<32x128xf32>
    %cst_107 = arith.constant 1.000000e+00 : f32
    %674 = vector.broadcast %cst_107 : f32 to vector<32x128xf32>
    %675 = arith.divf %674, %673 : vector<32x128xf32>
    %676 = arith.mulf %668, %675 : vector<32x128xf32>
    %c0_108 = arith.constant 0 : index
    %c0_109 = arith.constant 0 : index
    %677 = vector.load %arg3[%c0_108, %c0_109] : memref<128x32xf32, #tpu.memory_space<vmem>>, vector<128x32xf32>
    %cst_110 = arith.constant dense<0.000000e+00> : vector<32x32xf32>
    %678 = tpu.matmul %676, %677, %cst_110 {dimension_numbers = #tpu.dot_dimension_numbers<[1], [0], [0], [1], [0, 0, 1, 1], [], []>} : vector<32x128xf32>, vector<128x32xf32>, vector<32x32xf32> -> vector<32x32xf32>
    %679 = arith.addf %641, %678 : vector<32x32xf32>
    %c14 = arith.constant 14 : index
    %c0_111 = arith.constant 0 : index
    %680 = vector.load %arg1[%c14, %c0_111] : memref<46x128xf32, #tpu.memory_space<vmem>>, vector<1x32xf32>
    %681 = vector.broadcast %680 : vector<1x32xf32> to vector<32x32xf32>
    %682 = arith.addf %679, %681 : vector<32x32xf32>
    %683 = vector.shape_cast %682 : vector<32x32xf32> to vector<2x16x32xf32>
    %c0_112 = arith.constant 0 : index
    %c0_113 = arith.constant 0 : index
    %c0_114 = arith.constant 0 : index
    %684 = vector.load %arg4[%c0_112, %c0_113, %c0_114] : memref<2x16x32xf32, #tpu.memory_space<vmem>>, vector<2x16x32xf32>
    tpu.vector_store %arg4[%c0_112, %c0_113, %c0_114], %683 {strides = array<i32>} : memref<2x16x32xf32, #tpu.memory_space<vmem>>, vector<2x16x32xf32>,
    return
  }
}

</mosaic_0001>

<llo_original>
// kernel: tpu_custom_call.1
$region0: #{tpu_custom_call.1}
  #allocation0 [shape = 'u32[]', space=smem, size = 0x4, offset = 0x4, fixed_abs, tag = 'smem constant byte address 0x4 - core index']
  #allocation1 [shape = 'u32[144,128]{1,0:T(1,128)}', space=vmem, size = 0x12000, scoped, tag = 'internal scratch']
  %s0 = inlined_call_operand.hbm [shape: f32[2,16,32], index: 0, kind: input, shape index: {}]
  %s1 = inlined_call_operand.hbm [shape: f32[46,128], index: 1, kind: input, shape index: {}]
  %s2 = inlined_call_operand.vmem [shape: f32[32,640], index: 2, kind: input, shape index: {}]
  %s3 = inlined_call_operand.vmem [shape: f32[128,32], index: 3, kind: input, shape index: {}]
  %s4 = inlined_call_operand.hbm [shape: f32[2,16,32], index: 4, kind: output, shape index: {}]
  %s5 = sld [smem:[#allocation0]]
  $region34: #{tpu_custom_call.1} parent=0
    _
  %s7 = ssub.s32 1, %s5
  %s8 = scalar_select 0, %s7, %s5
  $region1: #{tpu_custom_call.1} parent=0
    #allocation2 [shape = 'u8[16384]{0}', space=vmem, size = 0x4000, scoped, tag = 'input window, operand 0, single buffered']
    #allocation3 [shape = 's32[1]{0}', space=sflag, size = 0x4, scoped, tag = 'scoped memory for tpu_custom_call.1']
    #allocation4 [shape = 's32[1]{0}', space=sflag, size = 0x4, scoped, tag = 'scoped memory for tpu_custom_call.1']
    #allocation5 [shape = 'u8[24576]{0}', space=vmem, size = 0x6000, scoped, tag = 'input window, operand 1, single buffered']
    #allocation6 [shape = 's32[1]{0}', space=sflag, size = 0x4, scoped, tag = 'scoped memory for tpu_custom_call.1']
    #allocation7 [shape = 'u8[16384]{0}', space=vmem, size = 0x4000, scoped, tag = 'output window, operand 0, single buffered']
    %9 = vsyncpa [#allocation3], 0
    %10 = vsyncpa [#allocation6], 0
    %11 = vsyncpa [#allocation4], 0
    // Predicated region
    $region2: #{tpu_custom_call.1} parent=1 // pred_check
      _
    $region3: #{tpu_custom_call.1} parent=1 // pred_check_branch
      %13 = sbr.rel (0) target = $region5
    $region4: #{tpu_custom_call.1} parent=1 // pred_region
      %s15 = ssub.s32 512, 512
      %16 = vsyncadd [#allocation3], %s15
      %s17 = sshll.u32 [#allocation2], 4
      %s18 = int_to_ptr.vmem [resolvable:$true] %s17
      %23 = dma.hbm_to_vmem [thread:$0]  %s0, 512, %s18, [#allocation3], 128, 128, 8
    $region5: #{tpu_custom_call.1} parent=1 // pred_fallthru
      _
    // Predicated region
    $region6: #{tpu_custom_call.1} parent=1 // pred_check
      _
    $region7: #{tpu_custom_call.1} parent=1 // pred_check_branch
      %25 = sbr.rel (0) target = $region9
    $region8: #{tpu_custom_call.1} parent=1 // pred_region
      %s27 = ssub.s32 768, 768
      %28 = vsyncadd [#allocation6], %s27
      %s29 = sshll.u32 [#allocation5], 4
      %s30 = int_to_ptr.vmem [resolvable:$true] %s29
      %35 = dma.hbm_to_vmem [thread:$0]  %s1, 768, %s30, [#allocation6], 128, 128, 8
    $region9: #{tpu_custom_call.1} parent=1 // pred_fallthru
      _
    // Predicated region
    $region10: #{tpu_custom_call.1} parent=1 // pred_check
      _
    $region11: #{tpu_custom_call.1} parent=1 // pred_check_branch
      %37 = sbr.rel (0) target = $region13
    $region12: #{tpu_custom_call.1} parent=1 // pred_region
      _
    $region13: #{tpu_custom_call.1} parent=1 // pred_fallthru
      _
    // Predicated region
    $region14: #{tpu_custom_call.1} parent=1 // pred_check
      _
    $region15: #{tpu_custom_call.1} parent=1 // pred_check_branch
      %39 = sbr.rel (0) target = $region17
    $region16: #{tpu_custom_call.1} parent=1 // pred_region
      _
    $region17: #{tpu_custom_call.1} parent=1 // pred_fallthru
      _
    // Predicated region
    $region18: #{tpu_custom_call.1} parent=1 // pred_check
      _
    $region19: #{tpu_custom_call.1} parent=1 // pred_check_branch
      %41 = sbr.rel (0) target = $region21
    $region20: #{tpu_custom_call.1} parent=1 // pred_region
      %42 = dma.done [#allocation3], 512
    $region21: #{tpu_custom_call.1} parent=1 // pred_fallthru
      _
    // Predicated region
    $region22: #{tpu_custom_call.1} parent=1 // pred_check
      _
    $region23: #{tpu_custom_call.1} parent=1 // pred_check_branch
      %44 = sbr.rel (0) target = $region25
    $region24: #{tpu_custom_call.1} parent=1 // pred_region
      %45 = dma.done [#allocation6], 768
    $region25: #{tpu_custom_call.1} parent=1 // pred_fallthru
      _
    %v46 = vld [vmem:[#allocation2] sm:$0xff]
    %v47 = vld [vmem:[#allocation2 + $0x8] sm:$0xff]
    %v48 = vld [vmem:[#allocation2 + $0x10] sm:$0xff]
    %v49 = vld [vmem:[#allocation2 + $0x18] sm:$0xff]
    %v50 = vld [vmem:[#allocation5] sm:$0x1]
    %v51 = vld [vmem:[#allocation5 + $0x1] sm:$0x1]
    %vm52 = vcmask 261120
    %v53 = vsel %vm52, %v46, 0.0
    %54 = vadd.xlane.f32.xlu0 %v53
    %v55 = vpop.xlane.xlu0 %54
    %v56 = vsel %vm52, %v47, 0.0
    %57 = vadd.xlane.f32.xlu0 %v56
    %v58 = vpop.xlane.xlu0 %57
    %v59 = vsel %vm52, %v48, 0.0
    %60 = vadd.xlane.f32.xlu0 %v59
    %v61 = vpop.xlane.xlu0 %60
    %v62 = vsel %vm52, %v49, 0.0
    %63 = vadd.xlane.f32.xlu0 %v62
    %v64 = vpop.xlane.xlu0 %63
    %v65 = vrcp.pop 32.0
    %v66 = vmul.f32 %v55, %v65
    %v67 = vmul.f32 %v58, %v65
    %v68 = vmul.f32 %v61, %v65
    %v69 = vmul.f32 %v64, %v65
    %v70 = vsub.f32 %v46, %v66
    %v71 = vsub.f32 %v47, %v67
    %v72 = vsub.f32 %v48, %v68
    %v73 = vsub.f32 %v49, %v69
    %v74 = vmul.f32 %v70, %v70
    %v75 = vmul.f32 %v71, %v71
    %v76 = vmul.f32 %v72, %v72
    %v77 = vmul.f32 %v73, %v73
    %v78 = vsel %vm52, %v74, 0.0
    %79 = vadd.xlane.f32.xlu0 %v78
    %v80 = vpop.xlane.xlu0 %79
    %v81 = vsel %vm52, %v75, 0.0
    %82 = vadd.xlane.f32.xlu0 %v81
    %v83 = vpop.xlane.xlu0 %82
    %v84 = vsel %vm52, %v76, 0.0
    %85 = vadd.xlane.f32.xlu0 %v84
    %v86 = vpop.xlane.xlu0 %85
    %v87 = vsel %vm52, %v77, 0.0
    %88 = vadd.xlane.f32.xlu0 %v87
    %v89 = vpop.xlane.xlu0 %88
    %v90 = vmul.f32 %v80, %v65
    %v91 = vmul.f32 %v83, %v65
    %v92 = vmul.f32 %v86, %v65
    %v93 = vmul.f32 %v89, %v65
    %v94 = vadd.f32 %v90, 1e-05
    %v95 = vadd.f32 %v91, 1e-05
    %v96 = vadd.f32 %v92, 1e-05
    %v97 = vadd.f32 %v93, 1e-05
    %v98 = vrsqrt.pop %v94
    %v99 = vrsqrt.pop %v95
    %v100 = vrsqrt.pop %v96
    %v101 = vrsqrt.pop %v97
    %v102 = vmul.f32 %v70, %v98
    %v103 = vmul.f32 %v71, %v99
    %v104 = vmul.f32 %v72, %v100
    %v105 = vmul.f32 %v73, %v101
    %v106 = vlaneseq
    %v107 = vshrl.u32 %v106, 7
    %v108 = vsub.s32 0, %v107
    %v109 = vrot.slane %v50, %v108
    %v110 = vmul.f32 %v102, %v109
    %v111 = vmul.f32 %v103, %v109
    %v112 = vmul.f32 %v104, %v109
    %v113 = vmul.f32 %v105, %v109
    %v114 = vlaneseq
    %v115 = vshrl.u32 %v114, 7
    %v116 = vsub.s32 0, %v115
    %v117 = vrot.slane %v51, %v116
    %v118 = vadd.f32 %v110, %v117
    %v119 = vadd.f32 %v111, %v117
    %v120 = vadd.f32 %v112, %v117
    %v121 = vadd.f32 %v113, %v117
    %v122 = vld [vmem:[%s2 + $0x8] sm:$0xff]
    %v123 = vld [vmem:[%s2 + $0x30] sm:$0xff]
    %v124 = vld [vmem:[%s2 + $0x58] sm:$0xff]
    %v125 = vld [vmem:[%s2 + $0x80] sm:$0xff]
    %v126 = vld [vmem:[#allocation5 + $0x2] sm:$0x1]
    %v127 = vlaneseq
    %v128 = vshrl.u32 %v127, 7
    %v129 = vsub.s32 0, %v128
    %v130 = vrot.slane %v126, %v129
    %v132 = vsel %vm52, %v118, 0
    %v135 = vsel %vm52, %v119, 0
    %v138 = vsel %vm52, %v120, 0
    %v141 = vsel %vm52, %v121, 0
    %143 = vmatprep.subr.mxu0 0.0
    %144 = vmatpush1.msra.mxu0 %v122
    %145 = vmatprep.subr.mxu0 0.0
    %146 = vmatpush1.msra.mxu0 %v123
    %147 = vmatprep.subr.mxu0 0.0
    %148 = vmatpush1.msra.mxu0 %v124
    %149 = vmatprep.subr.mxu0 0.0
    %150 = vmatpush1.msra.mxu0 %v125
    %151 = vmatprep.subr.mxu0 0.0
    %152 = vmatpush1.msra.mxu0 0.0
    %153 = vmatprep.subr.mxu0 0.0
    %154 = vmatpush1.msra.mxu0 0.0
    %155 = vmatprep.subr.mxu0 0.0
    %156 = vmatpush1.msra.mxu0 0.0
    %157 = vmatprep.subr.mxu0 0.0
    %158 = vmatpush1.msra.mxu0 0.0
    %159 = vmatprep.subr.mxu0 0.0
    %160 = vmatpush1.msra.mxu0 0.0
    %161 = vmatprep.subr.mxu0 0.0
    %162 = vmatpush1.msra.mxu0 0.0
    %163 = vmatprep.subr.mxu0 0.0
    %164 = vmatpush1.msra.mxu0 0.0
    %165 = vmatprep.subr.mxu0 0.0
    %166 = vmatpush1.msra.mxu0 0.0
    %167 = vmatprep.subr.mxu0 0.0
    %168 = vmatpush1.msra.mxu0 0.0
    %169 = vmatprep.subr.mxu0 0.0
    %170 = vmatpush1.msra.mxu0 0.0
    %171 = vmatprep.subr.mxu0 0.0
    %172 = vmatpush1.msra.mxu0 0.0
    %173 = vmatprep.subr.mxu0 0.0
    %174 = vmatpush1.msra.mxu0 0.0
    %175 = vmatprep.subr.mxu0 0.0
    %176 = vmatpush1.msra.mxu0 0.0
    %177 = vmatprep.subr.mxu0 0.0
    %178 = vmatpush1.msra.mxu0 0.0
    %179 = vmatprep.subr.mxu0 0.0
    %180 = vmatpush1.msra.mxu0 0.0
    %181 = vmatprep.subr.mxu0 0.0
    %182 = vmatpush1.msra.mxu0 0.0
    %183 = vmatprep.subr.mxu0 0.0
    %184 = vmatpush1.msra.mxu0 0.0
    %185 = vmatprep.subr.mxu0 0.0
    %186 = vmatpush1.msra.mxu0 0.0
    %187 = vmatprep.subr.mxu0 0.0
    %188 = vmatpush1.msra.mxu0 0.0
    %189 = vmatprep.subr.mxu0 0.0
    %190 = vmatpush1.msra.mxu0 0.0
    %191 = vmatprep.subr.mxu0 0.0
    %192 = vmatpush1.msra.mxu0 0.0
    %193 = vmatprep.subr.mxu0 0.0
    %194 = vmatpush1.msra.mxu0 0.0
    %195 = vmatprep.subr.mxu0 0.0
    %196 = vmatpush1.msra.mxu0 0.0
    %197 = vmatprep.subr.mxu0 0.0
    %198 = vmatpush1.msra.mxu0 0.0
    %199 = vmatprep.subr.mxu0 0.0
    %200 = vmatpush1.msra.mxu0 0.0
    %201 = vmatprep.subr.mxu0 0.0
    %202 = vmatpush1.msra.mxu0 0.0
    %203 = vmatprep.subr.mxu0 0.0
    %204 = vmatpush1.msra.mxu0 0.0
    %205 = vmatprep.subr.mxu0 0.0
    %206 = vmatpush1.msra.mxu0 0.0
    %207 = vmatprep.mubr.f32.mxu0 0.0
    %208 = vmatmul.mubr.f32.gmra.mrb[0].mxu0 %v132
    %v209 = vpop.f32.mrb[0].mxu0
    %v210 = vadd.f32 %v130, %v209
    %v211 = vpop.f32.mrb[0].mxu0
    %212 = vmatprep.mubr.f32.mxu0 0.0
    %213 = vmatmul.mubr.f32.gmra.mrb[0].mxu0 %v135
    %v214 = vpop.f32.mrb[0].mxu0
    %v215 = vadd.f32 %v130, %v214
    %v216 = vpop.f32.mrb[0].mxu0
    %217 = vmatprep.mubr.f32.mxu0 0.0
    %218 = vmatmul.mubr.f32.gmra.mrb[0].mxu0 %v138
    %v219 = vpop.f32.mrb[0].mxu0
    %v220 = vadd.f32 %v130, %v219
    %v221 = vpop.f32.mrb[0].mxu0
    %222 = vmatprep.mubr.f32.mxu0 0.0
    %223 = vmatmul.mubr.f32.gmra.mrb[0].mxu0 %v141
    %v224 = vpop.f32.mrb[0].mxu0
    %v225 = vadd.f32 %v130, %v224
    %v226 = vpop.f32.mrb[0].mxu0
    %227 = vdwg.mxu0
    %v228 = vmul.f32 %v210, 0.35355338
    %v229 = vmul.f32 %v215, 0.35355338
    %v230 = vmul.f32 %v220, 0.35355338
    %v231 = vmul.f32 %v225, 0.35355338
    %236 = vrot.lane.b32.xlu0 %v228, 120
    %v237 = vpop.permute.xlu0 %236
    %238 = vrot.lane.b32.xlu0 %v229, 120
    %v239 = vpop.permute.xlu0 %238
    %240 = vrot.lane.b32.xlu0 %v230, 120
    %v241 = vpop.permute.xlu0 %240
    %242 = vrot.lane.b32.xlu0 %v231, 120
    %v243 = vpop.permute.xlu0 %242
    %244 = vrot.lane.b32.xlu0 %v228, 112
    %v245 = vpop.permute.xlu0 %244
    %246 = vrot.lane.b32.xlu0 %v229, 112
    %v247 = vpop.permute.xlu0 %246
    %248 = vrot.lane.b32.xlu0 %v230, 112
    %v249 = vpop.permute.xlu0 %248
    %250 = vrot.lane.b32.xlu0 %v231, 112
    %v251 = vpop.permute.xlu0 %250
    %252 = vrot.lane.b32.xlu0 %v228, 104
    %v253 = vpop.permute.xlu0 %252
    %254 = vrot.lane.b32.xlu0 %v229, 104
    %v255 = vpop.permute.xlu0 %254
    %256 = vrot.lane.b32.xlu0 %v230, 104
    %v257 = vpop.permute.xlu0 %256
    %258 = vrot.lane.b32.xlu0 %v231, 104
    %v259 = vpop.permute.xlu0 %258
    %264 = vrot.lane.b32.xlu0 %v210, 120
    %v265 = vpop.permute.xlu0 %264
    %266 = vrot.lane.b32.xlu0 %v215, 120
    %v267 = vpop.permute.xlu0 %266
    %268 = vrot.lane.b32.xlu0 %v220, 120
    %v269 = vpop.permute.xlu0 %268
    %270 = vrot.lane.b32.xlu0 %v225, 120
    %v271 = vpop.permute.xlu0 %270
    %272 = vrot.lane.b32.xlu0 %v210, 112
    %v273 = vpop.permute.xlu0 %272
    %274 = vrot.lane.b32.xlu0 %v215, 112
    %v275 = vpop.permute.xlu0 %274
    %276 = vrot.lane.b32.xlu0 %v220, 112
    %v277 = vpop.permute.xlu0 %276
    %278 = vrot.lane.b32.xlu0 %v225, 112
    %v279 = vpop.permute.xlu0 %278
    %280 = vrot.lane.b32.xlu0 %v210, 104
    %v281 = vpop.permute.xlu0 %280
    %282 = vrot.lane.b32.xlu0 %v215, 104
    %v283 = vpop.permute.xlu0 %282
    %284 = vrot.lane.b32.xlu0 %v220, 104
    %v285 = vpop.permute.xlu0 %284
    %286 = vrot.lane.b32.xlu0 %v225, 104
    %v287 = vpop.permute.xlu0 %286
    %288 = vrot.lane.b32.xlu0 %v210, 96
    %v289 = vpop.permute.xlu0 %288
    %290 = vrot.lane.b32.xlu0 %v215, 96
    %v291 = vpop.permute.xlu0 %290
    %vm292 = vcmask 64512
    %v293 = vsel %vm292, %v228, 0
    %v295 = vsel %vm292, %v229, 0
    %v297 = vsel %vm292, %v289, 0
    %v299 = vsel %vm292, %v291, 0
    %301 = vmatprep.subr.mxu0 0.0
    %302 = vmatpush1.xpose.msra.mxu0 %v297
    %303 = vmatprep.subr.mxu0 0.0
    %304 = vmatpush1.xpose.msra.mxu0 %v299
    %305 = vmatprep.subr.mxu0 0.0
    %306 = vmatpush1.xpose.msra.mxu0 0.0
    %307 = vmatprep.subr.mxu0 0.0
    %308 = vmatpush1.xpose.msra.mxu0 0.0
    %309 = vmatprep.subr.mxu0 0.0
    %310 = vmatpush1.xpose.msra.mxu0 0.0
    %311 = vmatprep.subr.mxu0 0.0
    %312 = vmatpush1.xpose.msra.mxu0 0.0
    %313 = vmatprep.subr.mxu0 0.0
    %314 = vmatpush1.xpose.msra.mxu0 0.0
    %315 = vmatprep.subr.mxu0 0.0
    %316 = vmatpush1.xpose.msra.mxu0 0.0
    %317 = vmatprep.subr.mxu0 0.0
    %318 = vmatpush1.xpose.msra.mxu0 0.0
    %319 = vmatprep.subr.mxu0 0.0
    %320 = vmatpush1.xpose.msra.mxu0 0.0
    %321 = vmatprep.subr.mxu0 0.0
    %322 = vmatpush1.xpose.msra.mxu0 0.0
    %323 = vmatprep.subr.mxu0 0.0
    %324 = vmatpush1.xpose.msra.mxu0 0.0
    %325 = vmatprep.subr.mxu0 0.0
    %326 = vmatpush1.xpose.msra.mxu0 0.0
    %327 = vmatprep.subr.mxu0 0.0
    %328 = vmatpush1.xpose.msra.mxu0 0.0
    %329 = vmatprep.subr.mxu0 0.0
    %330 = vmatpush1.xpose.msra.mxu0 0.0
    %331 = vmatprep.subr.mxu0 0.0
    %332 = vmatpush1.xpose.msra.mxu0 0.0
    %333 = vmatprep.subr.mxu0 0.0
    %334 = vmatpush1.xpose.msra.mxu0 0.0
    %335 = vmatprep.subr.mxu0 0.0
    %336 = vmatpush1.xpose.msra.mxu0 0.0
    %337 = vmatprep.subr.mxu0 0.0
    %338 = vmatpush1.xpose.msra.mxu0 0.0
    %339 = vmatprep.subr.mxu0 0.0
    %340 = vmatpush1.xpose.msra.mxu0 0.0
    %341 = vmatprep.subr.mxu0 0.0
    %342 = vmatpush1.xpose.msra.mxu0 0.0
    %343 = vmatprep.subr.mxu0 0.0
    %344 = vmatpush1.xpose.msra.mxu0 0.0
    %345 = vmatprep.subr.mxu0 0.0
    %346 = vmatpush1.xpose.msra.mxu0 0.0
    %347 = vmatprep.subr.mxu0 0.0
    %348 = vmatpush1.xpose.msra.mxu0 0.0
    %349 = vmatprep.subr.mxu0 0.0
    %350 = vmatpush1.xpose.msra.mxu0 0.0
    %351 = vmatprep.subr.mxu0 0.0
    %352 = vmatpush1.xpose.msra.mxu0 0.0
    %353 = vmatprep.subr.mxu0 0.0
    %354 = vmatpush1.xpose.msra.mxu0 0.0
    %355 = vmatprep.subr.mxu0 0.0
    %356 = vmatpush1.xpose.msra.mxu0 0.0
    %357 = vmatprep.subr.mxu0 0.0
    %358 = vmatpush1.xpose.msra.mxu0 0.0
    %359 = vmatprep.subr.mxu0 0.0
    %360 = vmatpush1.xpose.msra.mxu0 0.0
    %361 = vmatprep.subr.mxu0 0.0
    %362 = vmatpush1.xpose.msra.mxu0 0.0
    %363 = vmatprep.subr.mxu0 0.0
    %364 = vmatpush1.xpose.msra.mxu0 0.0
    %365 = vmatprep.mubr.f32.mxu0 0.0
    %366 = vmatmul.mubr.f32.gmra.mrb[0].mxu0 %v293
    %v367 = vpop.f32.mrb[0].mxu0
    %v368 = vadd.f32 0.0, %v367
    %v369 = vpop.f32.mrb[0].mxu0
    %370 = vmatprep.mubr.f32.mxu0 0.0
    %371 = vmatmul.mubr.f32.gmra.mrb[0].mxu0 %v295
    %v372 = vpop.f32.mrb[0].mxu0
    %v373 = vadd.f32 0.0, %v372
    %v374 = vpop.f32.mrb[0].mxu0
    %375 = vdwg.mxu0
    %376 = vrot.lane.b32.xlu0 %v220, 96
    %v377 = vpop.permute.xlu0 %376
    %378 = vrot.lane.b32.xlu0 %v225, 96
    %v379 = vpop.permute.xlu0 %378
    %v380 = vsel %vm292, %v230, 0
    %v382 = vsel %vm292, %v231, 0
    %v384 = vsel %vm292, %v377, 0
    %v386 = vsel %vm292, %v379, 0
    %388 = vmatprep.subr.mxu0 0.0
    %389 = vmatpush1.xpose.msra.mxu0 %v384
    %390 = vmatprep.subr.mxu0 0.0
    %391 = vmatpush1.xpose.msra.mxu0 %v386
    %392 = vmatprep.subr.mxu0 0.0
    %393 = vmatpush1.xpose.msra.mxu0 0.0
    %394 = vmatprep.subr.mxu0 0.0
    %395 = vmatpush1.xpose.msra.mxu0 0.0
    %396 = vmatprep.subr.mxu0 0.0
    %397 = vmatpush1.xpose.msra.mxu0 0.0
    %398 = vmatprep.subr.mxu0 0.0
    %399 = vmatpush1.xpose.msra.mxu0 0.0
    %400 = vmatprep.subr.mxu0 0.0
    %401 = vmatpush1.xpose.msra.mxu0 0.0
    %402 = vmatprep.subr.mxu0 0.0
    %403 = vmatpush1.xpose.msra.mxu0 0.0
    %404 = vmatprep.subr.mxu0 0.0
    %405 = vmatpush1.xpose.msra.mxu0 0.0
    %406 = vmatprep.subr.mxu0 0.0
    %407 = vmatpush1.xpose.msra.mxu0 0.0
    %408 = vmatprep.subr.mxu0 0.0
    %409 = vmatpush1.xpose.msra.mxu0 0.0
    %410 = vmatprep.subr.mxu0 0.0
    %411 = vmatpush1.xpose.msra.mxu0 0.0
    %412 = vmatprep.subr.mxu0 0.0
    %413 = vmatpush1.xpose.msra.mxu0 0.0
    %414 = vmatprep.subr.mxu0 0.0
    %415 = vmatpush1.xpose.msra.mxu0 0.0
    %416 = vmatprep.subr.mxu0 0.0
    %417 = vmatpush1.xpose.msra.mxu0 0.0
    %418 = vmatprep.subr.mxu0 0.0
    %419 = vmatpush1.xpose.msra.mxu0 0.0
    %420 = vmatprep.subr.mxu0 0.0
    %421 = vmatpush1.xpose.msra.mxu0 0.0
    %422 = vmatprep.subr.mxu0 0.0
    %423 = vmatpush1.xpose.msra.mxu0 0.0
    %424 = vmatprep.subr.mxu0 0.0
    %425 = vmatpush1.xpose.msra.mxu0 0.0
    %426 = vmatprep.subr.mxu0 0.0
    %427 = vmatpush1.xpose.msra.mxu0 0.0
    %428 = vmatprep.subr.mxu0 0.0
    %429 = vmatpush1.xpose.msra.mxu0 0.0
    %430 = vmatprep.subr.mxu0 0.0
    %431 = vmatpush1.xpose.msra.mxu0 0.0
    %432 = vmatprep.subr.mxu0 0.0
    %433 = vmatpush1.xpose.msra.mxu0 0.0
    %434 = vmatprep.subr.mxu0 0.0
    %435 = vmatpush1.xpose.msra.mxu0 0.0
    %436 = vmatprep.subr.mxu0 0.0
    %437 = vmatpush1.xpose.msra.mxu0 0.0
    %438 = vmatprep.subr.mxu0 0.0
    %439 = vmatpush1.xpose.msra.mxu0 0.0
    %440 = vmatprep.subr.mxu0 0.0
    %441 = vmatpush1.xpose.msra.mxu0 0.0
    %442 = vmatprep.subr.mxu0 0.0
    %443 = vmatpush1.xpose.msra.mxu0 0.0
    %444 = vmatprep.subr.mxu0 0.0
    %445 = vmatpush1.xpose.msra.mxu0 0.0
    %446 = vmatprep.subr.mxu0 0.0
    %447 = vmatpush1.xpose.msra.mxu0 0.0
    %448 = vmatprep.subr.mxu0 0.0
    %449 = vmatpush1.xpose.msra.mxu0 0.0
    %450 = vmatprep.subr.mxu0 0.0
    %451 = vmatpush1.xpose.msra.mxu0 0.0
    %452 = vmatprep.mubr.f32.mxu0 0.0
    %453 = vmatmul.mubr.f32.gmra.mrb[0].mxu0 %v380
    %v454 = vpop.f32.mrb[0].mxu0
    %v455 = vadd.f32 0.0, %v454
    %v456 = vpop.f32.mrb[0].mxu0
    %457 = vmatprep.mubr.f32.mxu0 0.0
    %458 = vmatmul.mubr.f32.gmra.mrb[0].mxu0 %v382
    %v459 = vpop.f32.mrb[0].mxu0
    %v460 = vadd.f32 0.0, %v459
    %v461 = vpop.f32.mrb[0].mxu0
    %462 = vdwg.mxu0
    %463 = vrot.lane.b32.xlu0 %v265, 96
    %v464 = vpop.permute.xlu0 %463
    %465 = vrot.lane.b32.xlu0 %v267, 96
    %v466 = vpop.permute.xlu0 %465
    %v467 = vsel %vm292, %v237, 0
    %v469 = vsel %vm292, %v239, 0
    %v471 = vsel %vm292, %v464, 0
    %v473 = vsel %vm292, %v466, 0
    %475 = vmatprep.subr.mxu0 0.0
    %476 = vmatpush1.xpose.msra.mxu0 %v471
    %477 = vmatprep.subr.mxu0 0.0
    %478 = vmatpush1.xpose.msra.mxu0 %v473
    %479 = vmatprep.subr.mxu0 0.0
    %480 = vmatpush1.xpose.msra.mxu0 0.0
    %481 = vmatprep.subr.mxu0 0.0
    %482 = vmatpush1.xpose.msra.mxu0 0.0
    %483 = vmatprep.subr.mxu0 0.0
    %484 = vmatpush1.xpose.msra.mxu0 0.0
    %485 = vmatprep.subr.mxu0 0.0
    %486 = vmatpush1.xpose.msra.mxu0 0.0
    %487 = vmatprep.subr.mxu0 0.0
    %488 = vmatpush1.xpose.msra.mxu0 0.0
    %489 = vmatprep.subr.mxu0 0.0
    %490 = vmatpush1.xpose.msra.mxu0 0.0
    %491 = vmatprep.subr.mxu0 0.0
    %492 = vmatpush1.xpose.msra.mxu0 0.0
    %493 = vmatprep.subr.mxu0 0.0
    %494 = vmatpush1.xpose.msra.mxu0 0.0
    %495 = vmatprep.subr.mxu0 0.0
    %496 = vmatpush1.xpose.msra.mxu0 0.0
    %497 = vmatprep.subr.mxu0 0.0
    %498 = vmatpush1.xpose.msra.mxu0 0.0
    %499 = vmatprep.subr.mxu0 0.0
    %500 = vmatpush1.xpose.msra.mxu0 0.0
    %501 = vmatprep.subr.mxu0 0.0
    %502 = vmatpush1.xpose.msra.mxu0 0.0
    %503 = vmatprep.subr.mxu0 0.0
    %504 = vmatpush1.xpose.msra.mxu0 0.0
    %505 = vmatprep.subr.mxu0 0.0
    %506 = vmatpush1.xpose.msra.mxu0 0.0
    %507 = vmatprep.subr.mxu0 0.0
    %508 = vmatpush1.xpose.msra.mxu0 0.0
    %509 = vmatprep.subr.mxu0 0.0
    %510 = vmatpush1.xpose.msra.mxu0 0.0
    %511 = vmatprep.subr.mxu0 0.0
    %512 = vmatpush1.xpose.msra.mxu0 0.0
    %513 = vmatprep.subr.mxu0 0.0
    %514 = vmatpush1.xpose.msra.mxu0 0.0
    %515 = vmatprep.subr.mxu0 0.0
    %516 = vmatpush1.xpose.msra.mxu0 0.0
    %517 = vmatprep.subr.mxu0 0.0
    %518 = vmatpush1.xpose.msra.mxu0 0.0
    %519 = vmatprep.subr.mxu0 0.0
    %520 = vmatpush1.xpose.msra.mxu0 0.0
    %521 = vmatprep.subr.mxu0 0.0
    %522 = vmatpush1.xpose.msra.mxu0 0.0
    %523 = vmatprep.subr.mxu0 0.0
    %524 = vmatpush1.xpose.msra.mxu0 0.0
    %525 = vmatprep.subr.mxu0 0.0
    %526 = vmatpush1.xpose.msra.mxu0 0.0
    %527 = vmatprep.subr.mxu0 0.0
    %528 = vmatpush1.xpose.msra.mxu0 0.0
    %529 = vmatprep.subr.mxu0 0.0
    %530 = vmatpush1.xpose.msra.mxu0 0.0
    %531 = vmatprep.subr.mxu0 0.0
    %532 = vmatpush1.xpose.msra.mxu0 0.0
    %533 = vmatprep.subr.mxu0 0.0
    %534 = vmatpush1.xpose.msra.mxu0 0.0
    %535 = vmatprep.subr.mxu0 0.0
    %536 = vmatpush1.xpose.msra.mxu0 0.0
    %537 = vmatprep.subr.mxu0 0.0
    %538 = vmatpush1.xpose.msra.mxu0 0.0
    %539 = vmatprep.mubr.f32.mxu0 0.0
    %540 = vmatmul.mubr.f32.gmra.mrb[0].mxu0 %v467
    %v541 = vpop.f32.mrb[0].mxu0
    %v542 = vadd.f32 0.0, %v541
    %v543 = vpop.f32.mrb[0].mxu0
    %544 = vmatprep.mubr.f32.mxu0 0.0
    %545 = vmatmul.mubr.f32.gmra.mrb[0].mxu0 %v469
    %v546 = vpop.f32.mrb[0].mxu0
    %v547 = vadd.f32 0.0, %v546
    %v548 = vpop.f32.mrb[0].mxu0
    %549 = vdwg.mxu0
    %550 = vrot.lane.b32.xlu0 %v269, 96
    %v551 = vpop.permute.xlu0 %550
    %552 = vrot.lane.b32.xlu0 %v271, 96
    %v553 = vpop.permute.xlu0 %552
    %v554 = vsel %vm292, %v241, 0
    %v556 = vsel %vm292, %v243, 0
    %v558 = vsel %vm292, %v551, 0
    %v560 = vsel %vm292, %v553, 0
    %562 = vmatprep.subr.mxu0 0.0
    %563 = vmatpush1.xpose.msra.mxu0 %v558
    %564 = vmatprep.subr.mxu0 0.0
    %565 = vmatpush1.xpose.msra.mxu0 %v560
    %566 = vmatprep.subr.mxu0 0.0
    %567 = vmatpush1.xpose.msra.mxu0 0.0
    %568 = vmatprep.subr.mxu0 0.0
    %569 = vmatpush1.xpose.msra.mxu0 0.0
    %570 = vmatprep.subr.mxu0 0.0
    %571 = vmatpush1.xpose.msra.mxu0 0.0
    %572 = vmatprep.subr.mxu0 0.0
    %573 = vmatpush1.xpose.msra.mxu0 0.0
    %574 = vmatprep.subr.mxu0 0.0
    %575 = vmatpush1.xpose.msra.mxu0 0.0
    %576 = vmatprep.subr.mxu0 0.0
    %577 = vmatpush1.xpose.msra.mxu0 0.0
    %578 = vmatprep.subr.mxu0 0.0
    %579 = vmatpush1.xpose.msra.mxu0 0.0
    %580 = vmatprep.subr.mxu0 0.0
    %581 = vmatpush1.xpose.msra.mxu0 0.0
    %582 = vmatprep.subr.mxu0 0.0
    %583 = vmatpush1.xpose.msra.mxu0 0.0
    %584 = vmatprep.subr.mxu0 0.0
    %585 = vmatpush1.xpose.msra.mxu0 0.0
    %586 = vmatprep.subr.mxu0 0.0
    %587 = vmatpush1.xpose.msra.mxu0 0.0
    %588 = vmatprep.subr.mxu0 0.0
    %589 = vmatpush1.xpose.msra.mxu0 0.0
    %590 = vmatprep.subr.mxu0 0.0
    %591 = vmatpush1.xpose.msra.mxu0 0.0
    %592 = vmatprep.subr.mxu0 0.0
    %593 = vmatpush1.xpose.msra.mxu0 0.0
    %594 = vmatprep.subr.mxu0 0.0
    %595 = vmatpush1.xpose.msra.mxu0 0.0
    %596 = vmatprep.subr.mxu0 0.0
    %597 = vmatpush1.xpose.msra.mxu0 0.0
    %598 = vmatprep.subr.mxu0 0.0
    %599 = vmatpush1.xpose.msra.mxu0 0.0
    %600 = vmatprep.subr.mxu0 0.0
    %601 = vmatpush1.xpose.msra.mxu0 0.0
    %602 = vmatprep.subr.mxu0 0.0
    %603 = vmatpush1.xpose.msra.mxu0 0.0
    %604 = vmatprep.subr.mxu0 0.0
    %605 = vmatpush1.xpose.msra.mxu0 0.0
    %606 = vmatprep.subr.mxu0 0.0
    %607 = vmatpush1.xpose.msra.mxu0 0.0
    %608 = vmatprep.subr.mxu0 0.0
    %609 = vmatpush1.xpose.msra.mxu0 0.0
    %610 = vmatprep.subr.mxu0 0.0
    %611 = vmatpush1.xpose.msra.mxu0 0.0
    %612 = vmatprep.subr.mxu0 0.0
    %613 = vmatpush1.xpose.msra.mxu0 0.0
    %614 = vmatprep.subr.mxu0 0.0
    %615 = vmatpush1.xpose.msra.mxu0 0.0
    %616 = vmatprep.subr.mxu0 0.0
    %617 = vmatpush1.xpose.msra.mxu0 0.0
    %618 = vmatprep.subr.mxu0 0.0
    %619 = vmatpush1.xpose.msra.mxu0 0.0
    %620 = vmatprep.subr.mxu0 0.0
    %621 = vmatpush1.xpose.msra.mxu0 0.0
    %622 = vmatprep.subr.mxu0 0.0
    %623 = vmatpush1.xpose.msra.mxu0 0.0
    %624 = vmatprep.subr.mxu0 0.0
    %625 = vmatpush1.xpose.msra.mxu0 0.0
    %626 = vmatprep.mubr.f32.mxu0 0.0
    %627 = vmatmul.mubr.f32.gmra.mrb[0].mxu0 %v554
    %v628 = vpop.f32.mrb[0].mxu0
    %v629 = vadd.f32 0.0, %v628
    %v630 = vpop.f32.mrb[0].mxu0
    %631 = vmatprep.mubr.f32.mxu0 0.0
    %632 = vmatmul.mubr.f32.gmra.mrb[0].mxu0 %v556
    %v633 = vpop.f32.mrb[0].mxu0
    %v634 = vadd.f32 0.0, %v633
    %v635 = vpop.f32.mrb[0].mxu0
    %636 = vdwg.mxu0
    %637 = vrot.lane.b32.xlu0 %v273, 96
    %v638 = vpop.permute.xlu0 %637
    %639 = vrot.lane.b32.xlu0 %v275, 96
    %v640 = vpop.permute.xlu0 %639
    %v641 = vsel %vm292, %v245, 0
    %v643 = vsel %vm292, %v247, 0
    %v645 = vsel %vm292, %v638, 0
    %v647 = vsel %vm292, %v640, 0
    %649 = vmatprep.subr.mxu0 0.0
    %650 = vmatpush1.xpose.msra.mxu0 %v645
    %651 = vmatprep.subr.mxu0 0.0
    %652 = vmatpush1.xpose.msra.mxu0 %v647
    %653 = vmatprep.subr.mxu0 0.0
    %654 = vmatpush1.xpose.msra.mxu0 0.0
    %655 = vmatprep.subr.mxu0 0.0
    %656 = vmatpush1.xpose.msra.mxu0 0.0
    %657 = vmatprep.subr.mxu0 0.0
    %658 = vmatpush1.xpose.msra.mxu0 0.0
    %659 = vmatprep.subr.mxu0 0.0
    %660 = vmatpush1.xpose.msra.mxu0 0.0
    %661 = vmatprep.subr.mxu0 0.0
    %662 = vmatpush1.xpose.msra.mxu0 0.0
    %663 = vmatprep.subr.mxu0 0.0
    %664 = vmatpush1.xpose.msra.mxu0 0.0
    %665 = vmatprep.subr.mxu0 0.0
    %666 = vmatpush1.xpose.msra.mxu0 0.0
    %667 = vmatprep.subr.mxu0 0.0
    %668 = vmatpush1.xpose.msra.mxu0 0.0
    %669 = vmatprep.subr.mxu0 0.0
    %670 = vmatpush1.xpose.msra.mxu0 0.0
    %671 = vmatprep.subr.mxu0 0.0
    %672 = vmatpush1.xpose.msra.mxu0 0.0
    %673 = vmatprep.subr.mxu0 0.0
    %674 = vmatpush1.xpose.msra.mxu0 0.0
    %675 = vmatprep.subr.mxu0 0.0
    %676 = vmatpush1.xpose.msra.mxu0 0.0
    %677 = vmatprep.subr.mxu0 0.0
    %678 = vmatpush1.xpose.msra.mxu0 0.0
    %679 = vmatprep.subr.mxu0 0.0
    %680 = vmatpush1.xpose.msra.mxu0 0.0
    %681 = vmatprep.subr.mxu0 0.0
    %682 = vmatpush1.xpose.msra.mxu0 0.0
    %683 = vmatprep.subr.mxu0 0.0
    %684 = vmatpush1.xpose.msra.mxu0 0.0
    %685 = vmatprep.subr.mxu0 0.0
    %686 = vmatpush1.xpose.msra.mxu0 0.0
    %687 = vmatprep.subr.mxu0 0.0
    %688 = vmatpush1.xpose.msra.mxu0 0.0
    %689 = vmatprep.subr.mxu0 0.0
    %690 = vmatpush1.xpose.msra.mxu0 0.0
    %691 = vmatprep.subr.mxu0 0.0
    %692 = vmatpush1.xpose.msra.mxu0 0.0
    %693 = vmatprep.subr.mxu0 0.0
    %694 = vmatpush1.xpose.msra.mxu0 0.0
    %695 = vmatprep.subr.mxu0 0.0
    %696 = vmatpush1.xpose.msra.mxu0 0.0
    %697 = vmatprep.subr.mxu0 0.0
    %698 = vmatpush1.xpose.msra.mxu0 0.0
    %699 = vmatprep.subr.mxu0 0.0
    %700 = vmatpush1.xpose.msra.mxu0 0.0
    %701 = vmatprep.subr.mxu0 0.0
    %702 = vmatpush1.xpose.msra.mxu0 0.0
    %703 = vmatprep.subr.mxu0 0.0
    %704 = vmatpush1.xpose.msra.mxu0 0.0
    %705 = vmatprep.subr.mxu0 0.0
    %706 = vmatpush1.xpose.msra.mxu0 0.0
    %707 = vmatprep.subr.mxu0 0.0
    %708 = vmatpush1.xpose.msra.mxu0 0.0
    %709 = vmatprep.subr.mxu0 0.0
    %710 = vmatpush1.xpose.msra.mxu0 0.0
    %711 = vmatprep.subr.mxu0 0.0
    %712 = vmatpush1.xpose.msra.mxu0 0.0
    %713 = vmatprep.mubr.f32.mxu0 0.0
    %714 = vmatmul.mubr.f32.gmra.mrb[0].mxu0 %v641
    %v715 = vpop.f32.mrb[0].mxu0
    %v716 = vadd.f32 0.0, %v715
    %v717 = vpop.f32.mrb[0].mxu0
    %718 = vmatprep.mubr.f32.mxu0 0.0
    %719 = vmatmul.mubr.f32.gmra.mrb[0].mxu0 %v643
    %v720 = vpop.f32.mrb[0].mxu0
    %v721 = vadd.f32 0.0, %v720
    %v722 = vpop.f32.mrb[0].mxu0
    %723 = vdwg.mxu0
    %724 = vrot.lane.b32.xlu0 %v277, 96
    %v725 = vpop.permute.xlu0 %724
    %726 = vrot.lane.b32.xlu0 %v279, 96
    %v727 = vpop.permute.xlu0 %726
    %v728 = vsel %vm292, %v249, 0
    %v730 = vsel %vm292, %v251, 0
    %v732 = vsel %vm292, %v725, 0
    %v734 = vsel %vm292, %v727, 0
    %736 = vmatprep.subr.mxu0 0.0
    %737 = vmatpush1.xpose.msra.mxu0 %v732
    %738 = vmatprep.subr.mxu0 0.0
    %739 = vmatpush1.xpose.msra.mxu0 %v734
    %740 = vmatprep.subr.mxu0 0.0
    %741 = vmatpush1.xpose.msra.mxu0 0.0
    %742 = vmatprep.subr.mxu0 0.0
    %743 = vmatpush1.xpose.msra.mxu0 0.0
    %744 = vmatprep.subr.mxu0 0.0
    %745 = vmatpush1.xpose.msra.mxu0 0.0
    %746 = vmatprep.subr.mxu0 0.0
    %747 = vmatpush1.xpose.msra.mxu0 0.0
    %748 = vmatprep.subr.mxu0 0.0
    %749 = vmatpush1.xpose.msra.mxu0 0.0
    %750 = vmatprep.subr.mxu0 0.0
    %751 = vmatpush1.xpose.msra.mxu0 0.0
    %752 = vmatprep.subr.mxu0 0.0
    %753 = vmatpush1.xpose.msra.mxu0 0.0
    %754 = vmatprep.subr.mxu0 0.0
    %755 = vmatpush1.xpose.msra.mxu0 0.0
    %756 = vmatprep.subr.mxu0 0.0
    %757 = vmatpush1.xpose.msra.mxu0 0.0
    %758 = vmatprep.subr.mxu0 0.0
    %759 = vmatpush1.xpose.msra.mxu0 0.0
    %760 = vmatprep.subr.mxu0 0.0
    %761 = vmatpush1.xpose.msra.mxu0 0.0
    %762 = vmatprep.subr.mxu0 0.0
    %763 = vmatpush1.xpose.msra.mxu0 0.0
    %764 = vmatprep.subr.mxu0 0.0
    %765 = vmatpush1.xpose.msra.mxu0 0.0
    %766 = vmatprep.subr.mxu0 0.0
    %767 = vmatpush1.xpose.msra.mxu0 0.0
    %768 = vmatprep.subr.mxu0 0.0
    %769 = vmatpush1.xpose.msra.mxu0 0.0
    %770 = vmatprep.subr.mxu0 0.0
    %771 = vmatpush1.xpose.msra.mxu0 0.0
    %772 = vmatprep.subr.mxu0 0.0
    %773 = vmatpush1.xpose.msra.mxu0 0.0
    %774 = vmatprep.subr.mxu0 0.0
    %775 = vmatpush1.xpose.msra.mxu0 0.0
    %776 = vmatprep.subr.mxu0 0.0
    %777 = vmatpush1.xpose.msra.mxu0 0.0
    %778 = vmatprep.subr.mxu0 0.0
    %779 = vmatpush1.xpose.msra.mxu0 0.0
    %780 = vmatprep.subr.mxu0 0.0
    %781 = vmatpush1.xpose.msra.mxu0 0.0
    %782 = vmatprep.subr.mxu0 0.0
    %783 = vmatpush1.xpose.msra.mxu0 0.0
    %784 = vmatprep.subr.mxu0 0.0
    %785 = vmatpush1.xpose.msra.mxu0 0.0
    %786 = vmatprep.subr.mxu0 0.0
    %787 = vmatpush1.xpose.msra.mxu0 0.0
    %788 = vmatprep.subr.mxu0 0.0
    %789 = vmatpush1.xpose.msra.mxu0 0.0
    %790 = vmatprep.subr.mxu0 0.0
    %791 = vmatpush1.xpose.msra.mxu0 0.0
    %792 = vmatprep.subr.mxu0 0.0
    %793 = vmatpush1.xpose.msra.mxu0 0.0
    %794 = vmatprep.subr.mxu0 0.0
    %795 = vmatpush1.xpose.msra.mxu0 0.0
    %796 = vmatprep.subr.mxu0 0.0
    %797 = vmatpush1.xpose.msra.mxu0 0.0
    %798 = vmatprep.subr.mxu0 0.0
    %799 = vmatpush1.xpose.msra.mxu0 0.0
    %800 = vmatprep.mubr.f32.mxu0 0.0
    %801 = vmatmul.mubr.f32.gmra.mrb[0].mxu0 %v728
    %v802 = vpop.f32.mrb[0].mxu0
    %v803 = vadd.f32 0.0, %v802
    %v804 = vpop.f32.mrb[0].mxu0
    %805 = vmatprep.mubr.f32.mxu0 0.0
    %806 = vmatmul.mubr.f32.gmra.mrb[0].mxu0 %v730
    %v807 = vpop.f32.mrb[0].mxu0
    %v808 = vadd.f32 0.0, %v807
    %v809 = vpop.f32.mrb[0].mxu0
    %810 = vdwg.mxu0
    %811 = vrot.lane.b32.xlu0 %v281, 96
    %v812 = vpop.permute.xlu0 %811
    %813 = vrot.lane.b32.xlu0 %v283, 96
    %v814 = vpop.permute.xlu0 %813
    %v815 = vsel %vm292, %v253, 0
    %v817 = vsel %vm292, %v255, 0
    %v819 = vsel %vm292, %v812, 0
    %v821 = vsel %vm292, %v814, 0
    %823 = vmatprep.subr.mxu0 0.0
    %824 = vmatpush1.xpose.msra.mxu0 %v819
    %825 = vmatprep.subr.mxu0 0.0
    %826 = vmatpush1.xpose.msra.mxu0 %v821
    %827 = vmatprep.subr.mxu0 0.0
    %828 = vmatpush1.xpose.msra.mxu0 0.0
    %829 = vmatprep.subr.mxu0 0.0
    %830 = vmatpush1.xpose.msra.mxu0 0.0
    %831 = vmatprep.subr.mxu0 0.0
    %832 = vmatpush1.xpose.msra.mxu0 0.0
    %833 = vmatprep.subr.mxu0 0.0
    %834 = vmatpush1.xpose.msra.mxu0 0.0
    %835 = vmatprep.subr.mxu0 0.0
    %836 = vmatpush1.xpose.msra.mxu0 0.0
    %837 = vmatprep.subr.mxu0 0.0
    %838 = vmatpush1.xpose.msra.mxu0 0.0
    %839 = vmatprep.subr.mxu0 0.0
    %840 = vmatpush1.xpose.msra.mxu0 0.0
    %841 = vmatprep.subr.mxu0 0.0
    %842 = vmatpush1.xpose.msra.mxu0 0.0
    %843 = vmatprep.subr.mxu0 0.0
    %844 = vmatpush1.xpose.msra.mxu0 0.0
    %845 = vmatprep.subr.mxu0 0.0
    %846 = vmatpush1.xpose.msra.mxu0 0.0
    %847 = vmatprep.subr.mxu0 0.0
    %848 = vmatpush1.xpose.msra.mxu0 0.0
    %849 = vmatprep.subr.mxu0 0.0
    %850 = vmatpush1.xpose.msra.mxu0 0.0
    %851 = vmatprep.subr.mxu0 0.0
    %852 = vmatpush1.xpose.msra.mxu0 0.0
    %853 = vmatprep.subr.mxu0 0.0
    %854 = vmatpush1.xpose.msra.mxu0 0.0
    %855 = vmatprep.subr.mxu0 0.0
    %856 = vmatpush1.xpose.msra.mxu0 0.0
    %857 = vmatprep.subr.mxu0 0.0
    %858 = vmatpush1.xpose.msra.mxu0 0.0
    %859 = vmatprep.subr.mxu0 0.0
    %860 = vmatpush1.xpose.msra.mxu0 0.0
    %861 = vmatprep.subr.mxu0 0.0
    %862 = vmatpush1.xpose.msra.mxu0 0.0
    %863 = vmatprep.subr.mxu0 0.0
    %864 = vmatpush1.xpose.msra.mxu0 0.0
    %865 = vmatprep.subr.mxu0 0.0
    %866 = vmatpush1.xpose.msra.mxu0 0.0
    %867 = vmatprep.subr.mxu0 0.0
    %868 = vmatpush1.xpose.msra.mxu0 0.0
    %869 = vmatprep.subr.mxu0 0.0
    %870 = vmatpush1.xpose.msra.mxu0 0.0
    %871 = vmatprep.subr.mxu0 0.0
    %872 = vmatpush1.xpose.msra.mxu0 0.0
    %873 = vmatprep.subr.mxu0 0.0
    %874 = vmatpush1.xpose.msra.mxu0 0.0
    %875 = vmatprep.subr.mxu0 0.0
    %876 = vmatpush1.xpose.msra.mxu0 0.0
    %877 = vmatprep.subr.mxu0 0.0
    %878 = vmatpush1.xpose.msra.mxu0 0.0
    %879 = vmatprep.subr.mxu0 0.0
    %880 = vmatpush1.xpose.msra.mxu0 0.0
    %881 = vmatprep.subr.mxu0 0.0
    %882 = vmatpush1.xpose.msra.mxu0 0.0
    %883 = vmatprep.subr.mxu0 0.0
    %884 = vmatpush1.xpose.msra.mxu0 0.0
    %885 = vmatprep.subr.mxu0 0.0
    %886 = vmatpush1.xpose.msra.mxu0 0.0
    %887 = vmatprep.mubr.f32.mxu0 0.0
    %888 = vmatmul.mubr.f32.gmra.mrb[0].mxu0 %v815
    %v889 = vpop.f32.mrb[0].mxu0
    %v890 = vadd.f32 0.0, %v889
    %v891 = vpop.f32.mrb[0].mxu0
    %892 = vmatprep.mubr.f32.mxu0 0.0
    %893 = vmatmul.mubr.f32.gmra.mrb[0].mxu0 %v817
    %v894 = vpop.f32.mrb[0].mxu0
    %v895 = vadd.f32 0.0, %v894
    %v896 = vpop.f32.mrb[0].mxu0
    %897 = vdwg.mxu0
    %898 = vrot.lane.b32.xlu0 %v285, 96
    %v899 = vpop.permute.xlu0 %898
    %900 = vrot.lane.b32.xlu0 %v287, 96
    %v901 = vpop.permute.xlu0 %900
    %v902 = vsel %vm292, %v257, 0
    %v904 = vsel %vm292, %v259, 0
    %v906 = vsel %vm292, %v899, 0
    %v908 = vsel %vm292, %v901, 0
    %910 = vmatprep.subr.mxu0 0.0
    %911 = vmatpush1.xpose.msra.mxu0 %v906
    %912 = vmatprep.subr.mxu0 0.0
    %913 = vmatpush1.xpose.msra.mxu0 %v908
    %914 = vmatprep.subr.mxu0 0.0
    %915 = vmatpush1.xpose.msra.mxu0 0.0
    %916 = vmatprep.subr.mxu0 0.0
    %917 = vmatpush1.xpose.msra.mxu0 0.0
    %918 = vmatprep.subr.mxu0 0.0
    %919 = vmatpush1.xpose.msra.mxu0 0.0
    %920 = vmatprep.subr.mxu0 0.0
    %921 = vmatpush1.xpose.msra.mxu0 0.0
    %922 = vmatprep.subr.mxu0 0.0
    %923 = vmatpush1.xpose.msra.mxu0 0.0
    %924 = vmatprep.subr.mxu0 0.0
    %925 = vmatpush1.xpose.msra.mxu0 0.0
    %926 = vmatprep.subr.mxu0 0.0
    %927 = vmatpush1.xpose.msra.mxu0 0.0
    %928 = vmatprep.subr.mxu0 0.0
    %929 = vmatpush1.xpose.msra.mxu0 0.0
    %930 = vmatprep.subr.mxu0 0.0
    %931 = vmatpush1.xpose.msra.mxu0 0.0
    %932 = vmatprep.subr.mxu0 0.0
    %933 = vmatpush1.xpose.msra.mxu0 0.0
    %934 = vmatprep.subr.mxu0 0.0
    %935 = vmatpush1.xpose.msra.mxu0 0.0
    %936 = vmatprep.subr.mxu0 0.0
    %937 = vmatpush1.xpose.msra.mxu0 0.0
    %938 = vmatprep.subr.mxu0 0.0
    %939 = vmatpush1.xpose.msra.mxu0 0.0
    %940 = vmatprep.subr.mxu0 0.0
    %941 = vmatpush1.xpose.msra.mxu0 0.0
    %942 = vmatprep.subr.mxu0 0.0
    %943 = vmatpush1.xpose.msra.mxu0 0.0
    %944 = vmatprep.subr.mxu0 0.0
    %945 = vmatpush1.xpose.msra.mxu0 0.0
    %946 = vmatprep.subr.mxu0 0.0
    %947 = vmatpush1.xpose.msra.mxu0 0.0
    %948 = vmatprep.subr.mxu0 0.0
    %949 = vmatpush1.xpose.msra.mxu0 0.0
    %950 = vmatprep.subr.mxu0 0.0
    %951 = vmatpush1.xpose.msra.mxu0 0.0
    %952 = vmatprep.subr.mxu0 0.0
    %953 = vmatpush1.xpose.msra.mxu0 0.0
    %954 = vmatprep.subr.mxu0 0.0
    %955 = vmatpush1.xpose.msra.mxu0 0.0
    %956 = vmatprep.subr.mxu0 0.0
    %957 = vmatpush1.xpose.msra.mxu0 0.0
    %958 = vmatprep.subr.mxu0 0.0
    %959 = vmatpush1.xpose.msra.mxu0 0.0
    %960 = vmatprep.subr.mxu0 0.0
    %961 = vmatpush1.xpose.msra.mxu0 0.0
    %962 = vmatprep.subr.mxu0 0.0
    %963 = vmatpush1.xpose.msra.mxu0 0.0
    %964 = vmatprep.subr.mxu0 0.0
    %965 = vmatpush1.xpose.msra.mxu0 0.0
    %966 = vmatprep.subr.mxu0 0.0
    %967 = vmatpush1.xpose.msra.mxu0 0.0
    %968 = vmatprep.subr.mxu0 0.0
    %969 = vmatpush1.xpose.msra.mxu0 0.0
    %970 = vmatprep.subr.mxu0 0.0
    %971 = vmatpush1.xpose.msra.mxu0 0.0
    %972 = vmatprep.subr.mxu0 0.0
    %973 = vmatpush1.xpose.msra.mxu0 0.0
    %974 = vmatprep.mubr.f32.mxu0 0.0
    %975 = vmatmul.mubr.f32.gmra.mrb[0].mxu0 %v902
    %v976 = vpop.f32.mrb[0].mxu0
    %v977 = vadd.f32 0.0, %v976
    %v978 = vpop.f32.mrb[0].mxu0
    %979 = vmatprep.mubr.f32.mxu0 0.0
    %980 = vmatmul.mubr.f32.gmra.mrb[0].mxu0 %v904
    %v981 = vpop.f32.mrb[0].mxu0
    %v982 = vadd.f32 0.0, %v981
    %v983 = vpop.f32.mrb[0].mxu0
    %984 = vdwg.mxu0
    %vm985 = vcmask 130048
    %v986 = vsel %vm985, %v368, -inf
    %987 = vmax.xlane.f32.xlu0 %v986
    %v988 = vpop.xlane.xlu0 %987
    %v989 = vsel %vm985, %v373, -inf
    %990 = vmax.xlane.f32.xlu0 %v989
    %v991 = vpop.xlane.xlu0 %990
    %v992 = vsel %vm985, %v455, -inf
    %993 = vmax.xlane.f32.xlu0 %v992
    %v994 = vpop.xlane.xlu0 %993
    %v995 = vsel %vm985, %v460, -inf
    %996 = vmax.xlane.f32.xlu0 %v995
    %v997 = vpop.xlane.xlu0 %996
    %v998 = vsel %vm985, %v542, -inf
    %999 = vmax.xlane.f32.xlu0 %v998
    %v1000 = vpop.xlane.xlu0 %999
    %v1001 = vsel %vm985, %v547, -inf
    %1002 = vmax.xlane.f32.xlu0 %v1001
    %v1003 = vpop.xlane.xlu0 %1002
    %v1004 = vsel %vm985, %v629, -inf
    %1005 = vmax.xlane.f32.xlu0 %v1004
    %v1006 = vpop.xlane.xlu0 %1005
    %v1007 = vsel %vm985, %v634, -inf
    %1008 = vmax.xlane.f32.xlu0 %v1007
    %v1009 = vpop.xlane.xlu0 %1008
    %v1010 = vsel %vm985, %v716, -inf
    %1011 = vmax.xlane.f32.xlu0 %v1010
    %v1012 = vpop.xlane.xlu0 %1011
    %v1013 = vsel %vm985, %v721, -inf
    %1014 = vmax.xlane.f32.xlu0 %v1013
    %v1015 = vpop.xlane.xlu0 %1014
    %v1016 = vsel %vm985, %v803, -inf
    %1017 = vmax.xlane.f32.xlu0 %v1016
    %v1018 = vpop.xlane.xlu0 %1017
    %v1019 = vsel %vm985, %v808, -inf
    %1020 = vmax.xlane.f32.xlu0 %v1019
    %v1021 = vpop.xlane.xlu0 %1020
    %v1022 = vsel %vm985, %v890, -inf
    %1023 = vmax.xlane.f32.xlu0 %v1022
    %v1024 = vpop.xlane.xlu0 %1023
    %v1025 = vsel %vm985, %v895, -inf
    %1026 = vmax.xlane.f32.xlu0 %v1025
    %v1027 = vpop.xlane.xlu0 %1026
    %v1028 = vsel %vm985, %v977, -inf
    %1029 = vmax.xlane.f32.xlu0 %v1028
    %v1030 = vpop.xlane.xlu0 %1029
    %v1031 = vsel %vm985, %v982, -inf
    %1032 = vmax.xlane.f32.xlu0 %v1031
    %v1033 = vpop.xlane.xlu0 %1032
    %v1034 = vsub.f32 %v368, %v988
    %v1035 = vsub.f32 %v373, %v991
    %v1036 = vsub.f32 %v455, %v994
    %v1037 = vsub.f32 %v460, %v997
    %v1038 = vsub.f32 %v542, %v1000
    %v1039 = vsub.f32 %v547, %v1003
    %v1040 = vsub.f32 %v629, %v1006
    %v1041 = vsub.f32 %v634, %v1009
    %v1042 = vsub.f32 %v716, %v1012
    %v1043 = vsub.f32 %v721, %v1015
    %v1044 = vsub.f32 %v803, %v1018
    %v1045 = vsub.f32 %v808, %v1021
    %v1046 = vsub.f32 %v890, %v1024
    %v1047 = vsub.f32 %v895, %v1027
    %v1048 = vsub.f32 %v977, %v1030
    %v1049 = vsub.f32 %v982, %v1033
    %v1050 = vmul.f32 %v1034, 1.442695
    %v1051 = vpow.pop %v1050
    %v1052 = vmul.f32 %v1035, 1.442695
    %v1053 = vpow.pop %v1052
    %v1054 = vmul.f32 %v1036, 1.442695
    %v1055 = vpow.pop %v1054
    %v1056 = vmul.f32 %v1037, 1.442695
    %v1057 = vpow.pop %v1056
    %v1058 = vmul.f32 %v1038, 1.442695
    %v1059 = vpow.pop %v1058
    %v1060 = vmul.f32 %v1039, 1.442695
    %v1061 = vpow.pop %v1060
    %v1062 = vmul.f32 %v1040, 1.442695
    %v1063 = vpow.pop %v1062
    %v1064 = vmul.f32 %v1041, 1.442695
    %v1065 = vpow.pop %v1064
    %v1066 = vmul.f32 %v1042, 1.442695
    %v1067 = vpow.pop %v1066
    %v1068 = vmul.f32 %v1043, 1.442695
    %v1069 = vpow.pop %v1068
    %v1070 = vmul.f32 %v1044, 1.442695
    %v1071 = vpow.pop %v1070
    %v1072 = vmul.f32 %v1045, 1.442695
    %v1073 = vpow.pop %v1072
    %v1074 = vmul.f32 %v1046, 1.442695
    %v1075 = vpow.pop %v1074
    %v1076 = vmul.f32 %v1047, 1.442695
    %v1077 = vpow.pop %v1076
    %v1078 = vmul.f32 %v1048, 1.442695
    %v1079 = vpow.pop %v1078
    %v1080 = vmul.f32 %v1049, 1.442695
    %v1081 = vpow.pop %v1080
    %v1082 = vsel %vm985, %v1051, 0.0
    %1083 = vadd.xlane.f32.xlu0 %v1082
    %v1084 = vpop.xlane.xlu0 %1083
    %v1085 = vsel %vm985, %v1053, 0.0
    %1086 = vadd.xlane.f32.xlu0 %v1085
    %v1087 = vpop.xlane.xlu0 %1086
    %v1088 = vsel %vm985, %v1055, 0.0
    %1089 = vadd.xlane.f32.xlu0 %v1088
    %v1090 = vpop.xlane.xlu0 %1089
    %v1091 = vsel %vm985, %v1057, 0.0
    %1092 = vadd.xlane.f32.xlu0 %v1091
    %v1093 = vpop.xlane.xlu0 %1092
    %v1094 = vsel %vm985, %v1059, 0.0
    %1095 = vadd.xlane.f32.xlu0 %v1094
    %v1096 = vpop.xlane.xlu0 %1095
    %v1097 = vsel %vm985, %v1061, 0.0
    %1098 = vadd.xlane.f32.xlu0 %v1097
    %v1099 = vpop.xlane.xlu0 %1098
    %v1100 = vsel %vm985, %v1063, 0.0
    %1101 = vadd.xlane.f32.xlu0 %v1100
    %v1102 = vpop.xlane.xlu0 %1101
    %v1103 = vsel %vm985, %v1065, 0.0
    %1104 = vadd.xlane.f32.xlu0 %v1103
    %v1105 = vpop.xlane.xlu0 %1104
    %v1106 = vsel %vm985, %v1067, 0.0
    %1107 = vadd.xlane.f32.xlu0 %v1106
    %v1108 = vpop.xlane.xlu0 %1107
    %v1109 = vsel %vm985, %v1069, 0.0
    %1110 = vadd.xlane.f32.xlu0 %v1109
    %v1111 = vpop.xlane.xlu0 %1110
    %v1112 = vsel %vm985, %v1071, 0.0
    %1113 = vadd.xlane.f32.xlu0 %v1112
    %v1114 = vpop.xlane.xlu0 %1113
    %v1115 = vsel %vm985, %v1073, 0.0
    %1116 = vadd.xlane.f32.xlu0 %v1115
    %v1117 = vpop.xlane.xlu0 %1116
    %v1118 = vsel %vm985, %v1075, 0.0
    %1119 = vadd.xlane.f32.xlu0 %v1118
    %v1120 = vpop.xlane.xlu0 %1119
    %v1121 = vsel %vm985, %v1077, 0.0
    %1122 = vadd.xlane.f32.xlu0 %v1121
    %v1123 = vpop.xlane.xlu0 %1122
    %v1124 = vsel %vm985, %v1079, 0.0
    %1125 = vadd.xlane.f32.xlu0 %v1124
    %v1126 = vpop.xlane.xlu0 %1125
    %v1127 = vsel %vm985, %v1081, 0.0
    %1128 = vadd.xlane.f32.xlu0 %v1127
    %v1129 = vpop.xlane.xlu0 %1128
    %v1130 = vrcp.pop %v1084
    %v1131 = vrcp.pop %v1087
    %v1132 = vrcp.pop %v1090
    %v1133 = vrcp.pop %v1093
    %v1134 = vrcp.pop %v1096
    %v1135 = vrcp.pop %v1099
    %v1136 = vrcp.pop %v1102
    %v1137 = vrcp.pop %v1105
    %v1138 = vrcp.pop %v1108
    %v1139 = vrcp.pop %v1111
    %v1140 = vrcp.pop %v1114
    %v1141 = vrcp.pop %v1117
    %v1142 = vrcp.pop %v1120
    %v1143 = vrcp.pop %v1123
    %v1144 = vrcp.pop %v1126
    %v1145 = vrcp.pop %v1129
    %v1146 = vmul.f32 %v1051, %v1130
    %v1147 = vmul.f32 %v1053, %v1131
    %v1148 = vmul.f32 %v1055, %v1132
    %v1149 = vmul.f32 %v1057, %v1133
    %v1150 = vmul.f32 %v1059, %v1134
    %v1151 = vmul.f32 %v1061, %v1135
    %v1152 = vmul.f32 %v1063, %v1136
    %v1153 = vmul.f32 %v1065, %v1137
    %v1154 = vmul.f32 %v1067, %v1138
    %v1155 = vmul.f32 %v1069, %v1139
    %v1156 = vmul.f32 %v1071, %v1140
    %v1157 = vmul.f32 %v1073, %v1141
    %v1158 = vmul.f32 %v1075, %v1142
    %v1159 = vmul.f32 %v1077, %v1143
    %v1160 = vmul.f32 %v1079, %v1144
    %v1161 = vmul.f32 %v1081, %v1145
    %1162 = vrot.lane.b32.xlu0 %v210, 64
    %v1163 = vpop.permute.xlu0 %1162
    %1164 = vrot.lane.b32.xlu0 %v215, 64
    %v1165 = vpop.permute.xlu0 %1164
    %v1169 = vsel %vm985, %v1146, 0
    %v1172 = vsel %vm985, %v1147, 0
    %1174 = vmatprep.subr.mxu0 0.0
    %1175 = vmatpush1.msra.mxu0 %v1163
    %1176 = vmatprep.subr.mxu0 0.0
    %1177 = vmatpush1.msra.mxu0 %v1165
    %1178 = vmatprep.subr.mxu0 0.0
    %1179 = vmatpush1.msra.mxu0 0.0
    %1180 = vmatprep.subr.mxu0 0.0
    %1181 = vmatpush1.msra.mxu0 0.0
    %1182 = vmatprep.subr.mxu0 0.0
    %1183 = vmatpush1.msra.mxu0 0.0
    %1184 = vmatprep.subr.mxu0 0.0
    %1185 = vmatpush1.msra.mxu0 0.0
    %1186 = vmatprep.subr.mxu0 0.0
    %1187 = vmatpush1.msra.mxu0 0.0
    %1188 = vmatprep.subr.mxu0 0.0
    %1189 = vmatpush1.msra.mxu0 0.0
    %1190 = vmatprep.subr.mxu0 0.0
    %1191 = vmatpush1.msra.mxu0 0.0
    %1192 = vmatprep.subr.mxu0 0.0
    %1193 = vmatpush1.msra.mxu0 0.0
    %1194 = vmatprep.subr.mxu0 0.0
    %1195 = vmatpush1.msra.mxu0 0.0
    %1196 = vmatprep.subr.mxu0 0.0
    %1197 = vmatpush1.msra.mxu0 0.0
    %1198 = vmatprep.subr.mxu0 0.0
    %1199 = vmatpush1.msra.mxu0 0.0
    %1200 = vmatprep.subr.mxu0 0.0
    %1201 = vmatpush1.msra.mxu0 0.0
    %1202 = vmatprep.subr.mxu0 0.0
    %1203 = vmatpush1.msra.mxu0 0.0
    %1204 = vmatprep.subr.mxu0 0.0
    %1205 = vmatpush1.msra.mxu0 0.0
    %1206 = vmatprep.subr.mxu0 0.0
    %1207 = vmatpush1.msra.mxu0 0.0
    %1208 = vmatprep.subr.mxu0 0.0
    %1209 = vmatpush1.msra.mxu0 0.0
    %1210 = vmatprep.subr.mxu0 0.0
    %1211 = vmatpush1.msra.mxu0 0.0
    %1212 = vmatprep.subr.mxu0 0.0
    %1213 = vmatpush1.msra.mxu0 0.0
    %1214 = vmatprep.subr.mxu0 0.0
    %1215 = vmatpush1.msra.mxu0 0.0
    %1216 = vmatprep.subr.mxu0 0.0
    %1217 = vmatpush1.msra.mxu0 0.0
    %1218 = vmatprep.subr.mxu0 0.0
    %1219 = vmatpush1.msra.mxu0 0.0
    %1220 = vmatprep.subr.mxu0 0.0
    %1221 = vmatpush1.msra.mxu0 0.0
    %1222 = vmatprep.subr.mxu0 0.0
    %1223 = vmatpush1.msra.mxu0 0.0
    %1224 = vmatprep.subr.mxu0 0.0
    %1225 = vmatpush1.msra.mxu0 0.0
    %1226 = vmatprep.subr.mxu0 0.0
    %1227 = vmatpush1.msra.mxu0 0.0
    %1228 = vmatprep.subr.mxu0 0.0
    %1229 = vmatpush1.msra.mxu0 0.0
    %1230 = vmatprep.subr.mxu0 0.0
    %1231 = vmatpush1.msra.mxu0 0.0
    %1232 = vmatprep.subr.mxu0 0.0
    %1233 = vmatpush1.msra.mxu0 0.0
    %1234 = vmatprep.subr.mxu0 0.0
    %1235 = vmatpush1.msra.mxu0 0.0
    %1236 = vmatprep.subr.mxu0 0.0
    %1237 = vmatpush1.msra.mxu0 0.0
    %1238 = vmatprep.mubr.f32.mxu0 0.0
    %1239 = vmatmul.mubr.f32.gmra.mrb[0].mxu0 %v1169
    %v1240 = vpop.f32.mrb[0].mxu0
    %v1241 = vadd.f32 0.0, %v1240
    %v1242 = vpop.f32.mrb[0].mxu0
    %1243 = vmatprep.mubr.f32.mxu0 0.0
    %1244 = vmatmul.mubr.f32.gmra.mrb[0].mxu0 %v1172
    %v1245 = vpop.f32.mrb[0].mxu0
    %v1246 = vadd.f32 0.0, %v1245
    %v1247 = vpop.f32.mrb[0].mxu0
    %1248 = vdwg.mxu0
    %1249 = vrot.lane.b32.xlu0 %v220, 64
    %v1250 = vpop.permute.xlu0 %1249
    %1251 = vrot.lane.b32.xlu0 %v225, 64
    %v1252 = vpop.permute.xlu0 %1251
    %v1256 = vsel %vm985, %v1148, 0
    %v1259 = vsel %vm985, %v1149, 0
    %1261 = vmatprep.subr.mxu0 0.0
    %1262 = vmatpush1.msra.mxu0 %v1250
    %1263 = vmatprep.subr.mxu0 0.0
    %1264 = vmatpush1.msra.mxu0 %v1252
    %1265 = vmatprep.subr.mxu0 0.0
    %1266 = vmatpush1.msra.mxu0 0.0
    %1267 = vmatprep.subr.mxu0 0.0
    %1268 = vmatpush1.msra.mxu0 0.0
    %1269 = vmatprep.subr.mxu0 0.0
    %1270 = vmatpush1.msra.mxu0 0.0
    %1271 = vmatprep.subr.mxu0 0.0
    %1272 = vmatpush1.msra.mxu0 0.0
    %1273 = vmatprep.subr.mxu0 0.0
    %1274 = vmatpush1.msra.mxu0 0.0
    %1275 = vmatprep.subr.mxu0 0.0
    %1276 = vmatpush1.msra.mxu0 0.0
    %1277 = vmatprep.subr.mxu0 0.0
    %1278 = vmatpush1.msra.mxu0 0.0
    %1279 = vmatprep.subr.mxu0 0.0
    %1280 = vmatpush1.msra.mxu0 0.0
    %1281 = vmatprep.subr.mxu0 0.0
    %1282 = vmatpush1.msra.mxu0 0.0
    %1283 = vmatprep.subr.mxu0 0.0
    %1284 = vmatpush1.msra.mxu0 0.0
    %1285 = vmatprep.subr.mxu0 0.0
    %1286 = vmatpush1.msra.mxu0 0.0
    %1287 = vmatprep.subr.mxu0 0.0
    %1288 = vmatpush1.msra.mxu0 0.0
    %1289 = vmatprep.subr.mxu0 0.0
    %1290 = vmatpush1.msra.mxu0 0.0
    %1291 = vmatprep.subr.mxu0 0.0
    %1292 = vmatpush1.msra.mxu0 0.0
    %1293 = vmatprep.subr.mxu0 0.0
    %1294 = vmatpush1.msra.mxu0 0.0
    %1295 = vmatprep.subr.mxu0 0.0
    %1296 = vmatpush1.msra.mxu0 0.0
    %1297 = vmatprep.subr.mxu0 0.0
    %1298 = vmatpush1.msra.mxu0 0.0
    %1299 = vmatprep.subr.mxu0 0.0
    %1300 = vmatpush1.msra.mxu0 0.0
    %1301 = vmatprep.subr.mxu0 0.0
    %1302 = vmatpush1.msra.mxu0 0.0
    %1303 = vmatprep.subr.mxu0 0.0
    %1304 = vmatpush1.msra.mxu0 0.0
    %1305 = vmatprep.subr.mxu0 0.0
    %1306 = vmatpush1.msra.mxu0 0.0
    %1307 = vmatprep.subr.mxu0 0.0
    %1308 = vmatpush1.msra.mxu0 0.0
    %1309 = vmatprep.subr.mxu0 0.0
    %1310 = vmatpush1.msra.mxu0 0.0
    %1311 = vmatprep.subr.mxu0 0.0
    %1312 = vmatpush1.msra.mxu0 0.0
    %1313 = vmatprep.subr.mxu0 0.0
    %1314 = vmatpush1.msra.mxu0 0.0
    %1315 = vmatprep.subr.mxu0 0.0
    %1316 = vmatpush1.msra.mxu0 0.0
    %1317 = vmatprep.subr.mxu0 0.0
    %1318 = vmatpush1.msra.mxu0 0.0
    %1319 = vmatprep.subr.mxu0 0.0
    %1320 = vmatpush1.msra.mxu0 0.0
    %1321 = vmatprep.subr.mxu0 0.0
    %1322 = vmatpush1.msra.mxu0 0.0
    %1323 = vmatprep.subr.mxu0 0.0
    %1324 = vmatpush1.msra.mxu0 0.0
    %1325 = vmatprep.mubr.f32.mxu0 0.0
    %1326 = vmatmul.mubr.f32.gmra.mrb[0].mxu0 %v1256
    %v1327 = vpop.f32.mrb[0].mxu0
    %v1328 = vadd.f32 0.0, %v1327
    %v1329 = vpop.f32.mrb[0].mxu0
    %1330 = vmatprep.mubr.f32.mxu0 0.0
    %1331 = vmatmul.mubr.f32.gmra.mrb[0].mxu0 %v1259
    %v1332 = vpop.f32.mrb[0].mxu0
    %v1333 = vadd.f32 0.0, %v1332
    %v1334 = vpop.f32.mrb[0].mxu0
    %1335 = vdwg.mxu0
    %1336 = vrot.lane.b32.xlu0 %v265, 64
    %v1337 = vpop.permute.xlu0 %1336
    %1338 = vrot.lane.b32.xlu0 %v267, 64
    %v1339 = vpop.permute.xlu0 %1338
    %v1343 = vsel %vm985, %v1150, 0
    %v1346 = vsel %vm985, %v1151, 0
    %1348 = vmatprep.subr.mxu0 0.0
    %1349 = vmatpush1.msra.mxu0 %v1337
    %1350 = vmatprep.subr.mxu0 0.0
    %1351 = vmatpush1.msra.mxu0 %v1339
    %1352 = vmatprep.subr.mxu0 0.0
    %1353 = vmatpush1.msra.mxu0 0.0
    %1354 = vmatprep.subr.mxu0 0.0
    %1355 = vmatpush1.msra.mxu0 0.0
    %1356 = vmatprep.subr.mxu0 0.0
    %1357 = vmatpush1.msra.mxu0 0.0
    %1358 = vmatprep.subr.mxu0 0.0
    %1359 = vmatpush1.msra.mxu0 0.0
    %1360 = vmatprep.subr.mxu0 0.0
    %1361 = vmatpush1.msra.mxu0 0.0
    %1362 = vmatprep.subr.mxu0 0.0
    %1363 = vmatpush1.msra.mxu0 0.0
    %1364 = vmatprep.subr.mxu0 0.0
    %1365 = vmatpush1.msra.mxu0 0.0
    %1366 = vmatprep.subr.mxu0 0.0
    %1367 = vmatpush1.msra.mxu0 0.0
    %1368 = vmatprep.subr.mxu0 0.0
    %1369 = vmatpush1.msra.mxu0 0.0
    %1370 = vmatprep.subr.mxu0 0.0
    %1371 = vmatpush1.msra.mxu0 0.0
    %1372 = vmatprep.subr.mxu0 0.0
    %1373 = vmatpush1.msra.mxu0 0.0
    %1374 = vmatprep.subr.mxu0 0.0
    %1375 = vmatpush1.msra.mxu0 0.0
    %1376 = vmatprep.subr.mxu0 0.0
    %1377 = vmatpush1.msra.mxu0 0.0
    %1378 = vmatprep.subr.mxu0 0.0
    %1379 = vmatpush1.msra.mxu0 0.0
    %1380 = vmatprep.subr.mxu0 0.0
    %1381 = vmatpush1.msra.mxu0 0.0
    %1382 = vmatprep.subr.mxu0 0.0
    %1383 = vmatpush1.msra.mxu0 0.0
    %1384 = vmatprep.subr.mxu0 0.0
    %1385 = vmatpush1.msra.mxu0 0.0
    %1386 = vmatprep.subr.mxu0 0.0
    %1387 = vmatpush1.msra.mxu0 0.0
    %1388 = vmatprep.subr.mxu0 0.0
    %1389 = vmatpush1.msra.mxu0 0.0
    %1390 = vmatprep.subr.mxu0 0.0
    %1391 = vmatpush1.msra.mxu0 0.0
    %1392 = vmatprep.subr.mxu0 0.0
    %1393 = vmatpush1.msra.mxu0 0.0
    %1394 = vmatprep.subr.mxu0 0.0
    %1395 = vmatpush1.msra.mxu0 0.0
    %1396 = vmatprep.subr.mxu0 0.0
    %1397 = vmatpush1.msra.mxu0 0.0
    %1398 = vmatprep.subr.mxu0 0.0
    %1399 = vmatpush1.msra.mxu0 0.0
    %1400 = vmatprep.subr.mxu0 0.0
    %1401 = vmatpush1.msra.mxu0 0.0
    %1402 = vmatprep.subr.mxu0 0.0
    %1403 = vmatpush1.msra.mxu0 0.0
    %1404 = vmatprep.subr.mxu0 0.0
    %1405 = vmatpush1.msra.mxu0 0.0
    %1406 = vmatprep.subr.mxu0 0.0
    %1407 = vmatpush1.msra.mxu0 0.0
    %1408 = vmatprep.subr.mxu0 0.0
    %1409 = vmatpush1.msra.mxu0 0.0
    %1410 = vmatprep.subr.mxu0 0.0
    %1411 = vmatpush1.msra.mxu0 0.0
    %1412 = vmatprep.mubr.f32.mxu0 0.0
    %1413 = vmatmul.mubr.f32.gmra.mrb[0].mxu0 %v1343
    %v1414 = vpop.f32.mrb[0].mxu0
    %v1415 = vadd.f32 0.0, %v1414
    %v1416 = vpop.f32.mrb[0].mxu0
    %1417 = vmatprep.mubr.f32.mxu0 0.0
    %1418 = vmatmul.mubr.f32.gmra.mrb[0].mxu0 %v1346
    %v1419 = vpop.f32.mrb[0].mxu0
    %v1420 = vadd.f32 0.0, %v1419
    %v1421 = vpop.f32.mrb[0].mxu0
    %1422 = vdwg.mxu0
    %1423 = vrot.lane.b32.xlu0 %v269, 64
    %v1424 = vpop.permute.xlu0 %1423
    %1425 = vrot.lane.b32.xlu0 %v271, 64
    %v1426 = vpop.permute.xlu0 %1425
    %v1430 = vsel %vm985, %v1152, 0
    %v1433 = vsel %vm985, %v1153, 0
    %1435 = vmatprep.subr.mxu0 0.0
    %1436 = vmatpush1.msra.mxu0 %v1424
    %1437 = vmatprep.subr.mxu0 0.0
    %1438 = vmatpush1.msra.mxu0 %v1426
    %1439 = vmatprep.subr.mxu0 0.0
    %1440 = vmatpush1.msra.mxu0 0.0
    %1441 = vmatprep.subr.mxu0 0.0
    %1442 = vmatpush1.msra.mxu0 0.0
    %1443 = vmatprep.subr.mxu0 0.0
    %1444 = vmatpush1.msra.mxu0 0.0
    %1445 = vmatprep.subr.mxu0 0.0
    %1446 = vmatpush1.msra.mxu0 0.0
    %1447 = vmatprep.subr.mxu0 0.0
    %1448 = vmatpush1.msra.mxu0 0.0
    %1449 = vmatprep.subr.mxu0 0.0
    %1450 = vmatpush1.msra.mxu0 0.0
    %1451 = vmatprep.subr.mxu0 0.0
    %1452 = vmatpush1.msra.mxu0 0.0
    %1453 = vmatprep.subr.mxu0 0.0
    %1454 = vmatpush1.msra.mxu0 0.0
    %1455 = vmatprep.subr.mxu0 0.0
    %1456 = vmatpush1.msra.mxu0 0.0
    %1457 = vmatprep.subr.mxu0 0.0
    %1458 = vmatpush1.msra.mxu0 0.0
    %1459 = vmatprep.subr.mxu0 0.0
    %1460 = vmatpush1.msra.mxu0 0.0
    %1461 = vmatprep.subr.mxu0 0.0
    %1462 = vmatpush1.msra.mxu0 0.0
    %1463 = vmatprep.subr.mxu0 0.0
    %1464 = vmatpush1.msra.mxu0 0.0
    %1465 = vmatprep.subr.mxu0 0.0
    %1466 = vmatpush1.msra.mxu0 0.0
    %1467 = vmatprep.subr.mxu0 0.0
    %1468 = vmatpush1.msra.mxu0 0.0
    %1469 = vmatprep.subr.mxu0 0.0
    %1470 = vmatpush1.msra.mxu0 0.0
    %1471 = vmatprep.subr.mxu0 0.0
    %1472 = vmatpush1.msra.mxu0 0.0
    %1473 = vmatprep.subr.mxu0 0.0
    %1474 = vmatpush1.msra.mxu0 0.0
    %1475 = vmatprep.subr.mxu0 0.0
    %1476 = vmatpush1.msra.mxu0 0.0
    %1477 = vmatprep.subr.mxu0 0.0
    %1478 = vmatpush1.msra.mxu0 0.0
    %1479 = vmatprep.subr.mxu0 0.0
    %1480 = vmatpush1.msra.mxu0 0.0
    %1481 = vmatprep.subr.mxu0 0.0
    %1482 = vmatpush1.msra.mxu0 0.0
    %1483 = vmatprep.subr.mxu0 0.0
    %1484 = vmatpush1.msra.mxu0 0.0
    %1485 = vmatprep.subr.mxu0 0.0
    %1486 = vmatpush1.msra.mxu0 0.0
    %1487 = vmatprep.subr.mxu0 0.0
    %1488 = vmatpush1.msra.mxu0 0.0
    %1489 = vmatprep.subr.mxu0 0.0
    %1490 = vmatpush1.msra.mxu0 0.0
    %1491 = vmatprep.subr.mxu0 0.0
    %1492 = vmatpush1.msra.mxu0 0.0
    %1493 = vmatprep.subr.mxu0 0.0
    %1494 = vmatpush1.msra.mxu0 0.0
    %1495 = vmatprep.subr.mxu0 0.0
    %1496 = vmatpush1.msra.mxu0 0.0
    %1497 = vmatprep.subr.mxu0 0.0
    %1498 = vmatpush1.msra.mxu0 0.0
    %1499 = vmatprep.mubr.f32.mxu0 0.0
    %1500 = vmatmul.mubr.f32.gmra.mrb[0].mxu0 %v1430
    %v1501 = vpop.f32.mrb[0].mxu0
    %v1502 = vadd.f32 0.0, %v1501
    %v1503 = vpop.f32.mrb[0].mxu0
    %1504 = vmatprep.mubr.f32.mxu0 0.0
    %1505 = vmatmul.mubr.f32.gmra.mrb[0].mxu0 %v1433
    %v1506 = vpop.f32.mrb[0].mxu0
    %v1507 = vadd.f32 0.0, %v1506
    %v1508 = vpop.f32.mrb[0].mxu0
    %1509 = vdwg.mxu0
    %1510 = vrot.lane.b32.xlu0 %v273, 64
    %v1511 = vpop.permute.xlu0 %1510
    %1512 = vrot.lane.b32.xlu0 %v275, 64
    %v1513 = vpop.permute.xlu0 %1512
    %v1517 = vsel %vm985, %v1154, 0
    %v1520 = vsel %vm985, %v1155, 0
    %1522 = vmatprep.subr.mxu0 0.0
    %1523 = vmatpush1.msra.mxu0 %v1511
    %1524 = vmatprep.subr.mxu0 0.0
    %1525 = vmatpush1.msra.mxu0 %v1513
    %1526 = vmatprep.subr.mxu0 0.0
    %1527 = vmatpush1.msra.mxu0 0.0
    %1528 = vmatprep.subr.mxu0 0.0
    %1529 = vmatpush1.msra.mxu0 0.0
    %1530 = vmatprep.subr.mxu0 0.0
    %1531 = vmatpush1.msra.mxu0 0.0
    %1532 = vmatprep.subr.mxu0 0.0
    %1533 = vmatpush1.msra.mxu0 0.0
    %1534 = vmatprep.subr.mxu0 0.0
    %1535 = vmatpush1.msra.mxu0 0.0
    %1536 = vmatprep.subr.mxu0 0.0
    %1537 = vmatpush1.msra.mxu0 0.0
    %1538 = vmatprep.subr.mxu0 0.0
    %1539 = vmatpush1.msra.mxu0 0.0
    %1540 = vmatprep.subr.mxu0 0.0
    %1541 = vmatpush1.msra.mxu0 0.0
    %1542 = vmatprep.subr.mxu0 0.0
    %1543 = vmatpush1.msra.mxu0 0.0
    %1544 = vmatprep.subr.mxu0 0.0
    %1545 = vmatpush1.msra.mxu0 0.0
    %1546 = vmatprep.subr.mxu0 0.0
    %1547 = vmatpush1.msra.mxu0 0.0
    %1548 = vmatprep.subr.mxu0 0.0
    %1549 = vmatpush1.msra.mxu0 0.0
    %1550 = vmatprep.subr.mxu0 0.0
    %1551 = vmatpush1.msra.mxu0 0.0
    %1552 = vmatprep.subr.mxu0 0.0
    %1553 = vmatpush1.msra.mxu0 0.0
    %1554 = vmatprep.subr.mxu0 0.0
    %1555 = vmatpush1.msra.mxu0 0.0
    %1556 = vmatprep.subr.mxu0 0.0
    %1557 = vmatpush1.msra.mxu0 0.0
    %1558 = vmatprep.subr.mxu0 0.0
    %1559 = vmatpush1.msra.mxu0 0.0
    %1560 = vmatprep.subr.mxu0 0.0
    %1561 = vmatpush1.msra.mxu0 0.0
    %1562 = vmatprep.subr.mxu0 0.0
    %1563 = vmatpush1.msra.mxu0 0.0
    %1564 = vmatprep.subr.mxu0 0.0
    %1565 = vmatpush1.msra.mxu0 0.0
    %1566 = vmatprep.subr.mxu0 0.0
    %1567 = vmatpush1.msra.mxu0 0.0
    %1568 = vmatprep.subr.mxu0 0.0
    %1569 = vmatpush1.msra.mxu0 0.0
    %1570 = vmatprep.subr.mxu0 0.0
    %1571 = vmatpush1.msra.mxu0 0.0
    %1572 = vmatprep.subr.mxu0 0.0
    %1573 = vmatpush1.msra.mxu0 0.0
    %1574 = vmatprep.subr.mxu0 0.0
    %1575 = vmatpush1.msra.mxu0 0.0
    %1576 = vmatprep.subr.mxu0 0.0
    %1577 = vmatpush1.msra.mxu0 0.0
    %1578 = vmatprep.subr.mxu0 0.0
    %1579 = vmatpush1.msra.mxu0 0.0
    %1580 = vmatprep.subr.mxu0 0.0
    %1581 = vmatpush1.msra.mxu0 0.0
    %1582 = vmatprep.subr.mxu0 0.0
    %1583 = vmatpush1.msra.mxu0 0.0
    %1584 = vmatprep.subr.mxu0 0.0
    %1585 = vmatpush1.msra.mxu0 0.0
    %1586 = vmatprep.mubr.f32.mxu0 0.0
    %1587 = vmatmul.mubr.f32.gmra.mrb[0].mxu0 %v1517
    %v1588 = vpop.f32.mrb[0].mxu0
    %v1589 = vadd.f32 0.0, %v1588
    %v1590 = vpop.f32.mrb[0].mxu0
    %1591 = vmatprep.mubr.f32.mxu0 0.0
    %1592 = vmatmul.mubr.f32.gmra.mrb[0].mxu0 %v1520
    %v1593 = vpop.f32.mrb[0].mxu0
    %v1594 = vadd.f32 0.0, %v1593
    %v1595 = vpop.f32.mrb[0].mxu0
    %1596 = vdwg.mxu0
    %1597 = vrot.lane.b32.xlu0 %v277, 64
    %v1598 = vpop.permute.xlu0 %1597
    %1599 = vrot.lane.b32.xlu0 %v279, 64
    %v1600 = vpop.permute.xlu0 %1599
    %v1604 = vsel %vm985, %v1156, 0
    %v1607 = vsel %vm985, %v1157, 0
    %1609 = vmatprep.subr.mxu0 0.0
    %1610 = vmatpush1.msra.mxu0 %v1598
    %1611 = vmatprep.subr.mxu0 0.0
    %1612 = vmatpush1.msra.mxu0 %v1600
    %1613 = vmatprep.subr.mxu0 0.0
    %1614 = vmatpush1.msra.mxu0 0.0
    %1615 = vmatprep.subr.mxu0 0.0
    %1616 = vmatpush1.msra.mxu0 0.0
    %1617 = vmatprep.subr.mxu0 0.0
    %1618 = vmatpush1.msra.mxu0 0.0
    %1619 = vmatprep.subr.mxu0 0.0
    %1620 = vmatpush1.msra.mxu0 0.0
    %1621 = vmatprep.subr.mxu0 0.0
    %1622 = vmatpush1.msra.mxu0 0.0
    %1623 = vmatprep.subr.mxu0 0.0
    %1624 = vmatpush1.msra.mxu0 0.0
    %1625 = vmatprep.subr.mxu0 0.0
    %1626 = vmatpush1.msra.mxu0 0.0
    %1627 = vmatprep.subr.mxu0 0.0
    %1628 = vmatpush1.msra.mxu0 0.0
    %1629 = vmatprep.subr.mxu0 0.0
    %1630 = vmatpush1.msra.mxu0 0.0
    %1631 = vmatprep.subr.mxu0 0.0
    %1632 = vmatpush1.msra.mxu0 0.0
    %1633 = vmatprep.subr.mxu0 0.0
    %1634 = vmatpush1.msra.mxu0 0.0
    %1635 = vmatprep.subr.mxu0 0.0
    %1636 = vmatpush1.msra.mxu0 0.0
    %1637 = vmatprep.subr.mxu0 0.0
    %1638 = vmatpush1.msra.mxu0 0.0
    %1639 = vmatprep.subr.mxu0 0.0
    %1640 = vmatpush1.msra.mxu0 0.0
    %1641 = vmatprep.subr.mxu0 0.0
    %1642 = vmatpush1.msra.mxu0 0.0
    %1643 = vmatprep.subr.mxu0 0.0
    %1644 = vmatpush1.msra.mxu0 0.0
    %1645 = vmatprep.subr.mxu0 0.0
    %1646 = vmatpush1.msra.mxu0 0.0
    %1647 = vmatprep.subr.mxu0 0.0
    %1648 = vmatpush1.msra.mxu0 0.0
    %1649 = vmatprep.subr.mxu0 0.0
    %1650 = vmatpush1.msra.mxu0 0.0
    %1651 = vmatprep.subr.mxu0 0.0
    %1652 = vmatpush1.msra.mxu0 0.0
    %1653 = vmatprep.subr.mxu0 0.0
    %1654 = vmatpush1.msra.mxu0 0.0
    %1655 = vmatprep.subr.mxu0 0.0
    %1656 = vmatpush1.msra.mxu0 0.0
    %1657 = vmatprep.subr.mxu0 0.0
    %1658 = vmatpush1.msra.mxu0 0.0
    %1659 = vmatprep.subr.mxu0 0.0
    %1660 = vmatpush1.msra.mxu0 0.0
    %1661 = vmatprep.subr.mxu0 0.0
    %1662 = vmatpush1.msra.mxu0 0.0
    %1663 = vmatprep.subr.mxu0 0.0
    %1664 = vmatpush1.msra.mxu0 0.0
    %1665 = vmatprep.subr.mxu0 0.0
    %1666 = vmatpush1.msra.mxu0 0.0
    %1667 = vmatprep.subr.mxu0 0.0
    %1668 = vmatpush1.msra.mxu0 0.0
    %1669 = vmatprep.subr.mxu0 0.0
    %1670 = vmatpush1.msra.mxu0 0.0
    %1671 = vmatprep.subr.mxu0 0.0
    %1672 = vmatpush1.msra.mxu0 0.0
    %1673 = vmatprep.mubr.f32.mxu0 0.0
    %1674 = vmatmul.mubr.f32.gmra.mrb[0].mxu0 %v1604
    %v1675 = vpop.f32.mrb[0].mxu0
    %v1676 = vadd.f32 0.0, %v1675
    %v1677 = vpop.f32.mrb[0].mxu0
    %1678 = vmatprep.mubr.f32.mxu0 0.0
    %1679 = vmatmul.mubr.f32.gmra.mrb[0].mxu0 %v1607
    %v1680 = vpop.f32.mrb[0].mxu0
    %v1681 = vadd.f32 0.0, %v1680
    %v1682 = vpop.f32.mrb[0].mxu0
    %1683 = vdwg.mxu0
    %1684 = vrot.lane.b32.xlu0 %v281, 64
    %v1685 = vpop.permute.xlu0 %1684
    %1686 = vrot.lane.b32.xlu0 %v283, 64
    %v1687 = vpop.permute.xlu0 %1686
    %v1691 = vsel %vm985, %v1158, 0
    %v1694 = vsel %vm985, %v1159, 0
    %1696 = vmatprep.subr.mxu0 0.0
    %1697 = vmatpush1.msra.mxu0 %v1685
    %1698 = vmatprep.subr.mxu0 0.0
    %1699 = vmatpush1.msra.mxu0 %v1687
    %1700 = vmatprep.subr.mxu0 0.0
    %1701 = vmatpush1.msra.mxu0 0.0
    %1702 = vmatprep.subr.mxu0 0.0
    %1703 = vmatpush1.msra.mxu0 0.0
    %1704 = vmatprep.subr.mxu0 0.0
    %1705 = vmatpush1.msra.mxu0 0.0
    %1706 = vmatprep.subr.mxu0 0.0
    %1707 = vmatpush1.msra.mxu0 0.0
    %1708 = vmatprep.subr.mxu0 0.0
    %1709 = vmatpush1.msra.mxu0 0.0
    %1710 = vmatprep.subr.mxu0 0.0
    %1711 = vmatpush1.msra.mxu0 0.0
    %1712 = vmatprep.subr.mxu0 0.0
    %1713 = vmatpush1.msra.mxu0 0.0
    %1714 = vmatprep.subr.mxu0 0.0
    %1715 = vmatpush1.msra.mxu0 0.0
    %1716 = vmatprep.subr.mxu0 0.0
    %1717 = vmatpush1.msra.mxu0 0.0
    %1718 = vmatprep.subr.mxu0 0.0
    %1719 = vmatpush1.msra.mxu0 0.0
    %1720 = vmatprep.subr.mxu0 0.0
    %1721 = vmatpush1.msra.mxu0 0.0
    %1722 = vmatprep.subr.mxu0 0.0
    %1723 = vmatpush1.msra.mxu0 0.0
    %1724 = vmatprep.subr.mxu0 0.0
    %1725 = vmatpush1.msra.mxu0 0.0
    %1726 = vmatprep.subr.mxu0 0.0
    %1727 = vmatpush1.msra.mxu0 0.0
    %1728 = vmatprep.subr.mxu0 0.0
    %1729 = vmatpush1.msra.mxu0 0.0
    %1730 = vmatprep.subr.mxu0 0.0
    %1731 = vmatpush1.msra.mxu0 0.0
    %1732 = vmatprep.subr.mxu0 0.0
    %1733 = vmatpush1.msra.mxu0 0.0
    %1734 = vmatprep.subr.mxu0 0.0
    %1735 = vmatpush1.msra.mxu0 0.0
    %1736 = vmatprep.subr.mxu0 0.0
    %1737 = vmatpush1.msra.mxu0 0.0
    %1738 = vmatprep.subr.mxu0 0.0
    %1739 = vmatpush1.msra.mxu0 0.0
    %1740 = vmatprep.subr.mxu0 0.0
    %1741 = vmatpush1.msra.mxu0 0.0
    %1742 = vmatprep.subr.mxu0 0.0
    %1743 = vmatpush1.msra.mxu0 0.0
    %1744 = vmatprep.subr.mxu0 0.0
    %1745 = vmatpush1.msra.mxu0 0.0
    %1746 = vmatprep.subr.mxu0 0.0
    %1747 = vmatpush1.msra.mxu0 0.0
    %1748 = vmatprep.subr.mxu0 0.0
    %1749 = vmatpush1.msra.mxu0 0.0
    %1750 = vmatprep.subr.mxu0 0.0
    %1751 = vmatpush1.msra.mxu0 0.0
    %1752 = vmatprep.subr.mxu0 0.0
    %1753 = vmatpush1.msra.mxu0 0.0
    %1754 = vmatprep.subr.mxu0 0.0
    %1755 = vmatpush1.msra.mxu0 0.0
    %1756 = vmatprep.subr.mxu0 0.0
    %1757 = vmatpush1.msra.mxu0 0.0
    %1758 = vmatprep.subr.mxu0 0.0
    %1759 = vmatpush1.msra.mxu0 0.0
    %1760 = vmatprep.mubr.f32.mxu0 0.0
    %1761 = vmatmul.mubr.f32.gmra.mrb[0].mxu0 %v1691
    %v1762 = vpop.f32.mrb[0].mxu0
    %v1763 = vadd.f32 0.0, %v1762
    %v1764 = vpop.f32.mrb[0].mxu0
    %1765 = vmatprep.mubr.f32.mxu0 0.0
    %1766 = vmatmul.mubr.f32.gmra.mrb[0].mxu0 %v1694
    %v1767 = vpop.f32.mrb[0].mxu0
    %v1768 = vadd.f32 0.0, %v1767
    %v1769 = vpop.f32.mrb[0].mxu0
    %1770 = vdwg.mxu0
    %1771 = vrot.lane.b32.xlu0 %v285, 64
    %v1772 = vpop.permute.xlu0 %1771
    %1773 = vrot.lane.b32.xlu0 %v287, 64
    %v1774 = vpop.permute.xlu0 %1773
    %v1778 = vsel %vm985, %v1160, 0
    %v1781 = vsel %vm985, %v1161, 0
    %1783 = vmatprep.subr.mxu0 0.0
    %1784 = vmatpush1.msra.mxu0 %v1772
    %1785 = vmatprep.subr.mxu0 0.0
    %1786 = vmatpush1.msra.mxu0 %v1774
    %1787 = vmatprep.subr.mxu0 0.0
    %1788 = vmatpush1.msra.mxu0 0.0
    %1789 = vmatprep.subr.mxu0 0.0
    %1790 = vmatpush1.msra.mxu0 0.0
    %1791 = vmatprep.subr.mxu0 0.0
    %1792 = vmatpush1.msra.mxu0 0.0
    %1793 = vmatprep.subr.mxu0 0.0
    %1794 = vmatpush1.msra.mxu0 0.0
    %1795 = vmatprep.subr.mxu0 0.0
    %1796 = vmatpush1.msra.mxu0 0.0
    %1797 = vmatprep.subr.mxu0 0.0
    %1798 = vmatpush1.msra.mxu0 0.0
    %1799 = vmatprep.subr.mxu0 0.0
    %1800 = vmatpush1.msra.mxu0 0.0
    %1801 = vmatprep.subr.mxu0 0.0
    %1802 = vmatpush1.msra.mxu0 0.0
    %1803 = vmatprep.subr.mxu0 0.0
    %1804 = vmatpush1.msra.mxu0 0.0
    %1805 = vmatprep.subr.mxu0 0.0
    %1806 = vmatpush1.msra.mxu0 0.0
    %1807 = vmatprep.subr.mxu0 0.0
    %1808 = vmatpush1.msra.mxu0 0.0
    %1809 = vmatprep.subr.mxu0 0.0
    %1810 = vmatpush1.msra.mxu0 0.0
    %1811 = vmatprep.subr.mxu0 0.0
    %1812 = vmatpush1.msra.mxu0 0.0
    %1813 = vmatprep.subr.mxu0 0.0
    %1814 = vmatpush1.msra.mxu0 0.0
    %1815 = vmatprep.subr.mxu0 0.0
    %1816 = vmatpush1.msra.mxu0 0.0
    %1817 = vmatprep.subr.mxu0 0.0
    %1818 = vmatpush1.msra.mxu0 0.0
    %1819 = vmatprep.subr.mxu0 0.0
    %1820 = vmatpush1.msra.mxu0 0.0
    %1821 = vmatprep.subr.mxu0 0.0
    %1822 = vmatpush1.msra.mxu0 0.0
    %1823 = vmatprep.subr.mxu0 0.0
    %1824 = vmatpush1.msra.mxu0 0.0
    %1825 = vmatprep.subr.mxu0 0.0
    %1826 = vmatpush1.msra.mxu0 0.0
    %1827 = vmatprep.subr.mxu0 0.0
    %1828 = vmatpush1.msra.mxu0 0.0
    %1829 = vmatprep.subr.mxu0 0.0
    %1830 = vmatpush1.msra.mxu0 0.0
    %1831 = vmatprep.subr.mxu0 0.0
    %1832 = vmatpush1.msra.mxu0 0.0
    %1833 = vmatprep.subr.mxu0 0.0
    %1834 = vmatpush1.msra.mxu0 0.0
    %1835 = vmatprep.subr.mxu0 0.0
    %1836 = vmatpush1.msra.mxu0 0.0
    %1837 = vmatprep.subr.mxu0 0.0
    %1838 = vmatpush1.msra.mxu0 0.0
    %1839 = vmatprep.subr.mxu0 0.0
    %1840 = vmatpush1.msra.mxu0 0.0
    %1841 = vmatprep.subr.mxu0 0.0
    %1842 = vmatpush1.msra.mxu0 0.0
    %1843 = vmatprep.subr.mxu0 0.0
    %1844 = vmatpush1.msra.mxu0 0.0
    %1845 = vmatprep.subr.mxu0 0.0
    %1846 = vmatpush1.msra.mxu0 0.0
    %1847 = vmatprep.mubr.f32.mxu0 0.0
    %1848 = vmatmul.mubr.f32.gmra.mrb[0].mxu0 %v1778
    %v1849 = vpop.f32.mrb[0].mxu0
    %v1850 = vadd.f32 0.0, %v1849
    %v1851 = vpop.f32.mrb[0].mxu0
    %1852 = vmatprep.mubr.f32.mxu0 0.0
    %1853 = vmatmul.mubr.f32.gmra.mrb[0].mxu0 %v1781
    %v1854 = vpop.f32.mrb[0].mxu0
    %v1855 = vadd.f32 0.0, %v1854
    %v1856 = vpop.f32.mrb[0].mxu0
    %1857 = vdwg.mxu0
    %1862 = vrot.lane.b32.xlu0 %v1415, 8
    %v1863 = vpop.permute.xlu0 %1862
    %1864 = vrot.lane.b32.xlu0 %v1420, 8
    %v1865 = vpop.permute.xlu0 %1864
    %1866 = vrot.lane.b32.xlu0 %v1502, 8
    %v1867 = vpop.permute.xlu0 %1866
    %1868 = vrot.lane.b32.xlu0 %v1507, 8
    %v1869 = vpop.permute.xlu0 %1868
    %1878 = vrot.lane.b32.xlu0 %v1589, 16
    %v1879 = vpop.permute.xlu0 %1878
    %1880 = vrot.lane.b32.xlu0 %v1594, 16
    %v1881 = vpop.permute.xlu0 %1880
    %1882 = vrot.lane.b32.xlu0 %v1676, 16
    %v1883 = vpop.permute.xlu0 %1882
    %1884 = vrot.lane.b32.xlu0 %v1681, 16
    %v1885 = vpop.permute.xlu0 %1884
    %1894 = vrot.lane.b32.xlu0 %v1763, 24
    %v1895 = vpop.permute.xlu0 %1894
    %1896 = vrot.lane.b32.xlu0 %v1768, 24
    %v1897 = vpop.permute.xlu0 %1896
    %1898 = vrot.lane.b32.xlu0 %v1850, 24
    %v1899 = vpop.permute.xlu0 %1898
    %1900 = vrot.lane.b32.xlu0 %v1855, 24
    %v1901 = vpop.permute.xlu0 %1900
    %v1906 = vsel %vm292, %v1241, %v1863
    %v1907 = vsel %vm292, %v1246, %v1865
    %v1908 = vsel %vm292, %v1328, %v1867
    %v1909 = vsel %vm292, %v1333, %v1869
    %v1910 = vsel %vm985, %v1906, %v1879
    %v1911 = vsel %vm985, %v1907, %v1881
    %v1912 = vsel %vm985, %v1908, %v1883
    %v1913 = vsel %vm985, %v1909, %v1885
    %vm1914 = vcmask 195584
    %v1915 = vsel %vm1914, %v1910, %v1895
    %v1916 = vsel %vm1914, %v1911, %v1897
    %v1917 = vsel %vm1914, %v1912, %v1899
    %v1918 = vsel %vm1914, %v1913, %v1901
    %v1919 = vld [vmem:[%s2 + $0x10] sm:$0xff]
    %v1920 = vld [vmem:[%s2 + $0x38] sm:$0xff]
    %v1921 = vld [vmem:[%s2 + $0x60] sm:$0xff]
    %v1922 = vld [vmem:[%s2 + $0x88] sm:$0xff]
    %v1923 = vld [vmem:[#allocation5 + $0x3] sm:$0x1]
    %v1924 = vlaneseq
    %v1925 = vshrl.u32 %v1924, 7
    %v1926 = vsub.s32 0, %v1925
    %v1927 = vrot.slane %v1923, %v1926
    %v1929 = vsel %vm52, %v1915, 0
    %v1932 = vsel %vm52, %v1916, 0
    %v1935 = vsel %vm52, %v1917, 0
    %v1938 = vsel %vm52, %v1918, 0
    %1940 = vmatprep.subr.mxu0 0.0
    %1941 = vmatpush1.msra.mxu0 %v1919
    %1942 = vmatprep.subr.mxu0 0.0
    %1943 = vmatpush1.msra.mxu0 %v1920
    %1944 = vmatprep.subr.mxu0 0.0
    %1945 = vmatpush1.msra.mxu0 %v1921
    %1946 = vmatprep.subr.mxu0 0.0
    %1947 = vmatpush1.msra.mxu0 %v1922
    %1948 = vmatprep.subr.mxu0 0.0
    %1949 = vmatpush1.msra.mxu0 0.0
    %1950 = vmatprep.subr.mxu0 0.0
    %1951 = vmatpush1.msra.mxu0 0.0
    %1952 = vmatprep.subr.mxu0 0.0
    %1953 = vmatpush1.msra.mxu0 0.0
    %1954 = vmatprep.subr.mxu0 0.0
    %1955 = vmatpush1.msra.mxu0 0.0
    %1956 = vmatprep.subr.mxu0 0.0
    %1957 = vmatpush1.msra.mxu0 0.0
    %1958 = vmatprep.subr.mxu0 0.0
    %1959 = vmatpush1.msra.mxu0 0.0
    %1960 = vmatprep.subr.mxu0 0.0
    %1961 = vmatpush1.msra.mxu0 0.0
    %1962 = vmatprep.subr.mxu0 0.0
    %1963 = vmatpush1.msra.mxu0 0.0
    %1964 = vmatprep.subr.mxu0 0.0
    %1965 = vmatpush1.msra.mxu0 0.0
    %1966 = vmatprep.subr.mxu0 0.0
    %1967 = vmatpush1.msra.mxu0 0.0
    %1968 = vmatprep.subr.mxu0 0.0
    %1969 = vmatpush1.msra.mxu0 0.0
    %1970 = vmatprep.subr.mxu0 0.0
    %1971 = vmatpush1.msra.mxu0 0.0
    %1972 = vmatprep.subr.mxu0 0.0
    %1973 = vmatpush1.msra.mxu0 0.0
    %1974 = vmatprep.subr.mxu0 0.0
    %1975 = vmatpush1.msra.mxu0 0.0
    %1976 = vmatprep.subr.mxu0 0.0
    %1977 = vmatpush1.msra.mxu0 0.0
    %1978 = vmatprep.subr.mxu0 0.0
    %1979 = vmatpush1.msra.mxu0 0.0
    %1980 = vmatprep.subr.mxu0 0.0
    %1981 = vmatpush1.msra.mxu0 0.0
    %1982 = vmatprep.subr.mxu0 0.0
    %1983 = vmatpush1.msra.mxu0 0.0
    %1984 = vmatprep.subr.mxu0 0.0
    %1985 = vmatpush1.msra.mxu0 0.0
    %1986 = vmatprep.subr.mxu0 0.0
    %1987 = vmatpush1.msra.mxu0 0.0
    %1988 = vmatprep.subr.mxu0 0.0
    %1989 = vmatpush1.msra.mxu0 0.0
    %1990 = vmatprep.subr.mxu0 0.0
    %1991 = vmatpush1.msra.mxu0 0.0
    %1992 = vmatprep.subr.mxu0 0.0
    %1993 = vmatpush1.msra.mxu0 0.0
    %1994 = vmatprep.subr.mxu0 0.0
    %1995 = vmatpush1.msra.mxu0 0.0
    %1996 = vmatprep.subr.mxu0 0.0
    %1997 = vmatpush1.msra.mxu0 0.0
    %1998 = vmatprep.subr.mxu0 0.0
    %1999 = vmatpush1.msra.mxu0 0.0
    %2000 = vmatprep.subr.mxu0 0.0
    %2001 = vmatpush1.msra.mxu0 0.0
    %2002 = vmatprep.subr.mxu0 0.0
    %2003 = vmatpush1.msra.mxu0 0.0
    %2004 = vmatprep.mubr.f32.mxu0 0.0
    %2005 = vmatmul.mubr.f32.gmra.mrb[0].mxu0 %v1929
    %v2006 = vpop.f32.mrb[0].mxu0
    %v2007 = vadd.f32 %v1927, %v2006
    %v2008 = vpop.f32.mrb[0].mxu0
    %2009 = vmatprep.mubr.f32.mxu0 0.0
    %2010 = vmatmul.mubr.f32.gmra.mrb[0].mxu0 %v1932
    %v2011 = vpop.f32.mrb[0].mxu0
    %v2012 = vadd.f32 %v1927, %v2011
    %v2013 = vpop.f32.mrb[0].mxu0
    %2014 = vmatprep.mubr.f32.mxu0 0.0
    %2015 = vmatmul.mubr.f32.gmra.mrb[0].mxu0 %v1935
    %v2016 = vpop.f32.mrb[0].mxu0
    %v2017 = vadd.f32 %v1927, %v2016
    %v2018 = vpop.f32.mrb[0].mxu0
    %2019 = vmatprep.mubr.f32.mxu0 0.0
    %2020 = vmatmul.mubr.f32.gmra.mrb[0].mxu0 %v1938
    %v2021 = vpop.f32.mrb[0].mxu0
    %v2022 = vadd.f32 %v1927, %v2021
    %v2023 = vpop.f32.mrb[0].mxu0
    %2024 = vdwg.mxu0
    %v2025 = vadd.f32 %v46, %v2007
    %v2026 = vadd.f32 %v47, %v2012
    %v2027 = vadd.f32 %v48, %v2017
    %v2028 = vadd.f32 %v49, %v2022
    %v2029 = vld [vmem:[#allocation5 + $0x4] sm:$0x1]
    %v2030 = vld [vmem:[#allocation5 + $0x5] sm:$0x1]
    %v2031 = vsel %vm52, %v2025, 0.0
    %2032 = vadd.xlane.f32.xlu0 %v2031
    %v2033 = vpop.xlane.xlu0 %2032
    %v2034 = vsel %vm52, %v2026, 0.0
    %2035 = vadd.xlane.f32.xlu0 %v2034
    %v2036 = vpop.xlane.xlu0 %2035
    %v2037 = vsel %vm52, %v2027, 0.0
    %2038 = vadd.xlane.f32.xlu0 %v2037
    %v2039 = vpop.xlane.xlu0 %2038
    %v2040 = vsel %vm52, %v2028, 0.0
    %2041 = vadd.xlane.f32.xlu0 %v2040
    %v2042 = vpop.xlane.xlu0 %2041
    %v2043 = vmul.f32 %v2033, %v65
    %v2044 = vmul.f32 %v2036, %v65
    %v2045 = vmul.f32 %v2039, %v65
    %v2046 = vmul.f32 %v2042, %v65
    %v2047 = vsub.f32 %v2025, %v2043
    %v2048 = vsub.f32 %v2026, %v2044
    %v2049 = vsub.f32 %v2027, %v2045
    %v2050 = vsub.f32 %v2028, %v2046
    %v2051 = vmul.f32 %v2047, %v2047
    %v2052 = vmul.f32 %v2048, %v2048
    %v2053 = vmul.f32 %v2049, %v2049
    %v2054 = vmul.f32 %v2050, %v2050
    %v2055 = vsel %vm52, %v2051, 0.0
    %2056 = vadd.xlane.f32.xlu0 %v2055
    %v2057 = vpop.xlane.xlu0 %2056
    %v2058 = vsel %vm52, %v2052, 0.0
    %2059 = vadd.xlane.f32.xlu0 %v2058
    %v2060 = vpop.xlane.xlu0 %2059
    %v2061 = vsel %vm52, %v2053, 0.0
    %2062 = vadd.xlane.f32.xlu0 %v2061
    %v2063 = vpop.xlane.xlu0 %2062
    %v2064 = vsel %vm52, %v2054, 0.0
    %2065 = vadd.xlane.f32.xlu0 %v2064
    %v2066 = vpop.xlane.xlu0 %2065
    %v2067 = vmul.f32 %v2057, %v65
    %v2068 = vmul.f32 %v2060, %v65
    %v2069 = vmul.f32 %v2063, %v65
    %v2070 = vmul.f32 %v2066, %v65
    %v2071 = vadd.f32 %v2067, 1e-05
    %v2072 = vadd.f32 %v2068, 1e-05
    %v2073 = vadd.f32 %v2069, 1e-05
    %v2074 = vadd.f32 %v2070, 1e-05
    %v2075 = vrsqrt.pop %v2071
    %v2076 = vrsqrt.pop %v2072
    %v2077 = vrsqrt.pop %v2073
    %v2078 = vrsqrt.pop %v2074
    %v2079 = vmul.f32 %v2047, %v2075
    %v2080 = vmul.f32 %v2048, %v2076
    %v2081 = vmul.f32 %v2049, %v2077
    %v2082 = vmul.f32 %v2050, %v2078
    %v2083 = vlaneseq
    %v2084 = vshrl.u32 %v2083, 7
    %v2085 = vsub.s32 0, %v2084
    %v2086 = vrot.slane %v2029, %v2085
    %v2087 = vmul.f32 %v2079, %v2086
    %v2088 = vmul.f32 %v2080, %v2086
    %v2089 = vmul.f32 %v2081, %v2086
    %v2090 = vmul.f32 %v2082, %v2086
    %v2091 = vlaneseq
    %v2092 = vshrl.u32 %v2091, 7
    %v2093 = vsub.s32 0, %v2092
    %v2094 = vrot.slane %v2030, %v2093
    %v2095 = vadd.f32 %v2087, %v2094
    %v2096 = vadd.f32 %v2088, %v2094
    %v2097 = vadd.f32 %v2089, %v2094
    %v2098 = vadd.f32 %v2090, %v2094
    %v2099 = vld [vmem:[%s2 + $0x18] sm:$0xff]
    %v2100 = vld [vmem:[%s2 + $0x40] sm:$0xff]
    %v2101 = vld [vmem:[%s2 + $0x68] sm:$0xff]
    %v2102 = vld [vmem:[%s2 + $0x90] sm:$0xff]
    %v2103 = vld [vmem:[#allocation5 + $0x6] sm:$0x1]
    %v2104 = vlaneseq
    %v2105 = vshrl.u32 %v2104, 7
    %v2106 = vsub.s32 0, %v2105
    %v2107 = vrot.slane %v2103, %v2106
    %v2109 = vsel %vm52, %v2095, 0
    %v2112 = vsel %vm52, %v2096, 0
    %v2115 = vsel %vm52, %v2097, 0
    %v2118 = vsel %vm52, %v2098, 0
    %2120 = vmatprep.subr.mxu0 0.0
    %2121 = vmatpush1.msra.mxu0 %v2099
    %2122 = vmatprep.subr.mxu0 0.0
    %2123 = vmatpush1.msra.mxu0 %v2100
    %2124 = vmatprep.subr.mxu0 0.0
    %2125 = vmatpush1.msra.mxu0 %v2101
    %2126 = vmatprep.subr.mxu0 0.0
    %2127 = vmatpush1.msra.mxu0 %v2102
    %2128 = vmatprep.subr.mxu0 0.0
    %2129 = vmatpush1.msra.mxu0 0.0
    %2130 = vmatprep.subr.mxu0 0.0
    %2131 = vmatpush1.msra.mxu0 0.0
    %2132 = vmatprep.subr.mxu0 0.0
    %2133 = vmatpush1.msra.mxu0 0.0
    %2134 = vmatprep.subr.mxu0 0.0
    %2135 = vmatpush1.msra.mxu0 0.0
    %2136 = vmatprep.subr.mxu0 0.0
    %2137 = vmatpush1.msra.mxu0 0.0
    %2138 = vmatprep.subr.mxu0 0.0
    %2139 = vmatpush1.msra.mxu0 0.0
    %2140 = vmatprep.subr.mxu0 0.0
    %2141 = vmatpush1.msra.mxu0 0.0
    %2142 = vmatprep.subr.mxu0 0.0
    %2143 = vmatpush1.msra.mxu0 0.0
    %2144 = vmatprep.subr.mxu0 0.0
    %2145 = vmatpush1.msra.mxu0 0.0
    %2146 = vmatprep.subr.mxu0 0.0
    %2147 = vmatpush1.msra.mxu0 0.0
    %2148 = vmatprep.subr.mxu0 0.0
    %2149 = vmatpush1.msra.mxu0 0.0
    %2150 = vmatprep.subr.mxu0 0.0
    %2151 = vmatpush1.msra.mxu0 0.0
    %2152 = vmatprep.subr.mxu0 0.0
    %2153 = vmatpush1.msra.mxu0 0.0
    %2154 = vmatprep.subr.mxu0 0.0
    %2155 = vmatpush1.msra.mxu0 0.0
    %2156 = vmatprep.subr.mxu0 0.0
    %2157 = vmatpush1.msra.mxu0 0.0
    %2158 = vmatprep.subr.mxu0 0.0
    %2159 = vmatpush1.msra.mxu0 0.0
    %2160 = vmatprep.subr.mxu0 0.0
    %2161 = vmatpush1.msra.mxu0 0.0
    %2162 = vmatprep.subr.mxu0 0.0
    %2163 = vmatpush1.msra.mxu0 0.0
    %2164 = vmatprep.subr.mxu0 0.0
    %2165 = vmatpush1.msra.mxu0 0.0
    %2166 = vmatprep.subr.mxu0 0.0
    %2167 = vmatpush1.msra.mxu0 0.0
    %2168 = vmatprep.subr.mxu0 0.0
    %2169 = vmatpush1.msra.mxu0 0.0
    %2170 = vmatprep.subr.mxu0 0.0
    %2171 = vmatpush1.msra.mxu0 0.0
    %2172 = vmatprep.subr.mxu0 0.0
    %2173 = vmatpush1.msra.mxu0 0.0
    %2174 = vmatprep.subr.mxu0 0.0
    %2175 = vmatpush1.msra.mxu0 0.0
    %2176 = vmatprep.subr.mxu0 0.0
    %2177 = vmatpush1.msra.mxu0 0.0
    %2178 = vmatprep.subr.mxu0 0.0
    %2179 = vmatpush1.msra.mxu0 0.0
    %2180 = vmatprep.subr.mxu0 0.0
    %2181 = vmatpush1.msra.mxu0 0.0
    %2182 = vmatprep.subr.mxu0 0.0
    %2183 = vmatpush1.msra.mxu0 0.0
    %2184 = vmatprep.mubr.f32.mxu0 0.0
    %2185 = vmatmul.mubr.f32.gmra.mrb[0].mxu0 %v2109
    %v2186 = vpop.f32.mrb[0].mxu0
    %v2187 = vadd.f32 %v2107, %v2186
    %v2188 = vpop.f32.mrb[0].mxu0
    %2189 = vmatprep.mubr.f32.mxu0 0.0
    %2190 = vmatmul.mubr.f32.gmra.mrb[0].mxu0 %v2112
    %v2191 = vpop.f32.mrb[0].mxu0
    %v2192 = vadd.f32 %v2107, %v2191
    %v2193 = vpop.f32.mrb[0].mxu0
    %2194 = vmatprep.mubr.f32.mxu0 0.0
    %2195 = vmatmul.mubr.f32.gmra.mrb[0].mxu0 %v2115
    %v2196 = vpop.f32.mrb[0].mxu0
    %v2197 = vadd.f32 %v2107, %v2196
    %v2198 = vpop.f32.mrb[0].mxu0
    %2199 = vmatprep.mubr.f32.mxu0 0.0
    %2200 = vmatmul.mubr.f32.gmra.mrb[0].mxu0 %v2118
    %v2201 = vpop.f32.mrb[0].mxu0
    %v2202 = vadd.f32 %v2107, %v2201
    %v2203 = vpop.f32.mrb[0].mxu0
    %2204 = vdwg.mxu0
    %v2205 = vsub.f32 0.0, %v2187
    %v2206 = vsub.f32 0.0, %v2192
    %v2207 = vsub.f32 0.0, %v2197
    %v2208 = vsub.f32 0.0, %v2202
    %v2209 = vmul.f32 %v2205, 1.442695
    %v2210 = vpow.pop %v2209
    %v2211 = vmul.f32 %v2206, 1.442695
    %v2212 = vpow.pop %v2211
    %v2213 = vmul.f32 %v2207, 1.442695
    %v2214 = vpow.pop %v2213
    %v2215 = vmul.f32 %v2208, 1.442695
    %v2216 = vpow.pop %v2215
    %v2217 = vadd.f32 %v2210, 1.0
    %v2218 = vadd.f32 %v2212, 1.0
    %v2219 = vadd.f32 %v2214, 1.0
    %v2220 = vadd.f32 %v2216, 1.0
    %v2221 = vrcp.pop %v2217
    %v2222 = vmul.f32 1.0, %v2221
    %v2223 = vrcp.pop %v2218
    %v2224 = vmul.f32 1.0, %v2223
    %v2225 = vrcp.pop %v2219
    %v2226 = vmul.f32 1.0, %v2225
    %v2227 = vrcp.pop %v2220
    %v2228 = vmul.f32 1.0, %v2227
    %2233 = vrot.lane.b32.xlu0 %v2222, 96
    %v2234 = vpop.permute.xlu0 %2233
    %2235 = vrot.lane.b32.xlu0 %v2224, 96
    %v2236 = vpop.permute.xlu0 %2235
    %2237 = vrot.lane.b32.xlu0 %v2226, 96
    %v2238 = vpop.permute.xlu0 %2237
    %2239 = vrot.lane.b32.xlu0 %v2228, 96
    %v2240 = vpop.permute.xlu0 %2239
    %v2245 = vmul.f32 %v2187, %v2234
    %v2246 = vmul.f32 %v2192, %v2236
    %v2247 = vmul.f32 %v2197, %v2238
    %v2248 = vmul.f32 %v2202, %v2240
    %v2249 = vld [vmem:[#allocation5 + $0xf] sm:$0xff]
    %v2250 = vld [vmem:[#allocation5 + $0x17] sm:$0xff]
    %v2251 = vld [vmem:[#allocation5 + $0x1f] sm:$0xff]
    %v2252 = vld [vmem:[#allocation5 + $0x27] sm:$0x7f]
    %v2253 = vlaneseq
    %v2254 = vshrl.u32 %v2253, 7
    %v2255 = vadd.s32 %v2254, 8
    %vm2258 = vcmask 1046528
    %v2259 = vrot.slane %v2247, 1
    %v2260 = vrot.slane %v2248, 1
    %v2261 = vsel %vm2258, %v2259, %v2260
    %v2266 = vrot.slane %v2245, 1
    %v2267 = vrot.slane %v2246, 1
    %v2268 = vsel %vm2258, %v2266, %v2267
    %v2269 = vsel %vm2258, %v2267, %v2259
    %v2273 = vsel %vm2258, %v2260, %v2266
    %vm2274 = vcmp.ge.s32.totalorder %v2254, 15
    %vm2275 = vcmp.ge.s32.totalorder %v2255, 15
    %vm2276 = vcmp.lt.s32.totalorder %v2254, 31
    %vm2277 = vcmp.lt.s32.totalorder %v2255, 31
    %vm2278 = vmand %vm2274, %vm2276
    %vm2279 = vmand %vm2275, %vm2277
    %v2280 = vsel %vm2278, 1, 0
    %v2281 = vsel %vm2279, 1, 0
    %vm2282 = vcmp.eq.s32.totalorder %v2280, 1
    %vm2283 = vcmp.eq.s32.totalorder %v2281, 1
    %v2284 = vsel %vm2282, %v2261, 0.0
    %v2285 = vsel %vm2283, %v2273, 0.0
    %v2286 = vsel %vm2282, %v2268, 0.0
    %v2287 = vsel %vm2283, %v2269, 0.0
    %v2288 = vlaneseq
    %v2289 = vshrl.u32 %v2288, 7
    %v2290 = vsub.s32 0, %v2289
    %v2291 = vrot.slane %v2249, %v2290
    %v2292 = vmul.f32 %v2284, %v2291
    %v2293 = vmul.f32 %v2285, %v2291
    %v2294 = vmul.f32 %v2286, %v2291
    %v2295 = vmul.f32 %v2287, %v2291
    %v2296 = vadd.f32 %v2292, 0.0
    %v2297 = vadd.f32 %v2293, 0.0
    %v2298 = vadd.f32 %v2294, 0.0
    %v2299 = vadd.f32 %v2295, 0.0
    %vm2300 = vcmask 1045504
    %v2301 = vrot.slane %v2247, 2
    %v2302 = vrot.slane %v2248, 2
    %v2303 = vsel %vm2300, %v2301, %v2302
    %v2306 = vrot.slane %v2245, 2
    %v2307 = vrot.slane %v2246, 2
    %v2308 = vsel %vm2300, %v2306, %v2307
    %v2309 = vsel %vm2300, %v2307, %v2301
    %v2313 = vsel %vm2300, %v2302, %v2306
    %vm2314 = vcmp.ge.s32.totalorder %v2254, 14
    %vm2315 = vcmp.ge.s32.totalorder %v2255, 14
    %vm2316 = vcmp.lt.s32.totalorder %v2254, 30
    %vm2317 = vcmp.lt.s32.totalorder %v2255, 30
    %vm2318 = vmand %vm2314, %vm2316
    %vm2319 = vmand %vm2315, %vm2317
    %v2320 = vsel %vm2318, 1, 0
    %v2321 = vsel %vm2319, 1, 0
    %vm2322 = vcmp.eq.s32.totalorder %v2320, 1
    %vm2323 = vcmp.eq.s32.totalorder %v2321, 1
    %v2324 = vsel %vm2322, %v2303, 0.0
    %v2325 = vsel %vm2323, %v2313, 0.0
    %v2326 = vsel %vm2322, %v2308, 0.0
    %v2327 = vsel %vm2323, %v2309, 0.0
    %v2328 = vlaneseq
    %v2329 = vshrl.u32 %v2328, 7
    %v2330 = vsub.s32 1, %v2329
    %v2331 = vrot.slane %v2249, %v2330
    %v2332 = vmul.f32 %v2324, %v2331
    %v2333 = vmul.f32 %v2325, %v2331
    %v2334 = vmul.f32 %v2326, %v2331
    %v2335 = vmul.f32 %v2327, %v2331
    %v2336 = vadd.f32 %v2296, %v2332
    %v2337 = vadd.f32 %v2297, %v2333
    %v2338 = vadd.f32 %v2298, %v2334
    %v2339 = vadd.f32 %v2299, %v2335
    %vm2340 = vcmask 1044480
    %v2341 = vrot.slane %v2247, 3
    %v2342 = vrot.slane %v2248, 3
    %v2343 = vsel %vm2340, %v2341, %v2342
    %v2346 = vrot.slane %v2245, 3
    %v2347 = vrot.slane %v2246, 3
    %v2348 = vsel %vm2340, %v2346, %v2347
    %v2349 = vsel %vm2340, %v2347, %v2341
    %v2353 = vsel %vm2340, %v2342, %v2346
    %vm2354 = vcmp.ge.s32.totalorder %v2254, 13
    %vm2355 = vcmp.ge.s32.totalorder %v2255, 13
    %vm2356 = vcmp.lt.s32.totalorder %v2254, 29
    %vm2357 = vcmp.lt.s32.totalorder %v2255, 29
    %vm2358 = vmand %vm2354, %vm2356
    %vm2359 = vmand %vm2355, %vm2357
    %v2360 = vsel %vm2358, 1, 0
    %v2361 = vsel %vm2359, 1, 0
    %vm2362 = vcmp.eq.s32.totalorder %v2360, 1
    %vm2363 = vcmp.eq.s32.totalorder %v2361, 1
    %v2364 = vsel %vm2362, %v2343, 0.0
    %v2365 = vsel %vm2363, %v2353, 0.0
    %v2366 = vsel %vm2362, %v2348, 0.0
    %v2367 = vsel %vm2363, %v2349, 0.0
    %v2368 = vlaneseq
    %v2369 = vshrl.u32 %v2368, 7
    %v2370 = vsub.s32 2, %v2369
    %v2371 = vrot.slane %v2249, %v2370
    %v2372 = vmul.f32 %v2364, %v2371
    %v2373 = vmul.f32 %v2365, %v2371
    %v2374 = vmul.f32 %v2366, %v2371
    %v2375 = vmul.f32 %v2367, %v2371
    %v2376 = vadd.f32 %v2336, %v2372
    %v2377 = vadd.f32 %v2337, %v2373
    %v2378 = vadd.f32 %v2338, %v2374
    %v2379 = vadd.f32 %v2339, %v2375
    %vm2380 = vcmask 1043456
    %v2381 = vrot.slane %v2247, 4
    %v2382 = vrot.slane %v2248, 4
    %v2383 = vsel %vm2380, %v2381, %v2382
    %v2386 = vrot.slane %v2245, 4
    %v2387 = vrot.slane %v2246, 4
    %v2388 = vsel %vm2380, %v2386, %v2387
    %v2389 = vsel %vm2380, %v2387, %v2381
    %v2393 = vsel %vm2380, %v2382, %v2386
    %vm2394 = vcmp.ge.s32.totalorder %v2254, 12
    %vm2395 = vcmp.ge.s32.totalorder %v2255, 12
    %vm2396 = vcmp.lt.s32.totalorder %v2254, 28
    %vm2397 = vcmp.lt.s32.totalorder %v2255, 28
    %vm2398 = vmand %vm2394, %vm2396
    %vm2399 = vmand %vm2395, %vm2397
    %v2400 = vsel %vm2398, 1, 0
    %v2401 = vsel %vm2399, 1, 0
    %vm2402 = vcmp.eq.s32.totalorder %v2400, 1
    %vm2403 = vcmp.eq.s32.totalorder %v2401, 1
    %v2404 = vsel %vm2402, %v2383, 0.0
    %v2405 = vsel %vm2403, %v2393, 0.0
    %v2406 = vsel %vm2402, %v2388, 0.0
    %v2407 = vsel %vm2403, %v2389, 0.0
    %v2408 = vlaneseq
    %v2409 = vshrl.u32 %v2408, 7
    %v2410 = vsub.s32 3, %v2409
    %v2411 = vrot.slane %v2249, %v2410
    %v2412 = vmul.f32 %v2404, %v2411
    %v2413 = vmul.f32 %v2405, %v2411
    %v2414 = vmul.f32 %v2406, %v2411
    %v2415 = vmul.f32 %v2407, %v2411
    %v2416 = vadd.f32 %v2376, %v2412
    %v2417 = vadd.f32 %v2377, %v2413
    %v2418 = vadd.f32 %v2378, %v2414
    %v2419 = vadd.f32 %v2379, %v2415
    %vm2420 = vcmask 1042432
    %v2421 = vrot.slane %v2247, 5
    %v2422 = vrot.slane %v2248, 5
    %v2423 = vsel %vm2420, %v2421, %v2422
    %v2426 = vrot.slane %v2245, 5
    %v2427 = vrot.slane %v2246, 5
    %v2428 = vsel %vm2420, %v2426, %v2427
    %v2429 = vsel %vm2420, %v2427, %v2421
    %v2433 = vsel %vm2420, %v2422, %v2426
    %vm2434 = vcmp.ge.s32.totalorder %v2254, 11
    %vm2435 = vcmp.ge.s32.totalorder %v2255, 11
    %vm2436 = vcmp.lt.s32.totalorder %v2254, 27
    %vm2437 = vcmp.lt.s32.totalorder %v2255, 27
    %vm2438 = vmand %vm2434, %vm2436
    %vm2439 = vmand %vm2435, %vm2437
    %v2440 = vsel %vm2438, 1, 0
    %v2441 = vsel %vm2439, 1, 0
    %vm2442 = vcmp.eq.s32.totalorder %v2440, 1
    %vm2443 = vcmp.eq.s32.totalorder %v2441, 1
    %v2444 = vsel %vm2442, %v2423, 0.0
    %v2445 = vsel %vm2443, %v2433, 0.0
    %v2446 = vsel %vm2442, %v2428, 0.0
    %v2447 = vsel %vm2443, %v2429, 0.0
    %v2448 = vlaneseq
    %v2449 = vshrl.u32 %v2448, 7
    %v2450 = vsub.s32 4, %v2449
    %v2451 = vrot.slane %v2249, %v2450
    %v2452 = vmul.f32 %v2444, %v2451
    %v2453 = vmul.f32 %v2445, %v2451
    %v2454 = vmul.f32 %v2446, %v2451
    %v2455 = vmul.f32 %v2447, %v2451
    %v2456 = vadd.f32 %v2416, %v2452
    %v2457 = vadd.f32 %v2417, %v2453
    %v2458 = vadd.f32 %v2418, %v2454
    %v2459 = vadd.f32 %v2419, %v2455
    %vm2460 = vcmask 1041408
    %v2461 = vrot.slane %v2247, 6
    %v2462 = vrot.slane %v2248, 6
    %v2463 = vsel %vm2460, %v2461, %v2462
    %v2466 = vrot.slane %v2245, 6
    %v2467 = vrot.slane %v2246, 6
    %v2468 = vsel %vm2460, %v2466, %v2467
    %v2469 = vsel %vm2460, %v2467, %v2461
    %v2473 = vsel %vm2460, %v2462, %v2466
    %vm2474 = vcmp.ge.s32.totalorder %v2254, 10
    %vm2475 = vcmp.ge.s32.totalorder %v2255, 10
    %vm2476 = vcmp.lt.s32.totalorder %v2254, 26
    %vm2477 = vcmp.lt.s32.totalorder %v2255, 26
    %vm2478 = vmand %vm2474, %vm2476
    %vm2479 = vmand %vm2475, %vm2477
    %v2480 = vsel %vm2478, 1, 0
    %v2481 = vsel %vm2479, 1, 0
    %vm2482 = vcmp.eq.s32.totalorder %v2480, 1
    %vm2483 = vcmp.eq.s32.totalorder %v2481, 1
    %v2484 = vsel %vm2482, %v2463, 0.0
    %v2485 = vsel %vm2483, %v2473, 0.0
    %v2486 = vsel %vm2482, %v2468, 0.0
    %v2487 = vsel %vm2483, %v2469, 0.0
    %v2488 = vlaneseq
    %v2489 = vshrl.u32 %v2488, 7
    %v2490 = vsub.s32 5, %v2489
    %v2491 = vrot.slane %v2249, %v2490
    %v2492 = vmul.f32 %v2484, %v2491
    %v2493 = vmul.f32 %v2485, %v2491
    %v2494 = vmul.f32 %v2486, %v2491
    %v2495 = vmul.f32 %v2487, %v2491
    %v2496 = vadd.f32 %v2456, %v2492
    %v2497 = vadd.f32 %v2457, %v2493
    %v2498 = vadd.f32 %v2458, %v2494
    %v2499 = vadd.f32 %v2459, %v2495
    %vm2500 = vcmask 1040384
    %v2501 = vrot.slane %v2247, 7
    %v2502 = vrot.slane %v2248, 7
    %v2503 = vsel %vm2500, %v2501, %v2502
    %v2506 = vrot.slane %v2245, 7
    %v2507 = vrot.slane %v2246, 7
    %v2508 = vsel %vm2500, %v2506, %v2507
    %v2509 = vsel %vm2500, %v2507, %v2501
    %v2513 = vsel %vm2500, %v2502, %v2506
    %vm2514 = vcmp.ge.s32.totalorder %v2254, 9
    %vm2515 = vcmp.ge.s32.totalorder %v2255, 9
    %vm2516 = vcmp.lt.s32.totalorder %v2254, 25
    %vm2517 = vcmp.lt.s32.totalorder %v2255, 25
    %vm2518 = vmand %vm2514, %vm2516
    %vm2519 = vmand %vm2515, %vm2517
    %v2520 = vsel %vm2518, 1, 0
    %v2521 = vsel %vm2519, 1, 0
    %vm2522 = vcmp.eq.s32.totalorder %v2520, 1
    %vm2523 = vcmp.eq.s32.totalorder %v2521, 1
    %v2524 = vsel %vm2522, %v2503, 0.0
    %v2525 = vsel %vm2523, %v2513, 0.0
    %v2526 = vsel %vm2522, %v2508, 0.0
    %v2527 = vsel %vm2523, %v2509, 0.0
    %v2528 = vlaneseq
    %v2529 = vshrl.u32 %v2528, 7
    %v2530 = vsub.s32 6, %v2529
    %v2531 = vrot.slane %v2249, %v2530
    %v2532 = vmul.f32 %v2524, %v2531
    %v2533 = vmul.f32 %v2525, %v2531
    %v2534 = vmul.f32 %v2526, %v2531
    %v2535 = vmul.f32 %v2527, %v2531
    %v2536 = vadd.f32 %v2496, %v2532
    %v2537 = vadd.f32 %v2497, %v2533
    %v2538 = vadd.f32 %v2498, %v2534
    %v2539 = vadd.f32 %v2499, %v2535
    %vm2540 = vcmp.ge.s32.totalorder %v2254, 8
    %vm2541 = vcmp.ge.s32.totalorder %v2255, 8
    %vm2542 = vcmp.lt.s32.totalorder %v2254, 24
    %vm2543 = vcmp.lt.s32.totalorder %v2255, 24
    %vm2544 = vmand %vm2540, %vm2542
    %vm2545 = vmand %vm2541, %vm2543
    %v2546 = vsel %vm2544, 1, 0
    %v2547 = vsel %vm2545, 1, 0
    %vm2548 = vcmp.eq.s32.totalorder %v2546, 1
    %vm2549 = vcmp.eq.s32.totalorder %v2547, 1
    %v2550 = vsel %vm2548, %v2248, 0.0
    %v2551 = vsel %vm2549, %v2245, 0.0
    %v2552 = vsel %vm2548, %v2246, 0.0
    %v2553 = vsel %vm2549, %v2247, 0.0
    %v2554 = vlaneseq
    %v2555 = vshrl.u32 %v2554, 7
    %v2556 = vsub.s32 7, %v2555
    %v2557 = vrot.slane %v2249, %v2556
    %v2558 = vmul.f32 %v2550, %v2557
    %v2559 = vmul.f32 %v2551, %v2557
    %v2560 = vmul.f32 %v2552, %v2557
    %v2561 = vmul.f32 %v2553, %v2557
    %v2562 = vadd.f32 %v2536, %v2558
    %v2563 = vadd.f32 %v2537, %v2559
    %v2564 = vadd.f32 %v2538, %v2560
    %v2565 = vadd.f32 %v2539, %v2561
    %vm2566 = vcmp.ge.s32.totalorder %v2254, 7
    %vm2567 = vcmp.ge.s32.totalorder %v2255, 7
    %vm2568 = vcmp.lt.s32.totalorder %v2254, 23
    %vm2569 = vcmp.lt.s32.totalorder %v2255, 23
    %vm2570 = vmand %vm2566, %vm2568
    %vm2571 = vmand %vm2567, %vm2569
    %v2572 = vsel %vm2570, 1, 0
    %v2573 = vsel %vm2571, 1, 0
    %vm2574 = vcmp.eq.s32.totalorder %v2572, 1
    %vm2575 = vcmp.eq.s32.totalorder %v2573, 1
    %v2576 = vsel %vm2574, %v2273, 0.0
    %v2577 = vsel %vm2575, %v2268, 0.0
    %v2578 = vsel %vm2574, %v2269, 0.0
    %v2579 = vsel %vm2575, %v2261, 0.0
    %v2580 = vlaneseq
    %v2581 = vshrl.u32 %v2580, 7
    %v2582 = vsub.s32 0, %v2581
    %v2583 = vrot.slane %v2250, %v2582
    %v2584 = vmul.f32 %v2576, %v2583
    %v2585 = vmul.f32 %v2577, %v2583
    %v2586 = vmul.f32 %v2578, %v2583
    %v2587 = vmul.f32 %v2579, %v2583
    %v2588 = vadd.f32 %v2562, %v2584
    %v2589 = vadd.f32 %v2563, %v2585
    %v2590 = vadd.f32 %v2564, %v2586
    %v2591 = vadd.f32 %v2565, %v2587
    %vm2592 = vcmp.ge.s32.totalorder %v2254, 6
    %vm2593 = vcmp.ge.s32.totalorder %v2255, 6
    %vm2594 = vcmp.lt.s32.totalorder %v2254, 22
    %vm2595 = vcmp.lt.s32.totalorder %v2255, 22
    %vm2596 = vmand %vm2592, %vm2594
    %vm2597 = vmand %vm2593, %vm2595
    %v2598 = vsel %vm2596, 1, 0
    %v2599 = vsel %vm2597, 1, 0
    %vm2600 = vcmp.eq.s32.totalorder %v2598, 1
    %vm2601 = vcmp.eq.s32.totalorder %v2599, 1
    %v2602 = vsel %vm2600, %v2313, 0.0
    %v2603 = vsel %vm2601, %v2308, 0.0
    %v2604 = vsel %vm2600, %v2309, 0.0
    %v2605 = vsel %vm2601, %v2303, 0.0
    %v2606 = vlaneseq
    %v2607 = vshrl.u32 %v2606, 7
    %v2608 = vsub.s32 1, %v2607
    %v2609 = vrot.slane %v2250, %v2608
    %v2610 = vmul.f32 %v2602, %v2609
    %v2611 = vmul.f32 %v2603, %v2609
    %v2612 = vmul.f32 %v2604, %v2609
    %v2613 = vmul.f32 %v2605, %v2609
    %v2614 = vadd.f32 %v2588, %v2610
    %v2615 = vadd.f32 %v2589, %v2611
    %v2616 = vadd.f32 %v2590, %v2612
    %v2617 = vadd.f32 %v2591, %v2613
    %vm2618 = vcmp.ge.s32.totalorder %v2254, 5
    %vm2619 = vcmp.ge.s32.totalorder %v2255, 5
    %vm2620 = vcmp.lt.s32.totalorder %v2254, 21
    %vm2621 = vcmp.lt.s32.totalorder %v2255, 21
    %vm2622 = vmand %vm2618, %vm2620
    %vm2623 = vmand %vm2619, %vm2621
    %v2624 = vsel %vm2622, 1, 0
    %v2625 = vsel %vm2623, 1, 0
    %vm2626 = vcmp.eq.s32.totalorder %v2624, 1
    %vm2627 = vcmp.eq.s32.totalorder %v2625, 1
    %v2628 = vsel %vm2626, %v2353, 0.0
    %v2629 = vsel %vm2627, %v2348, 0.0
    %v2630 = vsel %vm2626, %v2349, 0.0
    %v2631 = vsel %vm2627, %v2343, 0.0
    %v2632 = vlaneseq
    %v2633 = vshrl.u32 %v2632, 7
    %v2634 = vsub.s32 2, %v2633
    %v2635 = vrot.slane %v2250, %v2634
    %v2636 = vmul.f32 %v2628, %v2635
    %v2637 = vmul.f32 %v2629, %v2635
    %v2638 = vmul.f32 %v2630, %v2635
    %v2639 = vmul.f32 %v2631, %v2635
    %v2640 = vadd.f32 %v2614, %v2636
    %v2641 = vadd.f32 %v2615, %v2637
    %v2642 = vadd.f32 %v2616, %v2638
    %v2643 = vadd.f32 %v2617, %v2639
    %vm2644 = vcmp.ge.s32.totalorder %v2254, 4
    %vm2645 = vcmp.ge.s32.totalorder %v2255, 4
    %vm2646 = vcmp.lt.s32.totalorder %v2254, 20
    %vm2647 = vcmp.lt.s32.totalorder %v2255, 20
    %vm2648 = vmand %vm2644, %vm2646
    %vm2649 = vmand %vm2645, %vm2647
    %v2650 = vsel %vm2648, 1, 0
    %v2651 = vsel %vm2649, 1, 0
    %vm2652 = vcmp.eq.s32.totalorder %v2650, 1
    %vm2653 = vcmp.eq.s32.totalorder %v2651, 1
    %v2654 = vsel %vm2652, %v2393, 0.0
    %v2655 = vsel %vm2653, %v2388, 0.0
    %v2656 = vsel %vm2652, %v2389, 0.0
    %v2657 = vsel %vm2653, %v2383, 0.0
    %v2658 = vlaneseq
    %v2659 = vshrl.u32 %v2658, 7
    %v2660 = vsub.s32 3, %v2659
    %v2661 = vrot.slane %v2250, %v2660
    %v2662 = vmul.f32 %v2654, %v2661
    %v2663 = vmul.f32 %v2655, %v2661
    %v2664 = vmul.f32 %v2656, %v2661
    %v2665 = vmul.f32 %v2657, %v2661
    %v2666 = vadd.f32 %v2640, %v2662
    %v2667 = vadd.f32 %v2641, %v2663
    %v2668 = vadd.f32 %v2642, %v2664
    %v2669 = vadd.f32 %v2643, %v2665
    %vm2670 = vcmp.ge.s32.totalorder %v2254, 3
    %vm2671 = vcmp.ge.s32.totalorder %v2255, 3
    %vm2672 = vcmp.lt.s32.totalorder %v2254, 19
    %vm2673 = vcmp.lt.s32.totalorder %v2255, 19
    %vm2674 = vmand %vm2670, %vm2672
    %vm2675 = vmand %vm2671, %vm2673
    %v2676 = vsel %vm2674, 1, 0
    %v2677 = vsel %vm2675, 1, 0
    %vm2678 = vcmp.eq.s32.totalorder %v2676, 1
    %vm2679 = vcmp.eq.s32.totalorder %v2677, 1
    %v2680 = vsel %vm2678, %v2433, 0.0
    %v2681 = vsel %vm2679, %v2428, 0.0
    %v2682 = vsel %vm2678, %v2429, 0.0
    %v2683 = vsel %vm2679, %v2423, 0.0
    %v2684 = vlaneseq
    %v2685 = vshrl.u32 %v2684, 7
    %v2686 = vsub.s32 4, %v2685
    %v2687 = vrot.slane %v2250, %v2686
    %v2688 = vmul.f32 %v2680, %v2687
    %v2689 = vmul.f32 %v2681, %v2687
    %v2690 = vmul.f32 %v2682, %v2687
    %v2691 = vmul.f32 %v2683, %v2687
    %v2692 = vadd.f32 %v2666, %v2688
    %v2693 = vadd.f32 %v2667, %v2689
    %v2694 = vadd.f32 %v2668, %v2690
    %v2695 = vadd.f32 %v2669, %v2691
    %vm2696 = vcmp.ge.s32.totalorder %v2254, 2
    %vm2697 = vcmp.ge.s32.totalorder %v2255, 2
    %vm2698 = vcmp.lt.s32.totalorder %v2254, 18
    %vm2699 = vcmp.lt.s32.totalorder %v2255, 18
    %vm2700 = vmand %vm2696, %vm2698
    %vm2701 = vmand %vm2697, %vm2699
    %v2702 = vsel %vm2700, 1, 0
    %v2703 = vsel %vm2701, 1, 0
    %vm2704 = vcmp.eq.s32.totalorder %v2702, 1
    %vm2705 = vcmp.eq.s32.totalorder %v2703, 1
    %v2706 = vsel %vm2704, %v2473, 0.0
    %v2707 = vsel %vm2705, %v2468, 0.0
    %v2708 = vsel %vm2704, %v2469, 0.0
    %v2709 = vsel %vm2705, %v2463, 0.0
    %v2710 = vlaneseq
    %v2711 = vshrl.u32 %v2710, 7
    %v2712 = vsub.s32 5, %v2711
    %v2713 = vrot.slane %v2250, %v2712
    %v2714 = vmul.f32 %v2706, %v2713
    %v2715 = vmul.f32 %v2707, %v2713
    %v2716 = vmul.f32 %v2708, %v2713
    %v2717 = vmul.f32 %v2709, %v2713
    %v2718 = vadd.f32 %v2692, %v2714
    %v2719 = vadd.f32 %v2693, %v2715
    %v2720 = vadd.f32 %v2694, %v2716
    %v2721 = vadd.f32 %v2695, %v2717
    %vm2722 = vcmp.ge.s32.totalorder %v2254, 1
    %vm2723 = vcmp.ge.s32.totalorder %v2255, 1
    %vm2724 = vcmp.lt.s32.totalorder %v2254, 17
    %vm2725 = vcmp.lt.s32.totalorder %v2255, 17
    %vm2726 = vmand %vm2722, %vm2724
    %vm2727 = vmand %vm2723, %vm2725
    %v2728 = vsel %vm2726, 1, 0
    %v2729 = vsel %vm2727, 1, 0
    %vm2730 = vcmp.eq.s32.totalorder %v2728, 1
    %vm2731 = vcmp.eq.s32.totalorder %v2729, 1
    %v2732 = vsel %vm2730, %v2513, 0.0
    %v2733 = vsel %vm2731, %v2508, 0.0
    %v2734 = vsel %vm2730, %v2509, 0.0
    %v2735 = vsel %vm2731, %v2503, 0.0
    %v2736 = vlaneseq
    %v2737 = vshrl.u32 %v2736, 7
    %v2738 = vsub.s32 6, %v2737
    %v2739 = vrot.slane %v2250, %v2738
    %v2740 = vmul.f32 %v2732, %v2739
    %v2741 = vmul.f32 %v2733, %v2739
    %v2742 = vmul.f32 %v2734, %v2739
    %v2743 = vmul.f32 %v2735, %v2739
    %v2744 = vadd.f32 %v2718, %v2740
    %v2745 = vadd.f32 %v2719, %v2741
    %v2746 = vadd.f32 %v2720, %v2742
    %v2747 = vadd.f32 %v2721, %v2743
    %v2748 = vlaneseq
    %v2749 = vshrl.u32 %v2748, 7
    %v2750 = vsub.s32 7, %v2749
    %v2751 = vrot.slane %v2250, %v2750
    %v2752 = vmul.f32 %v2245, %v2751
    %v2753 = vmul.f32 %v2246, %v2751
    %v2754 = vmul.f32 %v2247, %v2751
    %v2755 = vmul.f32 %v2248, %v2751
    %v2756 = vadd.f32 %v2744, %v2752
    %v2757 = vadd.f32 %v2745, %v2753
    %v2758 = vadd.f32 %v2746, %v2754
    %v2759 = vadd.f32 %v2747, %v2755
    %vm2760 = vcmp.ge.s32.totalorder %v2254, 4294967295
    %vm2761 = vcmp.ge.s32.totalorder %v2255, 4294967295
    %vm2762 = vcmp.lt.s32.totalorder %v2254, 15
    %vm2763 = vcmp.lt.s32.totalorder %v2255, 15
    %vm2764 = vmand %vm2760, %vm2762
    %vm2765 = vmand %vm2761, %vm2763
    %v2766 = vsel %vm2764, 1, 0
    %v2767 = vsel %vm2765, 1, 0
    %vm2768 = vcmp.eq.s32.totalorder %v2766, 1
    %vm2769 = vcmp.eq.s32.totalorder %v2767, 1
    %v2770 = vsel %vm2768, %v2268, 0.0
    %v2771 = vsel %vm2769, %v2269, 0.0
    %v2772 = vsel %vm2768, %v2261, 0.0
    %v2773 = vsel %vm2769, %v2273, 0.0
    %v2774 = vlaneseq
    %v2775 = vshrl.u32 %v2774, 7
    %v2776 = vsub.s32 0, %v2775
    %v2777 = vrot.slane %v2251, %v2776
    %v2778 = vmul.f32 %v2770, %v2777
    %v2779 = vmul.f32 %v2771, %v2777
    %v2780 = vmul.f32 %v2772, %v2777
    %v2781 = vmul.f32 %v2773, %v2777
    %v2782 = vadd.f32 %v2756, %v2778
    %v2783 = vadd.f32 %v2757, %v2779
    %v2784 = vadd.f32 %v2758, %v2780
    %v2785 = vadd.f32 %v2759, %v2781
    %vm2786 = vcmp.ge.s32.totalorder %v2254, 4294967294
    %vm2787 = vcmp.ge.s32.totalorder %v2255, 4294967294
    %vm2788 = vcmp.lt.s32.totalorder %v2254, 14
    %vm2789 = vcmp.lt.s32.totalorder %v2255, 14
    %vm2790 = vmand %vm2786, %vm2788
    %vm2791 = vmand %vm2787, %vm2789
    %v2792 = vsel %vm2790, 1, 0
    %v2793 = vsel %vm2791, 1, 0
    %vm2794 = vcmp.eq.s32.totalorder %v2792, 1
    %vm2795 = vcmp.eq.s32.totalorder %v2793, 1
    %v2796 = vsel %vm2794, %v2308, 0.0
    %v2797 = vsel %vm2795, %v2309, 0.0
    %v2798 = vsel %vm2794, %v2303, 0.0
    %v2799 = vsel %vm2795, %v2313, 0.0
    %v2800 = vlaneseq
    %v2801 = vshrl.u32 %v2800, 7
    %v2802 = vsub.s32 1, %v2801
    %v2803 = vrot.slane %v2251, %v2802
    %v2804 = vmul.f32 %v2796, %v2803
    %v2805 = vmul.f32 %v2797, %v2803
    %v2806 = vmul.f32 %v2798, %v2803
    %v2807 = vmul.f32 %v2799, %v2803
    %v2808 = vadd.f32 %v2782, %v2804
    %v2809 = vadd.f32 %v2783, %v2805
    %v2810 = vadd.f32 %v2784, %v2806
    %v2811 = vadd.f32 %v2785, %v2807
    %vm2812 = vcmp.ge.s32.totalorder %v2254, 4294967293
    %vm2813 = vcmp.ge.s32.totalorder %v2255, 4294967293
    %vm2814 = vcmp.lt.s32.totalorder %v2254, 13
    %vm2815 = vcmp.lt.s32.totalorder %v2255, 13
    %vm2816 = vmand %vm2812, %vm2814
    %vm2817 = vmand %vm2813, %vm2815
    %v2818 = vsel %vm2816, 1, 0
    %v2819 = vsel %vm2817, 1, 0
    %vm2820 = vcmp.eq.s32.totalorder %v2818, 1
    %vm2821 = vcmp.eq.s32.totalorder %v2819, 1
    %v2822 = vsel %vm2820, %v2348, 0.0
    %v2823 = vsel %vm2821, %v2349, 0.0
    %v2824 = vsel %vm2820, %v2343, 0.0
    %v2825 = vsel %vm2821, %v2353, 0.0
    %v2826 = vlaneseq
    %v2827 = vshrl.u32 %v2826, 7
    %v2828 = vsub.s32 2, %v2827
    %v2829 = vrot.slane %v2251, %v2828
    %v2830 = vmul.f32 %v2822, %v2829
    %v2831 = vmul.f32 %v2823, %v2829
    %v2832 = vmul.f32 %v2824, %v2829
    %v2833 = vmul.f32 %v2825, %v2829
    %v2834 = vadd.f32 %v2808, %v2830
    %v2835 = vadd.f32 %v2809, %v2831
    %v2836 = vadd.f32 %v2810, %v2832
    %v2837 = vadd.f32 %v2811, %v2833
    %vm2838 = vcmp.ge.s32.totalorder %v2254, 4294967292
    %vm2839 = vcmp.ge.s32.totalorder %v2255, 4294967292
    %vm2840 = vcmp.lt.s32.totalorder %v2254, 12
    %vm2841 = vcmp.lt.s32.totalorder %v2255, 12
    %vm2842 = vmand %vm2838, %vm2840
    %vm2843 = vmand %vm2839, %vm2841
    %v2844 = vsel %vm2842, 1, 0
    %v2845 = vsel %vm2843, 1, 0
    %vm2846 = vcmp.eq.s32.totalorder %v2844, 1
    %vm2847 = vcmp.eq.s32.totalorder %v2845, 1
    %v2848 = vsel %vm2846, %v2388, 0.0
    %v2849 = vsel %vm2847, %v2389, 0.0
    %v2850 = vsel %vm2846, %v2383, 0.0
    %v2851 = vsel %vm2847, %v2393, 0.0
    %v2852 = vlaneseq
    %v2853 = vshrl.u32 %v2852, 7
    %v2854 = vsub.s32 3, %v2853
    %v2855 = vrot.slane %v2251, %v2854
    %v2856 = vmul.f32 %v2848, %v2855
    %v2857 = vmul.f32 %v2849, %v2855
    %v2858 = vmul.f32 %v2850, %v2855
    %v2859 = vmul.f32 %v2851, %v2855
    %v2860 = vadd.f32 %v2834, %v2856
    %v2861 = vadd.f32 %v2835, %v2857
    %v2862 = vadd.f32 %v2836, %v2858
    %v2863 = vadd.f32 %v2837, %v2859
    %vm2864 = vcmp.ge.s32.totalorder %v2254, 4294967291
    %vm2865 = vcmp.ge.s32.totalorder %v2255, 4294967291
    %vm2866 = vcmp.lt.s32.totalorder %v2254, 11
    %vm2867 = vcmp.lt.s32.totalorder %v2255, 11
    %vm2868 = vmand %vm2864, %vm2866
    %vm2869 = vmand %vm2865, %vm2867
    %v2870 = vsel %vm2868, 1, 0
    %v2871 = vsel %vm2869, 1, 0
    %vm2872 = vcmp.eq.s32.totalorder %v2870, 1
    %vm2873 = vcmp.eq.s32.totalorder %v2871, 1
    %v2874 = vsel %vm2872, %v2428, 0.0
    %v2875 = vsel %vm2873, %v2429, 0.0
    %v2876 = vsel %vm2872, %v2423, 0.0
    %v2877 = vsel %vm2873, %v2433, 0.0
    %v2878 = vlaneseq
    %v2879 = vshrl.u32 %v2878, 7
    %v2880 = vsub.s32 4, %v2879
    %v2881 = vrot.slane %v2251, %v2880
    %v2882 = vmul.f32 %v2874, %v2881
    %v2883 = vmul.f32 %v2875, %v2881
    %v2884 = vmul.f32 %v2876, %v2881
    %v2885 = vmul.f32 %v2877, %v2881
    %v2886 = vadd.f32 %v2860, %v2882
    %v2887 = vadd.f32 %v2861, %v2883
    %v2888 = vadd.f32 %v2862, %v2884
    %v2889 = vadd.f32 %v2863, %v2885
    %vm2890 = vcmp.ge.s32.totalorder %v2254, 4294967290
    %vm2891 = vcmp.ge.s32.totalorder %v2255, 4294967290
    %vm2892 = vcmp.lt.s32.totalorder %v2254, 10
    %vm2893 = vcmp.lt.s32.totalorder %v2255, 10
    %vm2894 = vmand %vm2890, %vm2892
    %vm2895 = vmand %vm2891, %vm2893
    %v2896 = vsel %vm2894, 1, 0
    %v2897 = vsel %vm2895, 1, 0
    %vm2898 = vcmp.eq.s32.totalorder %v2896, 1
    %vm2899 = vcmp.eq.s32.totalorder %v2897, 1
    %v2900 = vsel %vm2898, %v2468, 0.0
    %v2901 = vsel %vm2899, %v2469, 0.0
    %v2902 = vsel %vm2898, %v2463, 0.0
    %v2903 = vsel %vm2899, %v2473, 0.0
    %v2904 = vlaneseq
    %v2905 = vshrl.u32 %v2904, 7
    %v2906 = vsub.s32 5, %v2905
    %v2907 = vrot.slane %v2251, %v2906
    %v2908 = vmul.f32 %v2900, %v2907
    %v2909 = vmul.f32 %v2901, %v2907
    %v2910 = vmul.f32 %v2902, %v2907
    %v2911 = vmul.f32 %v2903, %v2907
    %v2912 = vadd.f32 %v2886, %v2908
    %v2913 = vadd.f32 %v2887, %v2909
    %v2914 = vadd.f32 %v2888, %v2910
    %v2915 = vadd.f32 %v2889, %v2911
    %vm2916 = vcmp.ge.s32.totalorder %v2254, 4294967289
    %vm2917 = vcmp.ge.s32.totalorder %v2255, 4294967289
    %vm2918 = vcmp.lt.s32.totalorder %v2254, 9
    %vm2919 = vcmp.lt.s32.totalorder %v2255, 9
    %vm2920 = vmand %vm2916, %vm2918
    %vm2921 = vmand %vm2917, %vm2919
    %v2922 = vsel %vm2920, 1, 0
    %v2923 = vsel %vm2921, 1, 0
    %vm2924 = vcmp.eq.s32.totalorder %v2922, 1
    %vm2925 = vcmp.eq.s32.totalorder %v2923, 1
    %v2926 = vsel %vm2924, %v2508, 0.0
    %v2927 = vsel %vm2925, %v2509, 0.0
    %v2928 = vsel %vm2924, %v2503, 0.0
    %v2929 = vsel %vm2925, %v2513, 0.0
    %v2930 = vlaneseq
    %v2931 = vshrl.u32 %v2930, 7
    %v2932 = vsub.s32 6, %v2931
    %v2933 = vrot.slane %v2251, %v2932
    %v2934 = vmul.f32 %v2926, %v2933
    %v2935 = vmul.f32 %v2927, %v2933
    %v2936 = vmul.f32 %v2928, %v2933
    %v2937 = vmul.f32 %v2929, %v2933
    %v2938 = vadd.f32 %v2912, %v2934
    %v2939 = vadd.f32 %v2913, %v2935
    %v2940 = vadd.f32 %v2914, %v2936
    %v2941 = vadd.f32 %v2915, %v2937
    %vm2942 = vcmp.ge.s32.totalorder %v2254, 4294967288
    %vm2943 = vcmp.ge.s32.totalorder %v2255, 4294967288
    %vm2944 = vcmp.lt.s32.totalorder %v2254, 8
    %vm2945 = vcmp.lt.s32.totalorder %v2255, 8
    %vm2946 = vmand %vm2942, %vm2944
    %vm2947 = vmand %vm2943, %vm2945
    %v2948 = vsel %vm2946, 1, 0
    %v2949 = vsel %vm2947, 1, 0
    %vm2950 = vcmp.eq.s32.totalorder %v2948, 1
    %vm2951 = vcmp.eq.s32.totalorder %v2949, 1
    %v2952 = vsel %vm2950, %v2246, 0.0
    %v2953 = vsel %vm2951, %v2247, 0.0
    %v2954 = vsel %vm2950, %v2248, 0.0
    %v2955 = vsel %vm2951, %v2245, 0.0
    %v2956 = vlaneseq
    %v2957 = vshrl.u32 %v2956, 7
    %v2958 = vsub.s32 7, %v2957
    %v2959 = vrot.slane %v2251, %v2958
    %v2960 = vmul.f32 %v2952, %v2959
    %v2961 = vmul.f32 %v2953, %v2959
    %v2962 = vmul.f32 %v2954, %v2959
    %v2963 = vmul.f32 %v2955, %v2959
    %v2964 = vadd.f32 %v2938, %v2960
    %v2965 = vadd.f32 %v2939, %v2961
    %v2966 = vadd.f32 %v2940, %v2962
    %v2967 = vadd.f32 %v2941, %v2963
    %vm2968 = vcmp.ge.s32.totalorder %v2254, 4294967287
    %vm2969 = vcmp.ge.s32.totalorder %v2255, 4294967287
    %vm2970 = vcmp.lt.s32.totalorder %v2254, 7
    %vm2971 = vcmp.lt.s32.totalorder %v2255, 7
    %vm2972 = vmand %vm2968, %vm2970
    %vm2973 = vmand %vm2969, %vm2971
    %v2974 = vsel %vm2972, 1, 0
    %v2975 = vsel %vm2973, 1, 0
    %vm2976 = vcmp.eq.s32.totalorder %v2974, 1
    %vm2977 = vcmp.eq.s32.totalorder %v2975, 1
    %v2978 = vsel %vm2976, %v2269, 0.0
    %v2979 = vsel %vm2977, %v2261, 0.0
    %v2980 = vsel %vm2976, %v2273, 0.0
    %v2981 = vsel %vm2977, %v2268, 0.0
    %v2982 = vlaneseq
    %v2983 = vshrl.u32 %v2982, 7
    %v2984 = vsub.s32 0, %v2983
    %v2985 = vrot.slane %v2252, %v2984
    %v2986 = vmul.f32 %v2978, %v2985
    %v2987 = vmul.f32 %v2979, %v2985
    %v2988 = vmul.f32 %v2980, %v2985
    %v2989 = vmul.f32 %v2981, %v2985
    %v2990 = vadd.f32 %v2964, %v2986
    %v2991 = vadd.f32 %v2965, %v2987
    %v2992 = vadd.f32 %v2966, %v2988
    %v2993 = vadd.f32 %v2967, %v2989
    %vm2994 = vcmp.ge.s32.totalorder %v2254, 4294967286
    %vm2995 = vcmp.ge.s32.totalorder %v2255, 4294967286
    %vm2996 = vcmp.lt.s32.totalorder %v2254, 6
    %vm2997 = vcmp.lt.s32.totalorder %v2255, 6
    %vm2998 = vmand %vm2994, %vm2996
    %vm2999 = vmand %vm2995, %vm2997
    %v3000 = vsel %vm2998, 1, 0
    %v3001 = vsel %vm2999, 1, 0
    %vm3002 = vcmp.eq.s32.totalorder %v3000, 1
    %vm3003 = vcmp.eq.s32.totalorder %v3001, 1
    %v3004 = vsel %vm3002, %v2309, 0.0
    %v3005 = vsel %vm3003, %v2303, 0.0
    %v3006 = vsel %vm3002, %v2313, 0.0
    %v3007 = vsel %vm3003, %v2308, 0.0
    %v3008 = vlaneseq
    %v3009 = vshrl.u32 %v3008, 7
    %v3010 = vsub.s32 1, %v3009
    %v3011 = vrot.slane %v2252, %v3010
    %v3012 = vmul.f32 %v3004, %v3011
    %v3013 = vmul.f32 %v3005, %v3011
    %v3014 = vmul.f32 %v3006, %v3011
    %v3015 = vmul.f32 %v3007, %v3011
    %v3016 = vadd.f32 %v2990, %v3012
    %v3017 = vadd.f32 %v2991, %v3013
    %v3018 = vadd.f32 %v2992, %v3014
    %v3019 = vadd.f32 %v2993, %v3015
    %vm3020 = vcmp.ge.s32.totalorder %v2254, 4294967285
    %vm3021 = vcmp.ge.s32.totalorder %v2255, 4294967285
    %vm3022 = vcmp.lt.s32.totalorder %v2254, 5
    %vm3023 = vcmp.lt.s32.totalorder %v2255, 5
    %vm3024 = vmand %vm3020, %vm3022
    %vm3025 = vmand %vm3021, %vm3023
    %v3026 = vsel %vm3024, 1, 0
    %v3027 = vsel %vm3025, 1, 0
    %vm3028 = vcmp.eq.s32.totalorder %v3026, 1
    %vm3029 = vcmp.eq.s32.totalorder %v3027, 1
    %v3030 = vsel %vm3028, %v2349, 0.0
    %v3031 = vsel %vm3029, %v2343, 0.0
    %v3032 = vsel %vm3028, %v2353, 0.0
    %v3033 = vsel %vm3029, %v2348, 0.0
    %v3034 = vlaneseq
    %v3035 = vshrl.u32 %v3034, 7
    %v3036 = vsub.s32 2, %v3035
    %v3037 = vrot.slane %v2252, %v3036
    %v3038 = vmul.f32 %v3030, %v3037
    %v3039 = vmul.f32 %v3031, %v3037
    %v3040 = vmul.f32 %v3032, %v3037
    %v3041 = vmul.f32 %v3033, %v3037
    %v3042 = vadd.f32 %v3016, %v3038
    %v3043 = vadd.f32 %v3017, %v3039
    %v3044 = vadd.f32 %v3018, %v3040
    %v3045 = vadd.f32 %v3019, %v3041
    %vm3046 = vcmp.ge.s32.totalorder %v2254, 4294967284
    %vm3047 = vcmp.ge.s32.totalorder %v2255, 4294967284
    %vm3048 = vcmp.lt.s32.totalorder %v2254, 4
    %vm3049 = vcmp.lt.s32.totalorder %v2255, 4
    %vm3050 = vmand %vm3046, %vm3048
    %vm3051 = vmand %vm3047, %vm3049
    %v3052 = vsel %vm3050, 1, 0
    %v3053 = vsel %vm3051, 1, 0
    %vm3054 = vcmp.eq.s32.totalorder %v3052, 1
    %vm3055 = vcmp.eq.s32.totalorder %v3053, 1
    %v3056 = vsel %vm3054, %v2389, 0.0
    %v3057 = vsel %vm3055, %v2383, 0.0
    %v3058 = vsel %vm3054, %v2393, 0.0
    %v3059 = vsel %vm3055, %v2388, 0.0
    %v3060 = vlaneseq
    %v3061 = vshrl.u32 %v3060, 7
    %v3062 = vsub.s32 3, %v3061
    %v3063 = vrot.slane %v2252, %v3062
    %v3064 = vmul.f32 %v3056, %v3063
    %v3065 = vmul.f32 %v3057, %v3063
    %v3066 = vmul.f32 %v3058, %v3063
    %v3067 = vmul.f32 %v3059, %v3063
    %v3068 = vadd.f32 %v3042, %v3064
    %v3069 = vadd.f32 %v3043, %v3065
    %v3070 = vadd.f32 %v3044, %v3066
    %v3071 = vadd.f32 %v3045, %v3067
    %vm3072 = vcmp.ge.s32.totalorder %v2254, 4294967283
    %vm3073 = vcmp.ge.s32.totalorder %v2255, 4294967283
    %vm3074 = vcmp.lt.s32.totalorder %v2254, 3
    %vm3075 = vcmp.lt.s32.totalorder %v2255, 3
    %vm3076 = vmand %vm3072, %vm3074
    %vm3077 = vmand %vm3073, %vm3075
    %v3078 = vsel %vm3076, 1, 0
    %v3079 = vsel %vm3077, 1, 0
    %vm3080 = vcmp.eq.s32.totalorder %v3078, 1
    %vm3081 = vcmp.eq.s32.totalorder %v3079, 1
    %v3082 = vsel %vm3080, %v2429, 0.0
    %v3083 = vsel %vm3081, %v2423, 0.0
    %v3084 = vsel %vm3080, %v2433, 0.0
    %v3085 = vsel %vm3081, %v2428, 0.0
    %v3086 = vlaneseq
    %v3087 = vshrl.u32 %v3086, 7
    %v3088 = vsub.s32 4, %v3087
    %v3089 = vrot.slane %v2252, %v3088
    %v3090 = vmul.f32 %v3082, %v3089
    %v3091 = vmul.f32 %v3083, %v3089
    %v3092 = vmul.f32 %v3084, %v3089
    %v3093 = vmul.f32 %v3085, %v3089
    %v3094 = vadd.f32 %v3068, %v3090
    %v3095 = vadd.f32 %v3069, %v3091
    %v3096 = vadd.f32 %v3070, %v3092
    %v3097 = vadd.f32 %v3071, %v3093
    %vm3098 = vcmp.ge.s32.totalorder %v2254, 4294967282
    %vm3099 = vcmp.ge.s32.totalorder %v2255, 4294967282
    %vm3100 = vcmp.lt.s32.totalorder %v2254, 2
    %vm3101 = vcmp.lt.s32.totalorder %v2255, 2
    %vm3102 = vmand %vm3098, %vm3100
    %vm3103 = vmand %vm3099, %vm3101
    %v3104 = vsel %vm3102, 1, 0
    %v3105 = vsel %vm3103, 1, 0
    %vm3106 = vcmp.eq.s32.totalorder %v3104, 1
    %vm3107 = vcmp.eq.s32.totalorder %v3105, 1
    %v3108 = vsel %vm3106, %v2469, 0.0
    %v3109 = vsel %vm3107, %v2463, 0.0
    %v3110 = vsel %vm3106, %v2473, 0.0
    %v3111 = vsel %vm3107, %v2468, 0.0
    %v3112 = vlaneseq
    %v3113 = vshrl.u32 %v3112, 7
    %v3114 = vsub.s32 5, %v3113
    %v3115 = vrot.slane %v2252, %v3114
    %v3116 = vmul.f32 %v3108, %v3115
    %v3117 = vmul.f32 %v3109, %v3115
    %v3118 = vmul.f32 %v3110, %v3115
    %v3119 = vmul.f32 %v3111, %v3115
    %v3120 = vadd.f32 %v3094, %v3116
    %v3121 = vadd.f32 %v3095, %v3117
    %v3122 = vadd.f32 %v3096, %v3118
    %v3123 = vadd.f32 %v3097, %v3119
    %vm3124 = vcmp.ge.s32.totalorder %v2254, 4294967281
    %vm3125 = vcmp.ge.s32.totalorder %v2255, 4294967281
    %vm3126 = vcmp.lt.s32.totalorder %v2254, 1
    %vm3127 = vcmp.lt.s32.totalorder %v2255, 1
    %vm3128 = vmand %vm3124, %vm3126
    %vm3129 = vmand %vm3125, %vm3127
    %v3130 = vsel %vm3128, 1, 0
    %v3131 = vsel %vm3129, 1, 0
    %vm3132 = vcmp.eq.s32.totalorder %v3130, 1
    %vm3133 = vcmp.eq.s32.totalorder %v3131, 1
    %v3134 = vsel %vm3132, %v2509, 0.0
    %v3135 = vsel %vm3133, %v2503, 0.0
    %v3136 = vsel %vm3132, %v2513, 0.0
    %v3137 = vsel %vm3133, %v2508, 0.0
    %v3138 = vlaneseq
    %v3139 = vshrl.u32 %v3138, 7
    %v3140 = vsub.s32 6, %v3139
    %v3141 = vrot.slane %v2252, %v3140
    %v3142 = vmul.f32 %v3134, %v3141
    %v3143 = vmul.f32 %v3135, %v3141
    %v3144 = vmul.f32 %v3136, %v3141
    %v3145 = vmul.f32 %v3137, %v3141
    %v3146 = vadd.f32 %v3120, %v3142
    %v3147 = vadd.f32 %v3121, %v3143
    %v3148 = vadd.f32 %v3122, %v3144
    %v3149 = vadd.f32 %v3123, %v3145
    %v3150 = vld [vmem:[#allocation5 + $0x7] sm:$0x1]
    %v3151 = vlaneseq
    %v3152 = vshrl.u32 %v3151, 7
    %v3153 = vsub.s32 0, %v3152
    %v3154 = vrot.slane %v3150, %v3153
    %v3155 = vadd.f32 %v3146, %v3154
    %v3156 = vadd.f32 %v3147, %v3154
    %v3157 = vadd.f32 %v3148, %v3154
    %v3158 = vadd.f32 %v3149, %v3154
    %v3159 = vsel %vm52, %v3155, 0.0
    %v3160 = vsel %vm52, %v3156, 0.0
    %v3161 = vadd.f32 %v3159, %v3160
    %v3162 = vsel %vm52, %v3157, 0.0
    %v3163 = vadd.f32 %v3161, %v3162
    %v3164 = vsel %vm52, %v3158, 0.0
    %v3165 = vadd.f32 %v3163, %v3164
    %v3166 = vrot.slane %v3165, 4
    %v3167 = vadd.f32 %v3165, %v3166
    %v3168 = vrot.slane %v3167, 2
    %v3169 = vadd.f32 %v3167, %v3168
    %v3170 = vrot.slane %v3169, 1
    %v3171 = vadd.f32 %v3169, %v3170
    %v3172 = vmul.f32 %v3171, %v65
    %v3173 = vsub.f32 %v3155, %v3172
    %v3174 = vsub.f32 %v3156, %v3172
    %v3175 = vsub.f32 %v3157, %v3172
    %v3176 = vsub.f32 %v3158, %v3172
    %v3177 = vmul.f32 %v3173, %v3173
    %v3178 = vmul.f32 %v3174, %v3174
    %v3179 = vmul.f32 %v3175, %v3175
    %v3180 = vmul.f32 %v3176, %v3176
    %v3181 = vsel %vm52, %v3177, 0.0
    %v3182 = vsel %vm52, %v3178, 0.0
    %v3183 = vadd.f32 %v3181, %v3182
    %v3184 = vsel %vm52, %v3179, 0.0
    %v3185 = vadd.f32 %v3183, %v3184
    %v3186 = vsel %vm52, %v3180, 0.0
    %v3187 = vadd.f32 %v3185, %v3186
    %v3188 = vrot.slane %v3187, 4
    %v3189 = vadd.f32 %v3187, %v3188
    %v3190 = vrot.slane %v3189, 2
    %v3191 = vadd.f32 %v3189, %v3190
    %v3192 = vrot.slane %v3191, 1
    %v3193 = vadd.f32 %v3191, %v3192
    %v3194 = vmul.f32 %v3193, %v65
    %v3195 = vadd.f32 %v3194, 1e-05
    %v3196 = vrsqrt.pop %v3195
    %v3197 = vmul.f32 %v3173, %v3196
    %v3198 = vmul.f32 %v3174, %v3196
    %v3199 = vmul.f32 %v3175, %v3196
    %v3200 = vmul.f32 %v3176, %v3196
    %v3201 = vld [vmem:[#allocation5 + $0x8] sm:$0x1]
    %v3202 = vlaneseq
    %v3203 = vshrl.u32 %v3202, 7
    %v3204 = vsub.s32 0, %v3203
    %v3205 = vrot.slane %v3201, %v3204
    %v3206 = vmul.f32 %v3197, %v3205
    %v3207 = vmul.f32 %v3198, %v3205
    %v3208 = vmul.f32 %v3199, %v3205
    %v3209 = vmul.f32 %v3200, %v3205
    %v3210 = vld [vmem:[#allocation5 + $0x9] sm:$0x1]
    %v3211 = vlaneseq
    %v3212 = vshrl.u32 %v3211, 7
    %v3213 = vsub.s32 0, %v3212
    %v3214 = vrot.slane %v3210, %v3213
    %v3215 = vadd.f32 %v3206, %v3214
    %v3216 = vadd.f32 %v3207, %v3214
    %v3217 = vadd.f32 %v3208, %v3214
    %v3218 = vadd.f32 %v3209, %v3214
    %v3219 = vsub.f32 0.0, %v3215
    %v3220 = vsub.f32 0.0, %v3216
    %v3221 = vsub.f32 0.0, %v3217
    %v3222 = vsub.f32 0.0, %v3218
    %v3223 = vmul.f32 %v3219, 1.442695
    %v3224 = vpow.pop %v3223
    %v3225 = vmul.f32 %v3220, 1.442695
    %v3226 = vpow.pop %v3225
    %v3227 = vmul.f32 %v3221, 1.442695
    %v3228 = vpow.pop %v3227
    %v3229 = vmul.f32 %v3222, 1.442695
    %v3230 = vpow.pop %v3229
    %v3231 = vadd.f32 %v3224, 1.0
    %v3232 = vadd.f32 %v3226, 1.0
    %v3233 = vadd.f32 %v3228, 1.0
    %v3234 = vadd.f32 %v3230, 1.0
    %v3235 = vrcp.pop %v3231
    %v3236 = vmul.f32 1.0, %v3235
    %v3237 = vrcp.pop %v3232
    %v3238 = vmul.f32 1.0, %v3237
    %v3239 = vrcp.pop %v3233
    %v3240 = vmul.f32 1.0, %v3239
    %v3241 = vrcp.pop %v3234
    %v3242 = vmul.f32 1.0, %v3241
    %v3243 = vmul.f32 %v3215, %v3236
    %v3244 = vmul.f32 %v3216, %v3238
    %v3245 = vmul.f32 %v3217, %v3240
    %v3246 = vmul.f32 %v3218, %v3242
    %v3247 = vld [vmem:[%s2 + $0x20] sm:$0xff]
    %v3248 = vld [vmem:[%s2 + $0x48] sm:$0xff]
    %v3249 = vld [vmem:[%s2 + $0x70] sm:$0xff]
    %v3250 = vld [vmem:[%s2 + $0x98] sm:$0xff]
    %v3252 = vsel %vm52, %v3243, 0
    %v3255 = vsel %vm52, %v3244, 0
    %v3258 = vsel %vm52, %v3245, 0
    %v3261 = vsel %vm52, %v3246, 0
    %3263 = vmatprep.subr.mxu0 0.0
    %3264 = vmatpush1.msra.mxu0 %v3247
    %3265 = vmatprep.subr.mxu0 0.0
    %3266 = vmatpush1.msra.mxu0 %v3248
    %3267 = vmatprep.subr.mxu0 0.0
    %3268 = vmatpush1.msra.mxu0 %v3249
    %3269 = vmatprep.subr.mxu0 0.0
    %3270 = vmatpush1.msra.mxu0 %v3250
    %3271 = vmatprep.subr.mxu0 0.0
    %3272 = vmatpush1.msra.mxu0 0.0
    %3273 = vmatprep.subr.mxu0 0.0
    %3274 = vmatpush1.msra.mxu0 0.0
    %3275 = vmatprep.subr.mxu0 0.0
    %3276 = vmatpush1.msra.mxu0 0.0
    %3277 = vmatprep.subr.mxu0 0.0
    %3278 = vmatpush1.msra.mxu0 0.0
    %3279 = vmatprep.subr.mxu0 0.0
    %3280 = vmatpush1.msra.mxu0 0.0
    %3281 = vmatprep.subr.mxu0 0.0
    %3282 = vmatpush1.msra.mxu0 0.0
    %3283 = vmatprep.subr.mxu0 0.0
    %3284 = vmatpush1.msra.mxu0 0.0
    %3285 = vmatprep.subr.mxu0 0.0
    %3286 = vmatpush1.msra.mxu0 0.0
    %3287 = vmatprep.subr.mxu0 0.0
    %3288 = vmatpush1.msra.mxu0 0.0
    %3289 = vmatprep.subr.mxu0 0.0
    %3290 = vmatpush1.msra.mxu0 0.0
    %3291 = vmatprep.subr.mxu0 0.0
    %3292 = vmatpush1.msra.mxu0 0.0
    %3293 = vmatprep.subr.mxu0 0.0
    %3294 = vmatpush1.msra.mxu0 0.0
    %3295 = vmatprep.subr.mxu0 0.0
    %3296 = vmatpush1.msra.mxu0 0.0
    %3297 = vmatprep.subr.mxu0 0.0
    %3298 = vmatpush1.msra.mxu0 0.0
    %3299 = vmatprep.subr.mxu0 0.0
    %3300 = vmatpush1.msra.mxu0 0.0
    %3301 = vmatprep.subr.mxu0 0.0
    %3302 = vmatpush1.msra.mxu0 0.0
    %3303 = vmatprep.subr.mxu0 0.0
    %3304 = vmatpush1.msra.mxu0 0.0
    %3305 = vmatprep.subr.mxu0 0.0
    %3306 = vmatpush1.msra.mxu0 0.0
    %3307 = vmatprep.subr.mxu0 0.0
    %3308 = vmatpush1.msra.mxu0 0.0
    %3309 = vmatprep.subr.mxu0 0.0
    %3310 = vmatpush1.msra.mxu0 0.0
    %3311 = vmatprep.subr.mxu0 0.0
    %3312 = vmatpush1.msra.mxu0 0.0
    %3313 = vmatprep.subr.mxu0 0.0
    %3314 = vmatpush1.msra.mxu0 0.0
    %3315 = vmatprep.subr.mxu0 0.0
    %3316 = vmatpush1.msra.mxu0 0.0
    %3317 = vmatprep.subr.mxu0 0.0
    %3318 = vmatpush1.msra.mxu0 0.0
    %3319 = vmatprep.subr.mxu0 0.0
    %3320 = vmatpush1.msra.mxu0 0.0
    %3321 = vmatprep.subr.mxu0 0.0
    %3322 = vmatpush1.msra.mxu0 0.0
    %3323 = vmatprep.subr.mxu0 0.0
    %3324 = vmatpush1.msra.mxu0 0.0
    %3325 = vmatprep.subr.mxu0 0.0
    %3326 = vmatpush1.msra.mxu0 0.0
    %3327 = vmatprep.mubr.f32.mxu0 0.0
    %3328 = vmatmul.mubr.f32.gmra.mrb[0].mxu0 %v3252
    %v3329 = vpop.f32.mrb[0].mxu0
    %v3330 = vadd.f32 0.0, %v3329
    %v3331 = vpop.f32.mrb[0].mxu0
    %3332 = vmatprep.mubr.f32.mxu0 0.0
    %3333 = vmatmul.mubr.f32.gmra.mrb[0].mxu0 %v3255
    %v3334 = vpop.f32.mrb[0].mxu0
    %v3335 = vadd.f32 0.0, %v3334
    %v3336 = vpop.f32.mrb[0].mxu0
    %3337 = vmatprep.mubr.f32.mxu0 0.0
    %3338 = vmatmul.mubr.f32.gmra.mrb[0].mxu0 %v3258
    %v3339 = vpop.f32.mrb[0].mxu0
    %v3340 = vadd.f32 0.0, %v3339
    %v3341 = vpop.f32.mrb[0].mxu0
    %3342 = vmatprep.mubr.f32.mxu0 0.0
    %3343 = vmatmul.mubr.f32.gmra.mrb[0].mxu0 %v3261
    %v3344 = vpop.f32.mrb[0].mxu0
    %v3345 = vadd.f32 0.0, %v3344
    %v3346 = vpop.f32.mrb[0].mxu0
    %3347 = vdwg.mxu0
    %v3348 = vadd.f32 %v2025, %v3330
    %v3349 = vadd.f32 %v2026, %v3335
    %v3350 = vadd.f32 %v2027, %v3340
    %v3351 = vadd.f32 %v2028, %v3345
    %v3352 = vld [vmem:[#allocation5 + $0xa] sm:$0x1]
    %v3353 = vlaneseq
    %v3354 = vshrl.u32 %v3353, 7
    %v3355 = vsub.s32 0, %v3354
    %v3356 = vrot.slane %v3352, %v3355
    %v3357 = vadd.f32 %v3348, %v3356
    %v3358 = vadd.f32 %v3349, %v3356
    %v3359 = vadd.f32 %v3350, %v3356
    %v3360 = vadd.f32 %v3351, %v3356
    %v3361 = vld [vmem:[#allocation5 + $0xb] sm:$0x1]
    %v3362 = vld [vmem:[#allocation5 + $0xc] sm:$0x1]
    %v3363 = vsel %vm52, %v3357, 0.0
    %3364 = vadd.xlane.f32.xlu0 %v3363
    %v3365 = vpop.xlane.xlu0 %3364
    %v3366 = vsel %vm52, %v3358, 0.0
    %3367 = vadd.xlane.f32.xlu0 %v3366
    %v3368 = vpop.xlane.xlu0 %3367
    %v3369 = vsel %vm52, %v3359, 0.0
    %3370 = vadd.xlane.f32.xlu0 %v3369
    %v3371 = vpop.xlane.xlu0 %3370
    %v3372 = vsel %vm52, %v3360, 0.0
    %3373 = vadd.xlane.f32.xlu0 %v3372
    %v3374 = vpop.xlane.xlu0 %3373
    %v3375 = vmul.f32 %v3365, %v65
    %v3376 = vmul.f32 %v3368, %v65
    %v3377 = vmul.f32 %v3371, %v65
    %v3378 = vmul.f32 %v3374, %v65
    %v3379 = vsub.f32 %v3357, %v3375
    %v3380 = vsub.f32 %v3358, %v3376
    %v3381 = vsub.f32 %v3359, %v3377
    %v3382 = vsub.f32 %v3360, %v3378
    %v3383 = vmul.f32 %v3379, %v3379
    %v3384 = vmul.f32 %v3380, %v3380
    %v3385 = vmul.f32 %v3381, %v3381
    %v3386 = vmul.f32 %v3382, %v3382
    %v3387 = vsel %vm52, %v3383, 0.0
    %3388 = vadd.xlane.f32.xlu0 %v3387
    %v3389 = vpop.xlane.xlu0 %3388
    %v3390 = vsel %vm52, %v3384, 0.0
    %3391 = vadd.xlane.f32.xlu0 %v3390
    %v3392 = vpop.xlane.xlu0 %3391
    %v3393 = vsel %vm52, %v3385, 0.0
    %3394 = vadd.xlane.f32.xlu0 %v3393
    %v3395 = vpop.xlane.xlu0 %3394
    %v3396 = vsel %vm52, %v3386, 0.0
    %3397 = vadd.xlane.f32.xlu0 %v3396
    %v3398 = vpop.xlane.xlu0 %3397
    %v3399 = vmul.f32 %v3389, %v65
    %v3400 = vmul.f32 %v3392, %v65
    %v3401 = vmul.f32 %v3395, %v65
    %v3402 = vmul.f32 %v3398, %v65
    %v3403 = vadd.f32 %v3399, 1e-05
    %v3404 = vadd.f32 %v3400, 1e-05
    %v3405 = vadd.f32 %v3401, 1e-05
    %v3406 = vadd.f32 %v3402, 1e-05
    %v3407 = vrsqrt.pop %v3403
    %v3408 = vrsqrt.pop %v3404
    %v3409 = vrsqrt.pop %v3405
    %v3410 = vrsqrt.pop %v3406
    %v3411 = vmul.f32 %v3379, %v3407
    %v3412 = vmul.f32 %v3380, %v3408
    %v3413 = vmul.f32 %v3381, %v3409
    %v3414 = vmul.f32 %v3382, %v3410
    %v3415 = vlaneseq
    %v3416 = vshrl.u32 %v3415, 7
    %v3417 = vsub.s32 0, %v3416
    %v3418 = vrot.slane %v3361, %v3417
    %v3419 = vmul.f32 %v3411, %v3418
    %v3420 = vmul.f32 %v3412, %v3418
    %v3421 = vmul.f32 %v3413, %v3418
    %v3422 = vmul.f32 %v3414, %v3418
    %v3423 = vlaneseq
    %v3424 = vshrl.u32 %v3423, 7
    %v3425 = vsub.s32 0, %v3424
    %v3426 = vrot.slane %v3362, %v3425
    %v3427 = vadd.f32 %v3419, %v3426
    %v3428 = vadd.f32 %v3420, %v3426
    %v3429 = vadd.f32 %v3421, %v3426
    %v3430 = vadd.f32 %v3422, %v3426
    %v3431 = vld [vmem:[%s2] sm:$0xff]
    %v3432 = vld [vmem:[%s2 + $0x28] sm:$0xff]
    %v3433 = vld [vmem:[%s2 + $0x50] sm:$0xff]
    %v3434 = vld [vmem:[%s2 + $0x78] sm:$0xff]
    %v3435 = vld [vmem:[#allocation5 + $0xd] sm:$0x1]
    %v3436 = vlaneseq
    %v3437 = vshrl.u32 %v3436, 7
    %v3438 = vsub.s32 0, %v3437
    %v3439 = vrot.slane %v3435, %v3438
    %v3441 = vsel %vm52, %v3427, 0
    %v3444 = vsel %vm52, %v3428, 0
    %v3447 = vsel %vm52, %v3429, 0
    %v3450 = vsel %vm52, %v3430, 0
    %3452 = vmatprep.subr.mxu0 0.0
    %3453 = vmatpush1.msra.mxu0 %v3431
    %3454 = vmatprep.subr.mxu0 0.0
    %3455 = vmatpush1.msra.mxu0 %v3432
    %3456 = vmatprep.subr.mxu0 0.0
    %3457 = vmatpush1.msra.mxu0 %v3433
    %3458 = vmatprep.subr.mxu0 0.0
    %3459 = vmatpush1.msra.mxu0 %v3434
    %3460 = vmatprep.subr.mxu0 0.0
    %3461 = vmatpush1.msra.mxu0 0.0
    %3462 = vmatprep.subr.mxu0 0.0
    %3463 = vmatpush1.msra.mxu0 0.0
    %3464 = vmatprep.subr.mxu0 0.0
    %3465 = vmatpush1.msra.mxu0 0.0
    %3466 = vmatprep.subr.mxu0 0.0
    %3467 = vmatpush1.msra.mxu0 0.0
    %3468 = vmatprep.subr.mxu0 0.0
    %3469 = vmatpush1.msra.mxu0 0.0
    %3470 = vmatprep.subr.mxu0 0.0
    %3471 = vmatpush1.msra.mxu0 0.0
    %3472 = vmatprep.subr.mxu0 0.0
    %3473 = vmatpush1.msra.mxu0 0.0
    %3474 = vmatprep.subr.mxu0 0.0
    %3475 = vmatpush1.msra.mxu0 0.0
    %3476 = vmatprep.subr.mxu0 0.0
    %3477 = vmatpush1.msra.mxu0 0.0
    %3478 = vmatprep.subr.mxu0 0.0
    %3479 = vmatpush1.msra.mxu0 0.0
    %3480 = vmatprep.subr.mxu0 0.0
    %3481 = vmatpush1.msra.mxu0 0.0
    %3482 = vmatprep.subr.mxu0 0.0
    %3483 = vmatpush1.msra.mxu0 0.0
    %3484 = vmatprep.subr.mxu0 0.0
    %3485 = vmatpush1.msra.mxu0 0.0
    %3486 = vmatprep.subr.mxu0 0.0
    %3487 = vmatpush1.msra.mxu0 0.0
    %3488 = vmatprep.subr.mxu0 0.0
    %3489 = vmatpush1.msra.mxu0 0.0
    %3490 = vmatprep.subr.mxu0 0.0
    %3491 = vmatpush1.msra.mxu0 0.0
    %3492 = vmatprep.subr.mxu0 0.0
    %3493 = vmatpush1.msra.mxu0 0.0
    %3494 = vmatprep.subr.mxu0 0.0
    %3495 = vmatpush1.msra.mxu0 0.0
    %3496 = vmatprep.subr.mxu0 0.0
    %3497 = vmatpush1.msra.mxu0 0.0
    %3498 = vmatprep.subr.mxu0 0.0
    %3499 = vmatpush1.msra.mxu0 0.0
    %3500 = vmatprep.subr.mxu0 0.0
    %3501 = vmatpush1.msra.mxu0 0.0
    %3502 = vmatprep.subr.mxu0 0.0
    %3503 = vmatpush1.msra.mxu0 0.0
    %3504 = vmatprep.subr.mxu0 0.0
    %3505 = vmatpush1.msra.mxu0 0.0
    %3506 = vmatprep.subr.mxu0 0.0
    %3507 = vmatpush1.msra.mxu0 0.0
    %3508 = vmatprep.subr.mxu0 0.0
    %3509 = vmatpush1.msra.mxu0 0.0
    %3510 = vmatprep.subr.mxu0 0.0
    %3511 = vmatpush1.msra.mxu0 0.0
    %3512 = vmatprep.subr.mxu0 0.0
    %3513 = vmatpush1.msra.mxu0 0.0
    %3514 = vmatprep.subr.mxu0 0.0
    %3515 = vmatpush1.msra.mxu0 0.0
    %3516 = vmatprep.mubr.f32.mxu0 0.0
    %3517 = vmatmul.mubr.f32.gmra.mrb[0].mxu0 %v3441
    %v3518 = vpop.f32.mrb[0].mxu0
    %v3519 = vadd.f32 %v3439, %v3518
    %v3520 = vpop.f32.mrb[0].mxu0
    %3521 = vmatprep.mubr.f32.mxu0 0.0
    %3522 = vmatmul.mubr.f32.gmra.mrb[0].mxu0 %v3444
    %v3523 = vpop.f32.mrb[0].mxu0
    %v3524 = vadd.f32 %v3439, %v3523
    %v3525 = vpop.f32.mrb[0].mxu0
    %3526 = vmatprep.mubr.f32.mxu0 0.0
    %3527 = vmatmul.mubr.f32.gmra.mrb[0].mxu0 %v3447
    %v3528 = vpop.f32.mrb[0].mxu0
    %v3529 = vadd.f32 %v3439, %v3528
    %v3530 = vpop.f32.mrb[0].mxu0
    %3531 = vmatprep.mubr.f32.mxu0 0.0
    %3532 = vmatmul.mubr.f32.gmra.mrb[0].mxu0 %v3450
    %v3533 = vpop.f32.mrb[0].mxu0
    %v3534 = vadd.f32 %v3439, %v3533
    %v3535 = vpop.f32.mrb[0].mxu0
    %3536 = vdwg.mxu0
    %v3537 = vsub.f32 0.0, %v3519
    %v3538 = vsub.f32 0.0, %v3524
    %v3539 = vsub.f32 0.0, %v3529
    %v3540 = vsub.f32 0.0, %v3534
    %v3541 = vmul.f32 %v3537, 1.442695
    %v3542 = vpow.pop %v3541
    %v3543 = vmul.f32 %v3538, 1.442695
    %v3544 = vpow.pop %v3543
    %v3545 = vmul.f32 %v3539, 1.442695
    %v3546 = vpow.pop %v3545
    %v3547 = vmul.f32 %v3540, 1.442695
    %v3548 = vpow.pop %v3547
    %v3549 = vadd.f32 %v3542, 1.0
    %v3550 = vadd.f32 %v3544, 1.0
    %v3551 = vadd.f32 %v3546, 1.0
    %v3552 = vadd.f32 %v3548, 1.0
    %v3553 = vrcp.pop %v3549
    %v3554 = vmul.f32 1.0, %v3553
    %v3555 = vrcp.pop %v3550
    %v3556 = vmul.f32 1.0, %v3555
    %v3557 = vrcp.pop %v3551
    %v3558 = vmul.f32 1.0, %v3557
    %v3559 = vrcp.pop %v3552
    %v3560 = vmul.f32 1.0, %v3559
    %v3561 = vmul.f32 %v3519, %v3554
    %v3562 = vmul.f32 %v3524, %v3556
    %v3563 = vmul.f32 %v3529, %v3558
    %v3564 = vmul.f32 %v3534, %v3560
    %v3565 = vld [vmem:[%s3] sm:$0xff]
    %v3566 = vld [vmem:[%s3 + $0x8] sm:$0xff]
    %v3567 = vld [vmem:[%s3 + $0x10] sm:$0xff]
    %v3568 = vld [vmem:[%s3 + $0x18] sm:$0xff]
    %v3569 = vld [vmem:[%s3 + $0x20] sm:$0xff]
    %v3570 = vld [vmem:[%s3 + $0x28] sm:$0xff]
    %v3571 = vld [vmem:[%s3 + $0x30] sm:$0xff]
    %v3572 = vld [vmem:[%s3 + $0x38] sm:$0xff]
    %v3573 = vld [vmem:[%s3 + $0x40] sm:$0xff]
    %v3574 = vld [vmem:[%s3 + $0x48] sm:$0xff]
    %v3575 = vld [vmem:[%s3 + $0x50] sm:$0xff]
    %v3576 = vld [vmem:[%s3 + $0x58] sm:$0xff]
    %v3577 = vld [vmem:[%s3 + $0x60] sm:$0xff]
    %v3578 = vld [vmem:[%s3 + $0x68] sm:$0xff]
    %v3579 = vld [vmem:[%s3 + $0x70] sm:$0xff]
    %v3580 = vld [vmem:[%s3 + $0x78] sm:$0xff]
    %3581 = vmatprep.subr.mxu0 0.0
    %3582 = vmatpush1.msra.mxu0 %v3565
    %3583 = vmatprep.subr.mxu0 0.0
    %3584 = vmatpush1.msra.mxu0 %v3566
    %3585 = vmatprep.subr.mxu0 0.0
    %3586 = vmatpush1.msra.mxu0 %v3567
    %3587 = vmatprep.subr.mxu0 0.0
    %3588 = vmatpush1.msra.mxu0 %v3568
    %3589 = vmatprep.subr.mxu0 0.0
    %3590 = vmatpush1.msra.mxu0 %v3569
    %3591 = vmatprep.subr.mxu0 0.0
    %3592 = vmatpush1.msra.mxu0 %v3570
    %3593 = vmatprep.subr.mxu0 0.0
    %3594 = vmatpush1.msra.mxu0 %v3571
    %3595 = vmatprep.subr.mxu0 0.0
    %3596 = vmatpush1.msra.mxu0 %v3572
    %3597 = vmatprep.subr.mxu0 0.0
    %3598 = vmatpush1.msra.mxu0 %v3573
    %3599 = vmatprep.subr.mxu0 0.0
    %3600 = vmatpush1.msra.mxu0 %v3574
    %3601 = vmatprep.subr.mxu0 0.0
    %3602 = vmatpush1.msra.mxu0 %v3575
    %3603 = vmatprep.subr.mxu0 0.0
    %3604 = vmatpush1.msra.mxu0 %v3576
    %3605 = vmatprep.subr.mxu0 0.0
    %3606 = vmatpush1.msra.mxu0 %v3577
    %3607 = vmatprep.subr.mxu0 0.0
    %3608 = vmatpush1.msra.mxu0 %v3578
    %3609 = vmatprep.subr.mxu0 0.0
    %3610 = vmatpush1.msra.mxu0 %v3579
    %3611 = vmatprep.subr.mxu0 0.0
    %3612 = vmatpush1.msra.mxu0 %v3580
    %3613 = vmatprep.subr.mxu0 0.0
    %3614 = vmatpush1.msra.mxu0 0.0
    %3615 = vmatprep.subr.mxu0 0.0
    %3616 = vmatpush1.msra.mxu0 0.0
    %3617 = vmatprep.subr.mxu0 0.0
    %3618 = vmatpush1.msra.mxu0 0.0
    %3619 = vmatprep.subr.mxu0 0.0
    %3620 = vmatpush1.msra.mxu0 0.0
    %3621 = vmatprep.subr.mxu0 0.0
    %3622 = vmatpush1.msra.mxu0 0.0
    %3623 = vmatprep.subr.mxu0 0.0
    %3624 = vmatpush1.msra.mxu0 0.0
    %3625 = vmatprep.subr.mxu0 0.0
    %3626 = vmatpush1.msra.mxu0 0.0
    %3627 = vmatprep.subr.mxu0 0.0
    %3628 = vmatpush1.msra.mxu0 0.0
    %3629 = vmatprep.subr.mxu0 0.0
    %3630 = vmatpush1.msra.mxu0 0.0
    %3631 = vmatprep.subr.mxu0 0.0
    %3632 = vmatpush1.msra.mxu0 0.0
    %3633 = vmatprep.subr.mxu0 0.0
    %3634 = vmatpush1.msra.mxu0 0.0
    %3635 = vmatprep.subr.mxu0 0.0
    %3636 = vmatpush1.msra.mxu0 0.0
    %3637 = vmatprep.subr.mxu0 0.0
    %3638 = vmatpush1.msra.mxu0 0.0
    %3639 = vmatprep.subr.mxu0 0.0
    %3640 = vmatpush1.msra.mxu0 0.0
    %3641 = vmatprep.subr.mxu0 0.0
    %3642 = vmatpush1.msra.mxu0 0.0
    %3643 = vmatprep.subr.mxu0 0.0
    %3644 = vmatpush1.msra.mxu0 0.0
    %3645 = vmatprep.mubr.f32.mxu0 0.0
    %3646 = vmatmul.mubr.f32.gmra.mrb[0].mxu0 %v3561
    %v3647 = vpop.f32.mrb[0].mxu0
    %v3648 = vadd.f32 0.0, %v3647
    %v3649 = vpop.f32.mrb[0].mxu0
    %3650 = vmatprep.mubr.f32.mxu0 0.0
    %3651 = vmatmul.mubr.f32.gmra.mrb[0].mxu0 %v3562
    %v3652 = vpop.f32.mrb[0].mxu0
    %v3653 = vadd.f32 0.0, %v3652
    %v3654 = vpop.f32.mrb[0].mxu0
    %3655 = vmatprep.mubr.f32.mxu0 0.0
    %3656 = vmatmul.mubr.f32.gmra.mrb[0].mxu0 %v3563
    %v3657 = vpop.f32.mrb[0].mxu0
    %v3658 = vadd.f32 0.0, %v3657
    %v3659 = vpop.f32.mrb[0].mxu0
    %3660 = vmatprep.mubr.f32.mxu0 0.0
    %3661 = vmatmul.mubr.f32.gmra.mrb[0].mxu0 %v3564
    %v3662 = vpop.f32.mrb[0].mxu0
    %v3663 = vadd.f32 0.0, %v3662
    %v3664 = vpop.f32.mrb[0].mxu0
    %3665 = vdwg.mxu0
    %v3666 = vadd.f32 %v3357, %v3648
    %v3667 = vadd.f32 %v3358, %v3653
    %v3668 = vadd.f32 %v3359, %v3658
    %v3669 = vadd.f32 %v3360, %v3663
    %v3670 = vld [vmem:[#allocation5 + $0xe] sm:$0x1]
    %v3671 = vlaneseq
    %v3672 = vshrl.u32 %v3671, 7
    %v3673 = vsub.s32 0, %v3672
    %v3674 = vrot.slane %v3670, %v3673
    %v3675 = vadd.f32 %v3666, %v3674
    %v3676 = vadd.f32 %v3667, %v3674
    %v3677 = vadd.f32 %v3668, %v3674
    %v3678 = vadd.f32 %v3669, %v3674
    %3679 = vst.msk [vmem:[#allocation7] sm:$0xff] %vm52, %v3675
    %3680 = vst.msk [vmem:[#allocation7 + $0x8] sm:$0xff] %vm52, %v3676
    %3681 = vst.msk [vmem:[#allocation7 + $0x10] sm:$0xff] %vm52, %v3677
    %3682 = vst.msk [vmem:[#allocation7 + $0x18] sm:$0xff] %vm52, %v3678
    // Predicated region
    $region26: #{tpu_custom_call.1} parent=1 // pred_check
      _
    $region27: #{tpu_custom_call.1} parent=1 // pred_check_branch
      %3684 = sbr.rel (0) target = $region29
    $region28: #{tpu_custom_call.1} parent=1 // pred_region
      %s3686 = ssub.s32 512, 512
      %3687 = vsyncadd [#allocation4], %s3686
      %s3688 = sshll.u32 [#allocation7], 4
      %s3689 = int_to_ptr.vmem [resolvable:$true] %s3688
      %3694 = dma.vmem_to_hbm [thread:$0]  %s3689, 512, %s4, [#allocation4], 128, 128, 8
    $region29: #{tpu_custom_call.1} parent=1 // pred_fallthru
      _
    // Predicated region
    $region30: #{tpu_custom_call.1} parent=1 // pred_check
      _
    $region31: #{tpu_custom_call.1} parent=1 // pred_check_branch
      %3696 = sbr.rel (0) target = $region33
    $region32: #{tpu_custom_call.1} parent=1 // pred_region
      %3697 = dma.done [#allocation4], 512
    $region33: #{tpu_custom_call.1} parent=1 // pred_fallthru
      _
    %3698 = vsyncpa [#allocation3], 1
    %3699 = vsyncpa [#allocation6], 1
    %3700 = vsyncpa [#allocation4], 1

</llo_original>
